<compile_context>
chip_gen: v5e
topology: v5e:2x2
jax: 0.10.0
libtpu: 0.0.40
codegen_flags: <defaults>
</compile_context>

<pallas_src>
import functools

import jax
import jax.numpy as jnp
from jax.experimental import pallas as pl
from jax.experimental.pallas import tpu as pltpu


# ----------------------------- fused Pallas kernel ---------------------------

def fused_convnext_kernel(x0_ref, mask_ref, wdw_ref, bdw_ref, gam_ref, bet_ref,
                          w1_ref, b1_ref, w2_ref, b2_ref, cond_ref,
                          out_ref, *, img_w):
    """One ConvNext block per inner grid step; out_ref is the VMEM carry.

    Working layout (per sample): rows = C (sublanes), cols = H*W (lanes).
      x0_ref   : (1, C, HW)    initial activation (NCHW flattened, no transpose)
      mask_ref : (49, 1, HW)   zero-padding validity per 7x7 tap (resident)
      wdw_ref  : (1, C, 49)    depthwise per-channel tap weights
      bdw/gam/bet/cond/b1/b2   per-channel columns, broadcast over lanes
      w1_ref   : (1, 2C, C)    1x1 expand  (shared across batch)
      w2_ref   : (1, C, 2C)    1x1 project (shared across batch)
      out_ref  : (1, C, HW)    output block == resident activation carry
    """
    n = pl.program_id(1)
    c_dim, hw = out_ref.shape[1], out_ref.shape[2]

    @pl.when(n == 0)
    def _():
        out_ref[0] = x0_ref[0]                       # restart carry per sample

    # conditioning added in-kernel (zero column for the final out_noise block)
    x_in = out_ref[0] + cond_ref[0, 0]               # (C, HW) + (C, 1)

    # ---- depthwise 7x7, padding=3: lane rolls (XLU) + per-tap validity mask
    w_taps = wdw_ref[0]                              # (C, 49)
    acc = x_in * w_taps[:, 24:25]                    # center tap: no roll, no mask
    for dy in range(7):
        for dx in range(7):
            k = dy * 7 + dx
            if k == 24:
                continue
            off = (dy - 3) * img_w + (dx - 3)
            shifted = pltpu.roll(x_in, (-off) % hw, axis=1)
            acc = acc + (shifted * mask_ref[k]) * w_taps[:, k:k + 1]
    acc = acc + bdw_ref[0]

    # ---- GroupNorm(1, C): per-sample stats, lane-reduce first then sublanes
    inv_n = 1.0 / float(c_dim * hw)
    row = jnp.sum(acc, axis=1, keepdims=True)                  # (C, 1)
    row2 = jnp.sum(acc * acc, axis=1, keepdims=True)           # (C, 1)
    mean = jnp.sum(row, axis=0, keepdims=True) * inv_n         # (1, 1)
    var = jnp.sum(row2, axis=0, keepdims=True) * inv_n - mean * mean
    h = (acc - mean) * jax.lax.rsqrt(var + 1e-5)
    h = h * gam_ref[0] + bet_ref[0]

    # ---- 1x1 expand -> GELU -> 1x1 project (MXU, weights shared over batch)
    h2 = jnp.dot(w1_ref[0], h, preferred_element_type=jnp.float32) + b1_ref[0]
    h2 = jax.nn.gelu(h2, approximate=True)
    h3 = jnp.dot(w2_ref[0], h2, preferred_element_type=jnp.float32) + b2_ref[0]

    out_ref[0] = h3 + x_in                           # residual (carries cond)


def fused_convnext_stack(x3, cond, packed, *, img_w):
    """Runs all (num_blocks + 1) ConvNext blocks in one pallas_call."""
    B, C, hw = x3.shape
    nt = packed["wdw"].shape[0]
    C2 = packed["w1"].shape[1]

    flops = B * nt * (3 * 49 * C * hw          # depthwise taps (+mask mul)
                      + 2 * 2 * C2 * C * hw    # two 1x1 matmuls
                      + 16 * C * hw)           # norm + elementwise epilogue
    bytes_accessed = 4 * (2 * x3.size + cond.size + packed["mask"].size
                          + B * (packed["wdw"].size + packed["w1"].size
                                 + packed["w2"].size + packed["b1"].size
                                 + packed["b2"].size + packed["b_dw"].size
                                 + packed["gamma"].size + packed["beta"].size))

    per_block = lambda shape: pl.BlockSpec((1,) + shape,
                                           lambda b, n: (n,) + (0,) * len(shape))

    return pl.pallas_call(
        functools.partial(fused_convnext_kernel, img_w=img_w),
        out_shape=jax.ShapeDtypeStruct((B, C, hw), jnp.float32),
        grid=(B, nt),
        in_specs=[
            pl.BlockSpec((1, C, hw), lambda b, n: (b, 0, 0)),      # x0 (per sample)
            pl.BlockSpec((49, 1, hw), lambda b, n: (0, 0, 0)),     # pad mask (resident)
            per_block((C, 49)),                                    # depthwise weights
            per_block((C, 1)),                                     # depthwise bias
            per_block((C, 1)),                                     # gamma
            per_block((C, 1)),                                     # beta
            per_block((C2, C)),                                    # 1x1 expand
            per_block((C2, 1)),                                    # expand bias
            per_block((C, C2)),                                    # 1x1 project
            per_block((C, 1)),                                     # project bias
            pl.BlockSpec((1, 1, C, 1), lambda b, n: (n, b, 0, 0)), # conditioning col
        ],
        out_specs=pl.BlockSpec((1, C, hw), lambda b, n: (b, 0, 0)),
        compiler_params=pltpu.CompilerParams(
            dimension_semantics=("parallel", "arbitrary"),  # batch || , blocks seq
            vmem_limit_bytes=32 * 1024 * 1024),
        cost_estimate=pl.CostEstimate(
            flops=int(flops),
            transcendentals=int(B * nt * (C2 * hw + 1)),
            bytes_accessed=int(bytes_accessed)),
    )(x3, packed["mask"], packed["wdw"], packed["b_dw"], packed["gamma"],
      packed["beta"], packed["w1"], packed["b1"], packed["w2"], packed["b2"],
      cond)


# ----------------------------- glue (plain JAX) ------------------------------

def positional_encoding(t, dim):
    """Sinusoidal positional encoding of the (long) timestep -> (B, dim)."""
    tf = t.astype(jnp.float32)[:, None]
    half = dim // 2
    freqs = jnp.exp(-jnp.log(10000.0) *
                    jnp.arange(half, dtype=jnp.float32) / half)
    args = tf * freqs[None, :]
    return jnp.concatenate([jnp.sin(args), jnp.cos(args)], axis=-1)


# --------------------------- parameter construction --------------------------

def dense(k, fan_in, shape):
    return jax.random.normal(k, shape, jnp.float32) / jnp.sqrt(jnp.float32(fan_in))


def convnext_params(k, C):
    ks = jax.random.split(k, 8)
    return dict(
        w_dw=dense(ks[0], 49.0, (7, 7, C)),
        b_dw=0.1 * jax.random.normal(ks[1], (C,), jnp.float32),
        gamma=1.0 + 0.1 * jax.random.normal(ks[2], (C,), jnp.float32),
        beta=0.1 * jax.random.normal(ks[3], (C,), jnp.float32),
        w_pw1=dense(ks[4], C, (C, 2 * C)),
        b_pw1=0.1 * jax.random.normal(ks[5], (2 * C,), jnp.float32),
        w_pw2=dense(ks[6], 2 * C, (2 * C, C)),
        b_pw2=0.1 * jax.random.normal(ks[7], (C,), jnp.float32),
    )


def init_params(key, in_dim, t_dim, c_dim, num_classes, num_blocks):
    keys = jax.random.split(key, 2 + num_blocks)
    params = dict(
        # nn.Linear(num_classes, c_dim, bias=False): weight (c_dim, num_classes)
        w_c=dense(keys[0], num_classes, (c_dim, num_classes)),
        out_noise=convnext_params(keys[1], in_dim),
        unet_blocks=[],
    )
    for i in range(num_blocks):
        kb = jax.random.split(keys[2 + i], 3)
        params["unet_blocks"].append(dict(
            w_t=dense(kb[0], t_dim, (t_dim, in_dim)),
            w_cc=dense(kb[1], c_dim, (c_dim, in_dim)),
            block=convnext_params(kb[2], in_dim),
        ))
    return params


def pack_params(params, *, H, W):
    """One-time, batch-independent weight layout transform for the fused kernel."""
    blocks = [b["block"] for b in params["unet_blocks"]] + [params["out_noise"]]
    nt = len(blocks)
    C = blocks[0]["w_dw"].shape[-1]
    hw = H * W

    # depthwise tap weights: (NT, C, 49), tap index k = dy*7 + dx on the lane axis
    wdw = jnp.stack([b["w_dw"] for b in blocks]).reshape(nt, 49, C)
    wdw = jnp.transpose(wdw, (0, 2, 1))

    def col(name):  # (NT, D) -> (NT, D, 1) per-channel columns
        return jnp.stack([b[name] for b in blocks])[..., None]

    # 1x1 conv weights, transposed for (out, in) @ (in, HW); shared across batch
    w1 = jnp.stack([b["w_pw1"].T for b in blocks])            # (NT, 2C, C)
    w2 = jnp.stack([b["w_pw2"].T for b in blocks])            # (NT, C, 2C)

    # validity of each 7x7 tap under zero padding=3 (static; shared by all blocks)
    y = jnp.arange(H)[:, None]
    x = jnp.arange(W)[None, :]
    taps = []
    for dy in range(7):
        for dx in range(7):
            oy, ox = dy - 3, dx - 3
            taps.append(((y + oy >= 0) & (y + oy < H) &
                         (x + ox >= 0) & (x + ox < W)).reshape(hw))
    valid = jnp.stack(taps).astype(jnp.float32)[:, None, :]   # (49, 1, HW)

    return dict(
        w_c=params["w_c"],
        w_t=jnp.stack([b["w_t"] for b in params["unet_blocks"]]),    # (NB, t_dim, C)
        w_cc=jnp.stack([b["w_cc"] for b in params["unet_blocks"]]),  # (NB, c_dim, C)
        mask=valid, wdw=wdw,
        b_dw=col("b_dw"), gamma=col("gamma"), beta=col("beta"),
        w1=w1, b1=col("b_pw1"), w2=w2, b2=col("b_pw2"),
    )


# ---------------------------------- forward ----------------------------------

def diff_model_forward(packed, x_t, t, c, null_cls, *, t_dim):
    """Mirrors DiffModel.forward(x_t, t, c, null_cls); x_t is NCHW float32."""
    B, C, H, W = x_t.shape

    t_emb = positional_encoding(t.astype(jnp.int32), t_dim)           # (B, t_dim)
    # class embedding = row gather from the Linear weight + null-class masking
    mask = (null_cls != 1).astype(jnp.float32)[:, None]
    c_emb = jnp.take(packed["w_c"], c, axis=1).T * mask               # (B, c_dim)

    # per-block conditioning (tiny matmuls; zero column for the out_noise block)
    cond = (jnp.einsum("bt,ntc->nbc", t_emb, packed["w_t"]) +
            jnp.einsum("bd,ndc->nbc", c_emb, packed["w_cc"]))         # (NB, B, C)
    cond = jnp.concatenate(
        [cond, jnp.zeros((1, B, C), jnp.float32)], axis=0)            # (NT, B, C)
    cond = cond[..., None]                                            # (NT, B, C, 1)

    x3 = x_t.reshape(B, C, H * W)                 # NCHW -> (B, C, H*W), no transpose
    y3 = fused_convnext_stack(x3, cond, packed, img_w=W)
    return y3.reshape(B, C, H, W)


# ------------------------ pure-JAX reference (checking) ----------------------

def convnext_ref(x, p):
    B, C, H, W = x.shape
    xpad = jnp.pad(x, ((0, 0), (0, 0), (3, 3), (3, 3)))
    acc = jnp.zeros_like(x)
    for dy in range(7):
        for dx in range(7):
            acc = acc + (xpad[:, :, dy:dy + H, dx:dx + W] *
                         p["w_dw"][dy, dx][None, :, None, None])
    acc = acc + p["b_dw"][None, :, None, None]
    mean = jnp.mean(acc, axis=(1, 2, 3), keepdims=True)
    var = jnp.mean(jnp.square(acc - mean), axis=(1, 2, 3), keepdims=True)
    h = (acc - mean) * jax.lax.rsqrt(var + 1e-5)
    h = h * p["gamma"][None, :, None, None] + p["beta"][None, :, None, None]
    h2 = jnp.einsum("bchw,cj->bjhw", h, p["w_pw1"]) + p["b_pw1"][None, :, None, None]
    h2 = jax.nn.gelu(h2, approximate=True)
    h3 = jnp.einsum("bjhw,jc->bchw", h2, p["w_pw2"]) + p["b_pw2"][None, :, None, None]
    return h3 + x


def diff_model_forward_ref(params, x_t, t, c, null_cls, *, t_dim):
    t_emb = positional_encoding(t.astype(jnp.int32), t_dim)
    mask = (null_cls != 1).astype(jnp.float32)[:, None]
    c_emb = jnp.take(params["w_c"], c, axis=1).T * mask
    x = x_t
    for blk in params["unet_blocks"]:
        cond = t_emb @ blk["w_t"] + c_emb @ blk["w_cc"]
        x = convnext_ref(x + cond[:, :, None, None], blk["block"])
    return convnext_ref(x, params["out_noise"])


# ------------------------------------ main -----------------------------------

if __name__ == "__main__":
    jax.config.update("jax_default_matmul_precision", "highest")

    B, in_dim, Hs, Ws = 2, 4, 16, 16
    t_dim, c_dim = 32, 32
    num_blocks, num_classes = 2, 10

    key = jax.random.PRNGKey(0)
    kp, kx = jax.random.split(key)
    params = init_params(kp, in_dim, t_dim, c_dim, num_classes, num_blocks)
    packed = pack_params(params, H=Hs, W=Ws)

    x_t = jax.random.normal(kx, (B, in_dim, Hs, Ws), jnp.float32)
    t = jnp.array([5, 42], jnp.int32)
    c = jnp.array([3, 7], jnp.int32)
    null_cls = jnp.array([0, 1], jnp.int32)   # sample 1's class embedding zeroed

    fwd = jax.jit(functools.partial(diff_model_forward, t_dim=t_dim))
    out = jax.block_until_ready(fwd(packed, x_t, t, c, null_cls))
    assert out.shape == x_t.shape and out.dtype == jnp.float32

    ref = jax.jit(functools.partial(diff_model_forward_ref, t_dim=t_dim))(
        params, x_t, t, c, null_cls)
    ref = jax.block_until_ready(ref)
    max_err = float(jnp.max(jnp.abs(out - ref)))
    assert jnp.allclose(out, ref, rtol=1e-2, atol=1e-2), f"max abs err {max_err}"

    print("KERNEL_OK")
</pallas_src>

<mosaic_0001>
module attributes {stable_mosaic.version = 11 : i64} {
  func.func @fused_convnext_kernel(%arg0: i32, %arg1: i32, %arg2: memref<1x4x256xf32, #tpu.memory_space<vmem>>, %arg3: memref<49x1x256xf32, #tpu.memory_space<vmem>>, %arg4: memref<1x4x49xf32, #tpu.memory_space<vmem>>, %arg5: memref<1x4x1xf32, #tpu.memory_space<vmem>>, %arg6: memref<1x4x1xf32, #tpu.memory_space<vmem>>, %arg7: memref<1x4x1xf32, #tpu.memory_space<vmem>>, %arg8: memref<1x8x4xf32, #tpu.memory_space<vmem>>, %arg9: memref<1x8x1xf32, #tpu.memory_space<vmem>>, %arg10: memref<1x4x8xf32, #tpu.memory_space<vmem>>, %arg11: memref<1x4x1xf32, #tpu.memory_space<vmem>>, %arg12: memref<1x1x4x1xf32, #tpu.memory_space<vmem>>, %arg13: memref<1x4x256xf32, #tpu.memory_space<vmem>>) attributes {dimension_semantics = [#tpu.dimension_semantics<parallel>, #tpu.dimension_semantics<arbitrary>], iteration_bounds = array<i64: 2, 3>, scalar_prefetch = 0 : i64, scratch_operands = 0 : i64, tpu.core_type = #tpu.core_type<tc>, window_params = [{transform_indices = @transform_0, window_bounds = array<i64: 1, 4, 256>}, {pipeline_mode = #tpu.pipeline_mode<synchronous>, transform_indices = @transform_1, window_bounds = array<i64: 49, 1, 256>}, {transform_indices = @transform_2, window_bounds = array<i64: 1, 4, 49>}, {transform_indices = @transform_3, window_bounds = array<i64: 1, 4, 1>}, {transform_indices = @transform_4, window_bounds = array<i64: 1, 4, 1>}, {transform_indices = @transform_5, window_bounds = array<i64: 1, 4, 1>}, {transform_indices = @transform_6, window_bounds = array<i64: 1, 8, 4>}, {transform_indices = @transform_7, window_bounds = array<i64: 1, 8, 1>}, {transform_indices = @transform_8, window_bounds = array<i64: 1, 4, 8>}, {transform_indices = @transform_9, window_bounds = array<i64: 1, 4, 1>}, {transform_indices = @transform_10, window_bounds = array<i64: 1, 1, 4, 1>}, {transform_indices = @transform_11, window_bounds = array<i64: 1, 4, 256>}]} {
    %c0_i32 = arith.constant 0 : i32
    %0 = arith.cmpi eq, %arg1, %c0_i32 : i32
    %1 = arith.extui %0 : i1 to i32
    %c0_i32_0 = arith.constant 0 : i32
    %2 = arith.cmpi ne, %1, %c0_i32_0 : i32
    scf.if %2 {
      %c0_143 = arith.constant 0 : index
      %c0_144 = arith.constant 0 : index
      %c0_145 = arith.constant 0 : index
      %511 = vector.load %arg2[%c0_143, %c0_144, %c0_145] : memref<1x4x256xf32, #tpu.memory_space<vmem>>, vector<1x4x256xf32>
      %512 = vector.shape_cast %511 : vector<1x4x256xf32> to vector<4x256xf32>
      %c0_146 = arith.constant 0 : index
      %c0_147 = arith.constant 0 : index
      %c0_148 = arith.constant 0 : index
      %513 = vector.load %arg13[%c0_146, %c0_147, %c0_148] : memref<1x4x256xf32, #tpu.memory_space<vmem>>, vector<1x4x256xf32>
      %514 = vector.shape_cast %513 : vector<1x4x256xf32> to vector<4x256xf32>
      %515 = vector.shape_cast %512 : vector<4x256xf32> to vector<1x4x256xf32>
      tpu.vector_store %arg13[%c0_146, %c0_147, %c0_148], %515 {strides = array<i32>} : memref<1x4x256xf32, #tpu.memory_space<vmem>>, vector<1x4x256xf32>,
    } else {
    }
    %c0 = arith.constant 0 : index
    %c0_1 = arith.constant 0 : index
    %c0_2 = arith.constant 0 : index
    %3 = vector.load %arg13[%c0, %c0_1, %c0_2] : memref<1x4x256xf32, #tpu.memory_space<vmem>>, vector<1x4x256xf32>
    %4 = vector.shape_cast %3 : vector<1x4x256xf32> to vector<4x256xf32>
    %c0_3 = arith.constant 0 : index
    %c0_4 = arith.constant 0 : index
    %c0_5 = arith.constant 0 : index
    %c0_6 = arith.constant 0 : index
    %5 = vector.load %arg12[%c0_3, %c0_4, %c0_5, %c0_6] : memref<1x1x4x1xf32, #tpu.memory_space<vmem>>, vector<1x1x4x1xf32>
    %6 = vector.shape_cast %5 : vector<1x1x4x1xf32> to vector<4x1xf32>
    %7 = vector.broadcast %6 : vector<4x1xf32> to vector<4x256xf32>
    %8 = arith.addf %4, %7 : vector<4x256xf32>
    %c0_7 = arith.constant 0 : index
    %c0_8 = arith.constant 0 : index
    %c0_9 = arith.constant 0 : index
    %9 = vector.load %arg4[%c0_7, %c0_8, %c0_9] : memref<1x4x49xf32, #tpu.memory_space<vmem>>, vector<1x4x49xf32>
    %10 = vector.shape_cast %9 : vector<1x4x49xf32> to vector<4x49xf32>
    %11 = vector.extract_strided_slice %10 {offsets = [0, 24], sizes = [4, 1], strides = [1, 1]} : vector<4x49xf32> to vector<4x1xf32>
    %12 = vector.broadcast %11 : vector<4x1xf32> to vector<4x256xf32>
    %13 = arith.mulf %8, %12 : vector<4x256xf32>
    %c51_i32 = arith.constant 51 : i32
    %14 = tpu.dynamic_rotate %8 by %c51_i32 dim 1 : vector<4x256xf32>, i32 -> vector<4x256xf32>
    %c0_10 = arith.constant 0 : index
    %c0_11 = arith.constant 0 : index
    %c0_12 = arith.constant 0 : index
    %15 = vector.load %arg3[%c0_10, %c0_11, %c0_12] : memref<49x1x256xf32, #tpu.memory_space<vmem>>, vector<1x1x256xf32>
    %16 = vector.shape_cast %15 : vector<1x1x256xf32> to vector<1x256xf32>
    %17 = vector.broadcast %16 : vector<1x256xf32> to vector<4x256xf32>
    %18 = arith.mulf %14, %17 : vector<4x256xf32>
    %19 = vector.extract_strided_slice %10 {offsets = [0, 0], sizes = [4, 1], strides = [1, 1]} : vector<4x49xf32> to vector<4x1xf32>
    %20 = vector.broadcast %19 : vector<4x1xf32> to vector<4x256xf32>
    %21 = arith.mulf %18, %20 : vector<4x256xf32>
    %22 = arith.addf %13, %21 : vector<4x256xf32>
    %c50_i32 = arith.constant 50 : i32
    %23 = tpu.dynamic_rotate %8 by %c50_i32 dim 1 : vector<4x256xf32>, i32 -> vector<4x256xf32>
    %c1 = arith.constant 1 : index
    %c0_13 = arith.constant 0 : index
    %c0_14 = arith.constant 0 : index
    %24 = vector.load %arg3[%c1, %c0_13, %c0_14] : memref<49x1x256xf32, #tpu.memory_space<vmem>>, vector<1x1x256xf32>
    %25 = vector.shape_cast %24 : vector<1x1x256xf32> to vector<1x256xf32>
    %26 = vector.broadcast %25 : vector<1x256xf32> to vector<4x256xf32>
    %27 = arith.mulf %23, %26 : vector<4x256xf32>
    %28 = vector.extract_strided_slice %10 {offsets = [0, 1], sizes = [4, 1], strides = [1, 1]} : vector<4x49xf32> to vector<4x1xf32>
    %29 = vector.broadcast %28 : vector<4x1xf32> to vector<4x256xf32>
    %30 = arith.mulf %27, %29 : vector<4x256xf32>
    %31 = arith.addf %22, %30 : vector<4x256xf32>
    %c49_i32 = arith.constant 49 : i32
    %32 = tpu.dynamic_rotate %8 by %c49_i32 dim 1 : vector<4x256xf32>, i32 -> vector<4x256xf32>
    %c2 = arith.constant 2 : index
    %c0_15 = arith.constant 0 : index
    %c0_16 = arith.constant 0 : index
    %33 = vector.load %arg3[%c2, %c0_15, %c0_16] : memref<49x1x256xf32, #tpu.memory_space<vmem>>, vector<1x1x256xf32>
    %34 = vector.shape_cast %33 : vector<1x1x256xf32> to vector<1x256xf32>
    %35 = vector.broadcast %34 : vector<1x256xf32> to vector<4x256xf32>
    %36 = arith.mulf %32, %35 : vector<4x256xf32>
    %37 = vector.extract_strided_slice %10 {offsets = [0, 2], sizes = [4, 1], strides = [1, 1]} : vector<4x49xf32> to vector<4x1xf32>
    %38 = vector.broadcast %37 : vector<4x1xf32> to vector<4x256xf32>
    %39 = arith.mulf %36, %38 : vector<4x256xf32>
    %40 = arith.addf %31, %39 : vector<4x256xf32>
    %c48_i32 = arith.constant 48 : i32
    %41 = tpu.dynamic_rotate %8 by %c48_i32 dim 1 : vector<4x256xf32>, i32 -> vector<4x256xf32>
    %c3 = arith.constant 3 : index
    %c0_17 = arith.constant 0 : index
    %c0_18 = arith.constant 0 : index
    %42 = vector.load %arg3[%c3, %c0_17, %c0_18] : memref<49x1x256xf32, #tpu.memory_space<vmem>>, vector<1x1x256xf32>
    %43 = vector.shape_cast %42 : vector<1x1x256xf32> to vector<1x256xf32>
    %44 = vector.broadcast %43 : vector<1x256xf32> to vector<4x256xf32>
    %45 = arith.mulf %41, %44 : vector<4x256xf32>
    %46 = vector.extract_strided_slice %10 {offsets = [0, 3], sizes = [4, 1], strides = [1, 1]} : vector<4x49xf32> to vector<4x1xf32>
    %47 = vector.broadcast %46 : vector<4x1xf32> to vector<4x256xf32>
    %48 = arith.mulf %45, %47 : vector<4x256xf32>
    %49 = arith.addf %40, %48 : vector<4x256xf32>
    %c47_i32 = arith.constant 47 : i32
    %50 = tpu.dynamic_rotate %8 by %c47_i32 dim 1 : vector<4x256xf32>, i32 -> vector<4x256xf32>
    %c4 = arith.constant 4 : index
    %c0_19 = arith.constant 0 : index
    %c0_20 = arith.constant 0 : index
    %51 = vector.load %arg3[%c4, %c0_19, %c0_20] : memref<49x1x256xf32, #tpu.memory_space<vmem>>, vector<1x1x256xf32>
    %52 = vector.shape_cast %51 : vector<1x1x256xf32> to vector<1x256xf32>
    %53 = vector.broadcast %52 : vector<1x256xf32> to vector<4x256xf32>
    %54 = arith.mulf %50, %53 : vector<4x256xf32>
    %55 = vector.extract_strided_slice %10 {offsets = [0, 4], sizes = [4, 1], strides = [1, 1]} : vector<4x49xf32> to vector<4x1xf32>
    %56 = vector.broadcast %55 : vector<4x1xf32> to vector<4x256xf32>
    %57 = arith.mulf %54, %56 : vector<4x256xf32>
    %58 = arith.addf %49, %57 : vector<4x256xf32>
    %c46_i32 = arith.constant 46 : i32
    %59 = tpu.dynamic_rotate %8 by %c46_i32 dim 1 : vector<4x256xf32>, i32 -> vector<4x256xf32>
    %c5 = arith.constant 5 : index
    %c0_21 = arith.constant 0 : index
    %c0_22 = arith.constant 0 : index
    %60 = vector.load %arg3[%c5, %c0_21, %c0_22] : memref<49x1x256xf32, #tpu.memory_space<vmem>>, vector<1x1x256xf32>
    %61 = vector.shape_cast %60 : vector<1x1x256xf32> to vector<1x256xf32>
    %62 = vector.broadcast %61 : vector<1x256xf32> to vector<4x256xf32>
    %63 = arith.mulf %59, %62 : vector<4x256xf32>
    %64 = vector.extract_strided_slice %10 {offsets = [0, 5], sizes = [4, 1], strides = [1, 1]} : vector<4x49xf32> to vector<4x1xf32>
    %65 = vector.broadcast %64 : vector<4x1xf32> to vector<4x256xf32>
    %66 = arith.mulf %63, %65 : vector<4x256xf32>
    %67 = arith.addf %58, %66 : vector<4x256xf32>
    %c45_i32 = arith.constant 45 : i32
    %68 = tpu.dynamic_rotate %8 by %c45_i32 dim 1 : vector<4x256xf32>, i32 -> vector<4x256xf32>
    %c6 = arith.constant 6 : index
    %c0_23 = arith.constant 0 : index
    %c0_24 = arith.constant 0 : index
    %69 = vector.load %arg3[%c6, %c0_23, %c0_24] : memref<49x1x256xf32, #tpu.memory_space<vmem>>, vector<1x1x256xf32>
    %70 = vector.shape_cast %69 : vector<1x1x256xf32> to vector<1x256xf32>
    %71 = vector.broadcast %70 : vector<1x256xf32> to vector<4x256xf32>
    %72 = arith.mulf %68, %71 : vector<4x256xf32>
    %73 = vector.extract_strided_slice %10 {offsets = [0, 6], sizes = [4, 1], strides = [1, 1]} : vector<4x49xf32> to vector<4x1xf32>
    %74 = vector.broadcast %73 : vector<4x1xf32> to vector<4x256xf32>
    %75 = arith.mulf %72, %74 : vector<4x256xf32>
    %76 = arith.addf %67, %75 : vector<4x256xf32>
    %c35_i32 = arith.constant 35 : i32
    %77 = tpu.dynamic_rotate %8 by %c35_i32 dim 1 : vector<4x256xf32>, i32 -> vector<4x256xf32>
    %c7 = arith.constant 7 : index
    %c0_25 = arith.constant 0 : index
    %c0_26 = arith.constant 0 : index
    %78 = vector.load %arg3[%c7, %c0_25, %c0_26] : memref<49x1x256xf32, #tpu.memory_space<vmem>>, vector<1x1x256xf32>
    %79 = vector.shape_cast %78 : vector<1x1x256xf32> to vector<1x256xf32>
    %80 = vector.broadcast %79 : vector<1x256xf32> to vector<4x256xf32>
    %81 = arith.mulf %77, %80 : vector<4x256xf32>
    %82 = vector.extract_strided_slice %10 {offsets = [0, 7], sizes = [4, 1], strides = [1, 1]} : vector<4x49xf32> to vector<4x1xf32>
    %83 = vector.broadcast %82 : vector<4x1xf32> to vector<4x256xf32>
    %84 = arith.mulf %81, %83 : vector<4x256xf32>
    %85 = arith.addf %76, %84 : vector<4x256xf32>
    %c34_i32 = arith.constant 34 : i32
    %86 = tpu.dynamic_rotate %8 by %c34_i32 dim 1 : vector<4x256xf32>, i32 -> vector<4x256xf32>
    %c8 = arith.constant 8 : index
    %c0_27 = arith.constant 0 : index
    %c0_28 = arith.constant 0 : index
    %87 = vector.load %arg3[%c8, %c0_27, %c0_28] : memref<49x1x256xf32, #tpu.memory_space<vmem>>, vector<1x1x256xf32>
    %88 = vector.shape_cast %87 : vector<1x1x256xf32> to vector<1x256xf32>
    %89 = vector.broadcast %88 : vector<1x256xf32> to vector<4x256xf32>
    %90 = arith.mulf %86, %89 : vector<4x256xf32>
    %91 = vector.extract_strided_slice %10 {offsets = [0, 8], sizes = [4, 1], strides = [1, 1]} : vector<4x49xf32> to vector<4x1xf32>
    %92 = vector.broadcast %91 : vector<4x1xf32> to vector<4x256xf32>
    %93 = arith.mulf %90, %92 : vector<4x256xf32>
    %94 = arith.addf %85, %93 : vector<4x256xf32>
    %c33_i32 = arith.constant 33 : i32
    %95 = tpu.dynamic_rotate %8 by %c33_i32 dim 1 : vector<4x256xf32>, i32 -> vector<4x256xf32>
    %c9 = arith.constant 9 : index
    %c0_29 = arith.constant 0 : index
    %c0_30 = arith.constant 0 : index
    %96 = vector.load %arg3[%c9, %c0_29, %c0_30] : memref<49x1x256xf32, #tpu.memory_space<vmem>>, vector<1x1x256xf32>
    %97 = vector.shape_cast %96 : vector<1x1x256xf32> to vector<1x256xf32>
    %98 = vector.broadcast %97 : vector<1x256xf32> to vector<4x256xf32>
    %99 = arith.mulf %95, %98 : vector<4x256xf32>
    %100 = vector.extract_strided_slice %10 {offsets = [0, 9], sizes = [4, 1], strides = [1, 1]} : vector<4x49xf32> to vector<4x1xf32>
    %101 = vector.broadcast %100 : vector<4x1xf32> to vector<4x256xf32>
    %102 = arith.mulf %99, %101 : vector<4x256xf32>
    %103 = arith.addf %94, %102 : vector<4x256xf32>
    %c32_i32 = arith.constant 32 : i32
    %104 = tpu.dynamic_rotate %8 by %c32_i32 dim 1 : vector<4x256xf32>, i32 -> vector<4x256xf32>
    %c10 = arith.constant 10 : index
    %c0_31 = arith.constant 0 : index
    %c0_32 = arith.constant 0 : index
    %105 = vector.load %arg3[%c10, %c0_31, %c0_32] : memref<49x1x256xf32, #tpu.memory_space<vmem>>, vector<1x1x256xf32>
    %106 = vector.shape_cast %105 : vector<1x1x256xf32> to vector<1x256xf32>
    %107 = vector.broadcast %106 : vector<1x256xf32> to vector<4x256xf32>
    %108 = arith.mulf %104, %107 : vector<4x256xf32>
    %109 = vector.extract_strided_slice %10 {offsets = [0, 10], sizes = [4, 1], strides = [1, 1]} : vector<4x49xf32> to vector<4x1xf32>
    %110 = vector.broadcast %109 : vector<4x1xf32> to vector<4x256xf32>
    %111 = arith.mulf %108, %110 : vector<4x256xf32>
    %112 = arith.addf %103, %111 : vector<4x256xf32>
    %c31_i32 = arith.constant 31 : i32
    %113 = tpu.dynamic_rotate %8 by %c31_i32 dim 1 : vector<4x256xf32>, i32 -> vector<4x256xf32>
    %c11 = arith.constant 11 : index
    %c0_33 = arith.constant 0 : index
    %c0_34 = arith.constant 0 : index
    %114 = vector.load %arg3[%c11, %c0_33, %c0_34] : memref<49x1x256xf32, #tpu.memory_space<vmem>>, vector<1x1x256xf32>
    %115 = vector.shape_cast %114 : vector<1x1x256xf32> to vector<1x256xf32>
    %116 = vector.broadcast %115 : vector<1x256xf32> to vector<4x256xf32>
    %117 = arith.mulf %113, %116 : vector<4x256xf32>
    %118 = vector.extract_strided_slice %10 {offsets = [0, 11], sizes = [4, 1], strides = [1, 1]} : vector<4x49xf32> to vector<4x1xf32>
    %119 = vector.broadcast %118 : vector<4x1xf32> to vector<4x256xf32>
    %120 = arith.mulf %117, %119 : vector<4x256xf32>
    %121 = arith.addf %112, %120 : vector<4x256xf32>
    %c30_i32 = arith.constant 30 : i32
    %122 = tpu.dynamic_rotate %8 by %c30_i32 dim 1 : vector<4x256xf32>, i32 -> vector<4x256xf32>
    %c12 = arith.constant 12 : index
    %c0_35 = arith.constant 0 : index
    %c0_36 = arith.constant 0 : index
    %123 = vector.load %arg3[%c12, %c0_35, %c0_36] : memref<49x1x256xf32, #tpu.memory_space<vmem>>, vector<1x1x256xf32>
    %124 = vector.shape_cast %123 : vector<1x1x256xf32> to vector<1x256xf32>
    %125 = vector.broadcast %124 : vector<1x256xf32> to vector<4x256xf32>
    %126 = arith.mulf %122, %125 : vector<4x256xf32>
    %127 = vector.extract_strided_slice %10 {offsets = [0, 12], sizes = [4, 1], strides = [1, 1]} : vector<4x49xf32> to vector<4x1xf32>
    %128 = vector.broadcast %127 : vector<4x1xf32> to vector<4x256xf32>
    %129 = arith.mulf %126, %128 : vector<4x256xf32>
    %130 = arith.addf %121, %129 : vector<4x256xf32>
    %c29_i32 = arith.constant 29 : i32
    %131 = tpu.dynamic_rotate %8 by %c29_i32 dim 1 : vector<4x256xf32>, i32 -> vector<4x256xf32>
    %c13 = arith.constant 13 : index
    %c0_37 = arith.constant 0 : index
    %c0_38 = arith.constant 0 : index
    %132 = vector.load %arg3[%c13, %c0_37, %c0_38] : memref<49x1x256xf32, #tpu.memory_space<vmem>>, vector<1x1x256xf32>
    %133 = vector.shape_cast %132 : vector<1x1x256xf32> to vector<1x256xf32>
    %134 = vector.broadcast %133 : vector<1x256xf32> to vector<4x256xf32>
    %135 = arith.mulf %131, %134 : vector<4x256xf32>
    %136 = vector.extract_strided_slice %10 {offsets = [0, 13], sizes = [4, 1], strides = [1, 1]} : vector<4x49xf32> to vector<4x1xf32>
    %137 = vector.broadcast %136 : vector<4x1xf32> to vector<4x256xf32>
    %138 = arith.mulf %135, %137 : vector<4x256xf32>
    %139 = arith.addf %130, %138 : vector<4x256xf32>
    %c19_i32 = arith.constant 19 : i32
    %140 = tpu.dynamic_rotate %8 by %c19_i32 dim 1 : vector<4x256xf32>, i32 -> vector<4x256xf32>
    %c14 = arith.constant 14 : index
    %c0_39 = arith.constant 0 : index
    %c0_40 = arith.constant 0 : index
    %141 = vector.load %arg3[%c14, %c0_39, %c0_40] : memref<49x1x256xf32, #tpu.memory_space<vmem>>, vector<1x1x256xf32>
    %142 = vector.shape_cast %141 : vector<1x1x256xf32> to vector<1x256xf32>
    %143 = vector.broadcast %142 : vector<1x256xf32> to vector<4x256xf32>
    %144 = arith.mulf %140, %143 : vector<4x256xf32>
    %145 = vector.extract_strided_slice %10 {offsets = [0, 14], sizes = [4, 1], strides = [1, 1]} : vector<4x49xf32> to vector<4x1xf32>
    %146 = vector.broadcast %145 : vector<4x1xf32> to vector<4x256xf32>
    %147 = arith.mulf %144, %146 : vector<4x256xf32>
    %148 = arith.addf %139, %147 : vector<4x256xf32>
    %c18_i32 = arith.constant 18 : i32
    %149 = tpu.dynamic_rotate %8 by %c18_i32 dim 1 : vector<4x256xf32>, i32 -> vector<4x256xf32>
    %c15 = arith.constant 15 : index
    %c0_41 = arith.constant 0 : index
    %c0_42 = arith.constant 0 : index
    %150 = vector.load %arg3[%c15, %c0_41, %c0_42] : memref<49x1x256xf32, #tpu.memory_space<vmem>>, vector<1x1x256xf32>
    %151 = vector.shape_cast %150 : vector<1x1x256xf32> to vector<1x256xf32>
    %152 = vector.broadcast %151 : vector<1x256xf32> to vector<4x256xf32>
    %153 = arith.mulf %149, %152 : vector<4x256xf32>
    %154 = vector.extract_strided_slice %10 {offsets = [0, 15], sizes = [4, 1], strides = [1, 1]} : vector<4x49xf32> to vector<4x1xf32>
    %155 = vector.broadcast %154 : vector<4x1xf32> to vector<4x256xf32>
    %156 = arith.mulf %153, %155 : vector<4x256xf32>
    %157 = arith.addf %148, %156 : vector<4x256xf32>
    %c17_i32 = arith.constant 17 : i32
    %158 = tpu.dynamic_rotate %8 by %c17_i32 dim 1 : vector<4x256xf32>, i32 -> vector<4x256xf32>
    %c16 = arith.constant 16 : index
    %c0_43 = arith.constant 0 : index
    %c0_44 = arith.constant 0 : index
    %159 = vector.load %arg3[%c16, %c0_43, %c0_44] : memref<49x1x256xf32, #tpu.memory_space<vmem>>, vector<1x1x256xf32>
    %160 = vector.shape_cast %159 : vector<1x1x256xf32> to vector<1x256xf32>
    %161 = vector.broadcast %160 : vector<1x256xf32> to vector<4x256xf32>
    %162 = arith.mulf %158, %161 : vector<4x256xf32>
    %163 = vector.extract_strided_slice %10 {offsets = [0, 16], sizes = [4, 1], strides = [1, 1]} : vector<4x49xf32> to vector<4x1xf32>
    %164 = vector.broadcast %163 : vector<4x1xf32> to vector<4x256xf32>
    %165 = arith.mulf %162, %164 : vector<4x256xf32>
    %166 = arith.addf %157, %165 : vector<4x256xf32>
    %c16_i32 = arith.constant 16 : i32
    %167 = tpu.dynamic_rotate %8 by %c16_i32 dim 1 : vector<4x256xf32>, i32 -> vector<4x256xf32>
    %c17 = arith.constant 17 : index
    %c0_45 = arith.constant 0 : index
    %c0_46 = arith.constant 0 : index
    %168 = vector.load %arg3[%c17, %c0_45, %c0_46] : memref<49x1x256xf32, #tpu.memory_space<vmem>>, vector<1x1x256xf32>
    %169 = vector.shape_cast %168 : vector<1x1x256xf32> to vector<1x256xf32>
    %170 = vector.broadcast %169 : vector<1x256xf32> to vector<4x256xf32>
    %171 = arith.mulf %167, %170 : vector<4x256xf32>
    %172 = vector.extract_strided_slice %10 {offsets = [0, 17], sizes = [4, 1], strides = [1, 1]} : vector<4x49xf32> to vector<4x1xf32>
    %173 = vector.broadcast %172 : vector<4x1xf32> to vector<4x256xf32>
    %174 = arith.mulf %171, %173 : vector<4x256xf32>
    %175 = arith.addf %166, %174 : vector<4x256xf32>
    %c15_i32 = arith.constant 15 : i32
    %176 = tpu.dynamic_rotate %8 by %c15_i32 dim 1 : vector<4x256xf32>, i32 -> vector<4x256xf32>
    %c18 = arith.constant 18 : index
    %c0_47 = arith.constant 0 : index
    %c0_48 = arith.constant 0 : index
    %177 = vector.load %arg3[%c18, %c0_47, %c0_48] : memref<49x1x256xf32, #tpu.memory_space<vmem>>, vector<1x1x256xf32>
    %178 = vector.shape_cast %177 : vector<1x1x256xf32> to vector<1x256xf32>
    %179 = vector.broadcast %178 : vector<1x256xf32> to vector<4x256xf32>
    %180 = arith.mulf %176, %179 : vector<4x256xf32>
    %181 = vector.extract_strided_slice %10 {offsets = [0, 18], sizes = [4, 1], strides = [1, 1]} : vector<4x49xf32> to vector<4x1xf32>
    %182 = vector.broadcast %181 : vector<4x1xf32> to vector<4x256xf32>
    %183 = arith.mulf %180, %182 : vector<4x256xf32>
    %184 = arith.addf %175, %183 : vector<4x256xf32>
    %c14_i32 = arith.constant 14 : i32
    %185 = tpu.dynamic_rotate %8 by %c14_i32 dim 1 : vector<4x256xf32>, i32 -> vector<4x256xf32>
    %c19 = arith.constant 19 : index
    %c0_49 = arith.constant 0 : index
    %c0_50 = arith.constant 0 : index
    %186 = vector.load %arg3[%c19, %c0_49, %c0_50] : memref<49x1x256xf32, #tpu.memory_space<vmem>>, vector<1x1x256xf32>
    %187 = vector.shape_cast %186 : vector<1x1x256xf32> to vector<1x256xf32>
    %188 = vector.broadcast %187 : vector<1x256xf32> to vector<4x256xf32>
    %189 = arith.mulf %185, %188 : vector<4x256xf32>
    %190 = vector.extract_strided_slice %10 {offsets = [0, 19], sizes = [4, 1], strides = [1, 1]} : vector<4x49xf32> to vector<4x1xf32>
    %191 = vector.broadcast %190 : vector<4x1xf32> to vector<4x256xf32>
    %192 = arith.mulf %189, %191 : vector<4x256xf32>
    %193 = arith.addf %184, %192 : vector<4x256xf32>
    %c13_i32 = arith.constant 13 : i32
    %194 = tpu.dynamic_rotate %8 by %c13_i32 dim 1 : vector<4x256xf32>, i32 -> vector<4x256xf32>
    %c20 = arith.constant 20 : index
    %c0_51 = arith.constant 0 : index
    %c0_52 = arith.constant 0 : index
    %195 = vector.load %arg3[%c20, %c0_51, %c0_52] : memref<49x1x256xf32, #tpu.memory_space<vmem>>, vector<1x1x256xf32>
    %196 = vector.shape_cast %195 : vector<1x1x256xf32> to vector<1x256xf32>
    %197 = vector.broadcast %196 : vector<1x256xf32> to vector<4x256xf32>
    %198 = arith.mulf %194, %197 : vector<4x256xf32>
    %199 = vector.extract_strided_slice %10 {offsets = [0, 20], sizes = [4, 1], strides = [1, 1]} : vector<4x49xf32> to vector<4x1xf32>
    %200 = vector.broadcast %199 : vector<4x1xf32> to vector<4x256xf32>
    %201 = arith.mulf %198, %200 : vector<4x256xf32>
    %202 = arith.addf %193, %201 : vector<4x256xf32>
    %c3_i32 = arith.constant 3 : i32
    %203 = tpu.dynamic_rotate %8 by %c3_i32 dim 1 : vector<4x256xf32>, i32 -> vector<4x256xf32>
    %c21 = arith.constant 21 : index
    %c0_53 = arith.constant 0 : index
    %c0_54 = arith.constant 0 : index
    %204 = vector.load %arg3[%c21, %c0_53, %c0_54] : memref<49x1x256xf32, #tpu.memory_space<vmem>>, vector<1x1x256xf32>
    %205 = vector.shape_cast %204 : vector<1x1x256xf32> to vector<1x256xf32>
    %206 = vector.broadcast %205 : vector<1x256xf32> to vector<4x256xf32>
    %207 = arith.mulf %203, %206 : vector<4x256xf32>
    %208 = vector.extract_strided_slice %10 {offsets = [0, 21], sizes = [4, 1], strides = [1, 1]} : vector<4x49xf32> to vector<4x1xf32>
    %209 = vector.broadcast %208 : vector<4x1xf32> to vector<4x256xf32>
    %210 = arith.mulf %207, %209 : vector<4x256xf32>
    %211 = arith.addf %202, %210 : vector<4x256xf32>
    %c2_i32 = arith.constant 2 : i32
    %212 = tpu.dynamic_rotate %8 by %c2_i32 dim 1 : vector<4x256xf32>, i32 -> vector<4x256xf32>
    %c22 = arith.constant 22 : index
    %c0_55 = arith.constant 0 : index
    %c0_56 = arith.constant 0 : index
    %213 = vector.load %arg3[%c22, %c0_55, %c0_56] : memref<49x1x256xf32, #tpu.memory_space<vmem>>, vector<1x1x256xf32>
    %214 = vector.shape_cast %213 : vector<1x1x256xf32> to vector<1x256xf32>
    %215 = vector.broadcast %214 : vector<1x256xf32> to vector<4x256xf32>
    %216 = arith.mulf %212, %215 : vector<4x256xf32>
    %217 = vector.extract_strided_slice %10 {offsets = [0, 22], sizes = [4, 1], strides = [1, 1]} : vector<4x49xf32> to vector<4x1xf32>
    %218 = vector.broadcast %217 : vector<4x1xf32> to vector<4x256xf32>
    %219 = arith.mulf %216, %218 : vector<4x256xf32>
    %220 = arith.addf %211, %219 : vector<4x256xf32>
    %c1_i32 = arith.constant 1 : i32
    %221 = tpu.dynamic_rotate %8 by %c1_i32 dim 1 : vector<4x256xf32>, i32 -> vector<4x256xf32>
    %c23 = arith.constant 23 : index
    %c0_57 = arith.constant 0 : index
    %c0_58 = arith.constant 0 : index
    %222 = vector.load %arg3[%c23, %c0_57, %c0_58] : memref<49x1x256xf32, #tpu.memory_space<vmem>>, vector<1x1x256xf32>
    %223 = vector.shape_cast %222 : vector<1x1x256xf32> to vector<1x256xf32>
    %224 = vector.broadcast %223 : vector<1x256xf32> to vector<4x256xf32>
    %225 = arith.mulf %221, %224 : vector<4x256xf32>
    %226 = vector.extract_strided_slice %10 {offsets = [0, 23], sizes = [4, 1], strides = [1, 1]} : vector<4x49xf32> to vector<4x1xf32>
    %227 = vector.broadcast %226 : vector<4x1xf32> to vector<4x256xf32>
    %228 = arith.mulf %225, %227 : vector<4x256xf32>
    %229 = arith.addf %220, %228 : vector<4x256xf32>
    %c255_i32 = arith.constant 255 : i32
    %230 = tpu.dynamic_rotate %8 by %c255_i32 dim 1 : vector<4x256xf32>, i32 -> vector<4x256xf32>
    %c25 = arith.constant 25 : index
    %c0_59 = arith.constant 0 : index
    %c0_60 = arith.constant 0 : index
    %231 = vector.load %arg3[%c25, %c0_59, %c0_60] : memref<49x1x256xf32, #tpu.memory_space<vmem>>, vector<1x1x256xf32>
    %232 = vector.shape_cast %231 : vector<1x1x256xf32> to vector<1x256xf32>
    %233 = vector.broadcast %232 : vector<1x256xf32> to vector<4x256xf32>
    %234 = arith.mulf %230, %233 : vector<4x256xf32>
    %235 = vector.extract_strided_slice %10 {offsets = [0, 25], sizes = [4, 1], strides = [1, 1]} : vector<4x49xf32> to vector<4x1xf32>
    %236 = vector.broadcast %235 : vector<4x1xf32> to vector<4x256xf32>
    %237 = arith.mulf %234, %236 : vector<4x256xf32>
    %238 = arith.addf %229, %237 : vector<4x256xf32>
    %c254_i32 = arith.constant 254 : i32
    %239 = tpu.dynamic_rotate %8 by %c254_i32 dim 1 : vector<4x256xf32>, i32 -> vector<4x256xf32>
    %c26 = arith.constant 26 : index
    %c0_61 = arith.constant 0 : index
    %c0_62 = arith.constant 0 : index
    %240 = vector.load %arg3[%c26, %c0_61, %c0_62] : memref<49x1x256xf32, #tpu.memory_space<vmem>>, vector<1x1x256xf32>
    %241 = vector.shape_cast %240 : vector<1x1x256xf32> to vector<1x256xf32>
    %242 = vector.broadcast %241 : vector<1x256xf32> to vector<4x256xf32>
    %243 = arith.mulf %239, %242 : vector<4x256xf32>
    %244 = vector.extract_strided_slice %10 {offsets = [0, 26], sizes = [4, 1], strides = [1, 1]} : vector<4x49xf32> to vector<4x1xf32>
    %245 = vector.broadcast %244 : vector<4x1xf32> to vector<4x256xf32>
    %246 = arith.mulf %243, %245 : vector<4x256xf32>
    %247 = arith.addf %238, %246 : vector<4x256xf32>
    %c253_i32 = arith.constant 253 : i32
    %248 = tpu.dynamic_rotate %8 by %c253_i32 dim 1 : vector<4x256xf32>, i32 -> vector<4x256xf32>
    %c27 = arith.constant 27 : index
    %c0_63 = arith.constant 0 : index
    %c0_64 = arith.constant 0 : index
    %249 = vector.load %arg3[%c27, %c0_63, %c0_64] : memref<49x1x256xf32, #tpu.memory_space<vmem>>, vector<1x1x256xf32>
    %250 = vector.shape_cast %249 : vector<1x1x256xf32> to vector<1x256xf32>
    %251 = vector.broadcast %250 : vector<1x256xf32> to vector<4x256xf32>
    %252 = arith.mulf %248, %251 : vector<4x256xf32>
    %253 = vector.extract_strided_slice %10 {offsets = [0, 27], sizes = [4, 1], strides = [1, 1]} : vector<4x49xf32> to vector<4x1xf32>
    %254 = vector.broadcast %253 : vector<4x1xf32> to vector<4x256xf32>
    %255 = arith.mulf %252, %254 : vector<4x256xf32>
    %256 = arith.addf %247, %255 : vector<4x256xf32>
    %c243_i32 = arith.constant 243 : i32
    %257 = tpu.dynamic_rotate %8 by %c243_i32 dim 1 : vector<4x256xf32>, i32 -> vector<4x256xf32>
    %c28 = arith.constant 28 : index
    %c0_65 = arith.constant 0 : index
    %c0_66 = arith.constant 0 : index
    %258 = vector.load %arg3[%c28, %c0_65, %c0_66] : memref<49x1x256xf32, #tpu.memory_space<vmem>>, vector<1x1x256xf32>
    %259 = vector.shape_cast %258 : vector<1x1x256xf32> to vector<1x256xf32>
    %260 = vector.broadcast %259 : vector<1x256xf32> to vector<4x256xf32>
    %261 = arith.mulf %257, %260 : vector<4x256xf32>
    %262 = vector.extract_strided_slice %10 {offsets = [0, 28], sizes = [4, 1], strides = [1, 1]} : vector<4x49xf32> to vector<4x1xf32>
    %263 = vector.broadcast %262 : vector<4x1xf32> to vector<4x256xf32>
    %264 = arith.mulf %261, %263 : vector<4x256xf32>
    %265 = arith.addf %256, %264 : vector<4x256xf32>
    %c242_i32 = arith.constant 242 : i32
    %266 = tpu.dynamic_rotate %8 by %c242_i32 dim 1 : vector<4x256xf32>, i32 -> vector<4x256xf32>
    %c29 = arith.constant 29 : index
    %c0_67 = arith.constant 0 : index
    %c0_68 = arith.constant 0 : index
    %267 = vector.load %arg3[%c29, %c0_67, %c0_68] : memref<49x1x256xf32, #tpu.memory_space<vmem>>, vector<1x1x256xf32>
    %268 = vector.shape_cast %267 : vector<1x1x256xf32> to vector<1x256xf32>
    %269 = vector.broadcast %268 : vector<1x256xf32> to vector<4x256xf32>
    %270 = arith.mulf %266, %269 : vector<4x256xf32>
    %271 = vector.extract_strided_slice %10 {offsets = [0, 29], sizes = [4, 1], strides = [1, 1]} : vector<4x49xf32> to vector<4x1xf32>
    %272 = vector.broadcast %271 : vector<4x1xf32> to vector<4x256xf32>
    %273 = arith.mulf %270, %272 : vector<4x256xf32>
    %274 = arith.addf %265, %273 : vector<4x256xf32>
    %c241_i32 = arith.constant 241 : i32
    %275 = tpu.dynamic_rotate %8 by %c241_i32 dim 1 : vector<4x256xf32>, i32 -> vector<4x256xf32>
    %c30 = arith.constant 30 : index
    %c0_69 = arith.constant 0 : index
    %c0_70 = arith.constant 0 : index
    %276 = vector.load %arg3[%c30, %c0_69, %c0_70] : memref<49x1x256xf32, #tpu.memory_space<vmem>>, vector<1x1x256xf32>
    %277 = vector.shape_cast %276 : vector<1x1x256xf32> to vector<1x256xf32>
    %278 = vector.broadcast %277 : vector<1x256xf32> to vector<4x256xf32>
    %279 = arith.mulf %275, %278 : vector<4x256xf32>
    %280 = vector.extract_strided_slice %10 {offsets = [0, 30], sizes = [4, 1], strides = [1, 1]} : vector<4x49xf32> to vector<4x1xf32>
    %281 = vector.broadcast %280 : vector<4x1xf32> to vector<4x256xf32>
    %282 = arith.mulf %279, %281 : vector<4x256xf32>
    %283 = arith.addf %274, %282 : vector<4x256xf32>
    %c240_i32 = arith.constant 240 : i32
    %284 = tpu.dynamic_rotate %8 by %c240_i32 dim 1 : vector<4x256xf32>, i32 -> vector<4x256xf32>
    %c31 = arith.constant 31 : index
    %c0_71 = arith.constant 0 : index
    %c0_72 = arith.constant 0 : index
    %285 = vector.load %arg3[%c31, %c0_71, %c0_72] : memref<49x1x256xf32, #tpu.memory_space<vmem>>, vector<1x1x256xf32>
    %286 = vector.shape_cast %285 : vector<1x1x256xf32> to vector<1x256xf32>
    %287 = vector.broadcast %286 : vector<1x256xf32> to vector<4x256xf32>
    %288 = arith.mulf %284, %287 : vector<4x256xf32>
    %289 = vector.extract_strided_slice %10 {offsets = [0, 31], sizes = [4, 1], strides = [1, 1]} : vector<4x49xf32> to vector<4x1xf32>
    %290 = vector.broadcast %289 : vector<4x1xf32> to vector<4x256xf32>
    %291 = arith.mulf %288, %290 : vector<4x256xf32>
    %292 = arith.addf %283, %291 : vector<4x256xf32>
    %c239_i32 = arith.constant 239 : i32
    %293 = tpu.dynamic_rotate %8 by %c239_i32 dim 1 : vector<4x256xf32>, i32 -> vector<4x256xf32>
    %c32 = arith.constant 32 : index
    %c0_73 = arith.constant 0 : index
    %c0_74 = arith.constant 0 : index
    %294 = vector.load %arg3[%c32, %c0_73, %c0_74] : memref<49x1x256xf32, #tpu.memory_space<vmem>>, vector<1x1x256xf32>
    %295 = vector.shape_cast %294 : vector<1x1x256xf32> to vector<1x256xf32>
    %296 = vector.broadcast %295 : vector<1x256xf32> to vector<4x256xf32>
    %297 = arith.mulf %293, %296 : vector<4x256xf32>
    %298 = vector.extract_strided_slice %10 {offsets = [0, 32], sizes = [4, 1], strides = [1, 1]} : vector<4x49xf32> to vector<4x1xf32>
    %299 = vector.broadcast %298 : vector<4x1xf32> to vector<4x256xf32>
    %300 = arith.mulf %297, %299 : vector<4x256xf32>
    %301 = arith.addf %292, %300 : vector<4x256xf32>
    %c238_i32 = arith.constant 238 : i32
    %302 = tpu.dynamic_rotate %8 by %c238_i32 dim 1 : vector<4x256xf32>, i32 -> vector<4x256xf32>
    %c33 = arith.constant 33 : index
    %c0_75 = arith.constant 0 : index
    %c0_76 = arith.constant 0 : index
    %303 = vector.load %arg3[%c33, %c0_75, %c0_76] : memref<49x1x256xf32, #tpu.memory_space<vmem>>, vector<1x1x256xf32>
    %304 = vector.shape_cast %303 : vector<1x1x256xf32> to vector<1x256xf32>
    %305 = vector.broadcast %304 : vector<1x256xf32> to vector<4x256xf32>
    %306 = arith.mulf %302, %305 : vector<4x256xf32>
    %307 = vector.extract_strided_slice %10 {offsets = [0, 33], sizes = [4, 1], strides = [1, 1]} : vector<4x49xf32> to vector<4x1xf32>
    %308 = vector.broadcast %307 : vector<4x1xf32> to vector<4x256xf32>
    %309 = arith.mulf %306, %308 : vector<4x256xf32>
    %310 = arith.addf %301, %309 : vector<4x256xf32>
    %c237_i32 = arith.constant 237 : i32
    %311 = tpu.dynamic_rotate %8 by %c237_i32 dim 1 : vector<4x256xf32>, i32 -> vector<4x256xf32>
    %c34 = arith.constant 34 : index
    %c0_77 = arith.constant 0 : index
    %c0_78 = arith.constant 0 : index
    %312 = vector.load %arg3[%c34, %c0_77, %c0_78] : memref<49x1x256xf32, #tpu.memory_space<vmem>>, vector<1x1x256xf32>
    %313 = vector.shape_cast %312 : vector<1x1x256xf32> to vector<1x256xf32>
    %314 = vector.broadcast %313 : vector<1x256xf32> to vector<4x256xf32>
    %315 = arith.mulf %311, %314 : vector<4x256xf32>
    %316 = vector.extract_strided_slice %10 {offsets = [0, 34], sizes = [4, 1], strides = [1, 1]} : vector<4x49xf32> to vector<4x1xf32>
    %317 = vector.broadcast %316 : vector<4x1xf32> to vector<4x256xf32>
    %318 = arith.mulf %315, %317 : vector<4x256xf32>
    %319 = arith.addf %310, %318 : vector<4x256xf32>
    %c227_i32 = arith.constant 227 : i32
    %320 = tpu.dynamic_rotate %8 by %c227_i32 dim 1 : vector<4x256xf32>, i32 -> vector<4x256xf32>
    %c35 = arith.constant 35 : index
    %c0_79 = arith.constant 0 : index
    %c0_80 = arith.constant 0 : index
    %321 = vector.load %arg3[%c35, %c0_79, %c0_80] : memref<49x1x256xf32, #tpu.memory_space<vmem>>, vector<1x1x256xf32>
    %322 = vector.shape_cast %321 : vector<1x1x256xf32> to vector<1x256xf32>
    %323 = vector.broadcast %322 : vector<1x256xf32> to vector<4x256xf32>
    %324 = arith.mulf %320, %323 : vector<4x256xf32>
    %325 = vector.extract_strided_slice %10 {offsets = [0, 35], sizes = [4, 1], strides = [1, 1]} : vector<4x49xf32> to vector<4x1xf32>
    %326 = vector.broadcast %325 : vector<4x1xf32> to vector<4x256xf32>
    %327 = arith.mulf %324, %326 : vector<4x256xf32>
    %328 = arith.addf %319, %327 : vector<4x256xf32>
    %c226_i32 = arith.constant 226 : i32
    %329 = tpu.dynamic_rotate %8 by %c226_i32 dim 1 : vector<4x256xf32>, i32 -> vector<4x256xf32>
    %c36 = arith.constant 36 : index
    %c0_81 = arith.constant 0 : index
    %c0_82 = arith.constant 0 : index
    %330 = vector.load %arg3[%c36, %c0_81, %c0_82] : memref<49x1x256xf32, #tpu.memory_space<vmem>>, vector<1x1x256xf32>
    %331 = vector.shape_cast %330 : vector<1x1x256xf32> to vector<1x256xf32>
    %332 = vector.broadcast %331 : vector<1x256xf32> to vector<4x256xf32>
    %333 = arith.mulf %329, %332 : vector<4x256xf32>
    %334 = vector.extract_strided_slice %10 {offsets = [0, 36], sizes = [4, 1], strides = [1, 1]} : vector<4x49xf32> to vector<4x1xf32>
    %335 = vector.broadcast %334 : vector<4x1xf32> to vector<4x256xf32>
    %336 = arith.mulf %333, %335 : vector<4x256xf32>
    %337 = arith.addf %328, %336 : vector<4x256xf32>
    %c225_i32 = arith.constant 225 : i32
    %338 = tpu.dynamic_rotate %8 by %c225_i32 dim 1 : vector<4x256xf32>, i32 -> vector<4x256xf32>
    %c37 = arith.constant 37 : index
    %c0_83 = arith.constant 0 : index
    %c0_84 = arith.constant 0 : index
    %339 = vector.load %arg3[%c37, %c0_83, %c0_84] : memref<49x1x256xf32, #tpu.memory_space<vmem>>, vector<1x1x256xf32>
    %340 = vector.shape_cast %339 : vector<1x1x256xf32> to vector<1x256xf32>
    %341 = vector.broadcast %340 : vector<1x256xf32> to vector<4x256xf32>
    %342 = arith.mulf %338, %341 : vector<4x256xf32>
    %343 = vector.extract_strided_slice %10 {offsets = [0, 37], sizes = [4, 1], strides = [1, 1]} : vector<4x49xf32> to vector<4x1xf32>
    %344 = vector.broadcast %343 : vector<4x1xf32> to vector<4x256xf32>
    %345 = arith.mulf %342, %344 : vector<4x256xf32>
    %346 = arith.addf %337, %345 : vector<4x256xf32>
    %c224_i32 = arith.constant 224 : i32
    %347 = tpu.dynamic_rotate %8 by %c224_i32 dim 1 : vector<4x256xf32>, i32 -> vector<4x256xf32>
    %c38 = arith.constant 38 : index
    %c0_85 = arith.constant 0 : index
    %c0_86 = arith.constant 0 : index
    %348 = vector.load %arg3[%c38, %c0_85, %c0_86] : memref<49x1x256xf32, #tpu.memory_space<vmem>>, vector<1x1x256xf32>
    %349 = vector.shape_cast %348 : vector<1x1x256xf32> to vector<1x256xf32>
    %350 = vector.broadcast %349 : vector<1x256xf32> to vector<4x256xf32>
    %351 = arith.mulf %347, %350 : vector<4x256xf32>
    %352 = vector.extract_strided_slice %10 {offsets = [0, 38], sizes = [4, 1], strides = [1, 1]} : vector<4x49xf32> to vector<4x1xf32>
    %353 = vector.broadcast %352 : vector<4x1xf32> to vector<4x256xf32>
    %354 = arith.mulf %351, %353 : vector<4x256xf32>
    %355 = arith.addf %346, %354 : vector<4x256xf32>
    %c223_i32 = arith.constant 223 : i32
    %356 = tpu.dynamic_rotate %8 by %c223_i32 dim 1 : vector<4x256xf32>, i32 -> vector<4x256xf32>
    %c39 = arith.constant 39 : index
    %c0_87 = arith.constant 0 : index
    %c0_88 = arith.constant 0 : index
    %357 = vector.load %arg3[%c39, %c0_87, %c0_88] : memref<49x1x256xf32, #tpu.memory_space<vmem>>, vector<1x1x256xf32>
    %358 = vector.shape_cast %357 : vector<1x1x256xf32> to vector<1x256xf32>
    %359 = vector.broadcast %358 : vector<1x256xf32> to vector<4x256xf32>
    %360 = arith.mulf %356, %359 : vector<4x256xf32>
    %361 = vector.extract_strided_slice %10 {offsets = [0, 39], sizes = [4, 1], strides = [1, 1]} : vector<4x49xf32> to vector<4x1xf32>
    %362 = vector.broadcast %361 : vector<4x1xf32> to vector<4x256xf32>
    %363 = arith.mulf %360, %362 : vector<4x256xf32>
    %364 = arith.addf %355, %363 : vector<4x256xf32>
    %c222_i32 = arith.constant 222 : i32
    %365 = tpu.dynamic_rotate %8 by %c222_i32 dim 1 : vector<4x256xf32>, i32 -> vector<4x256xf32>
    %c40 = arith.constant 40 : index
    %c0_89 = arith.constant 0 : index
    %c0_90 = arith.constant 0 : index
    %366 = vector.load %arg3[%c40, %c0_89, %c0_90] : memref<49x1x256xf32, #tpu.memory_space<vmem>>, vector<1x1x256xf32>
    %367 = vector.shape_cast %366 : vector<1x1x256xf32> to vector<1x256xf32>
    %368 = vector.broadcast %367 : vector<1x256xf32> to vector<4x256xf32>
    %369 = arith.mulf %365, %368 : vector<4x256xf32>
    %370 = vector.extract_strided_slice %10 {offsets = [0, 40], sizes = [4, 1], strides = [1, 1]} : vector<4x49xf32> to vector<4x1xf32>
    %371 = vector.broadcast %370 : vector<4x1xf32> to vector<4x256xf32>
    %372 = arith.mulf %369, %371 : vector<4x256xf32>
    %373 = arith.addf %364, %372 : vector<4x256xf32>
    %c221_i32 = arith.constant 221 : i32
    %374 = tpu.dynamic_rotate %8 by %c221_i32 dim 1 : vector<4x256xf32>, i32 -> vector<4x256xf32>
    %c41 = arith.constant 41 : index
    %c0_91 = arith.constant 0 : index
    %c0_92 = arith.constant 0 : index
    %375 = vector.load %arg3[%c41, %c0_91, %c0_92] : memref<49x1x256xf32, #tpu.memory_space<vmem>>, vector<1x1x256xf32>
    %376 = vector.shape_cast %375 : vector<1x1x256xf32> to vector<1x256xf32>
    %377 = vector.broadcast %376 : vector<1x256xf32> to vector<4x256xf32>
    %378 = arith.mulf %374, %377 : vector<4x256xf32>
    %379 = vector.extract_strided_slice %10 {offsets = [0, 41], sizes = [4, 1], strides = [1, 1]} : vector<4x49xf32> to vector<4x1xf32>
    %380 = vector.broadcast %379 : vector<4x1xf32> to vector<4x256xf32>
    %381 = arith.mulf %378, %380 : vector<4x256xf32>
    %382 = arith.addf %373, %381 : vector<4x256xf32>
    %c211_i32 = arith.constant 211 : i32
    %383 = tpu.dynamic_rotate %8 by %c211_i32 dim 1 : vector<4x256xf32>, i32 -> vector<4x256xf32>
    %c42 = arith.constant 42 : index
    %c0_93 = arith.constant 0 : index
    %c0_94 = arith.constant 0 : index
    %384 = vector.load %arg3[%c42, %c0_93, %c0_94] : memref<49x1x256xf32, #tpu.memory_space<vmem>>, vector<1x1x256xf32>
    %385 = vector.shape_cast %384 : vector<1x1x256xf32> to vector<1x256xf32>
    %386 = vector.broadcast %385 : vector<1x256xf32> to vector<4x256xf32>
    %387 = arith.mulf %383, %386 : vector<4x256xf32>
    %388 = vector.extract_strided_slice %10 {offsets = [0, 42], sizes = [4, 1], strides = [1, 1]} : vector<4x49xf32> to vector<4x1xf32>
    %389 = vector.broadcast %388 : vector<4x1xf32> to vector<4x256xf32>
    %390 = arith.mulf %387, %389 : vector<4x256xf32>
    %391 = arith.addf %382, %390 : vector<4x256xf32>
    %c210_i32 = arith.constant 210 : i32
    %392 = tpu.dynamic_rotate %8 by %c210_i32 dim 1 : vector<4x256xf32>, i32 -> vector<4x256xf32>
    %c43 = arith.constant 43 : index
    %c0_95 = arith.constant 0 : index
    %c0_96 = arith.constant 0 : index
    %393 = vector.load %arg3[%c43, %c0_95, %c0_96] : memref<49x1x256xf32, #tpu.memory_space<vmem>>, vector<1x1x256xf32>
    %394 = vector.shape_cast %393 : vector<1x1x256xf32> to vector<1x256xf32>
    %395 = vector.broadcast %394 : vector<1x256xf32> to vector<4x256xf32>
    %396 = arith.mulf %392, %395 : vector<4x256xf32>
    %397 = vector.extract_strided_slice %10 {offsets = [0, 43], sizes = [4, 1], strides = [1, 1]} : vector<4x49xf32> to vector<4x1xf32>
    %398 = vector.broadcast %397 : vector<4x1xf32> to vector<4x256xf32>
    %399 = arith.mulf %396, %398 : vector<4x256xf32>
    %400 = arith.addf %391, %399 : vector<4x256xf32>
    %c209_i32 = arith.constant 209 : i32
    %401 = tpu.dynamic_rotate %8 by %c209_i32 dim 1 : vector<4x256xf32>, i32 -> vector<4x256xf32>
    %c44 = arith.constant 44 : index
    %c0_97 = arith.constant 0 : index
    %c0_98 = arith.constant 0 : index
    %402 = vector.load %arg3[%c44, %c0_97, %c0_98] : memref<49x1x256xf32, #tpu.memory_space<vmem>>, vector<1x1x256xf32>
    %403 = vector.shape_cast %402 : vector<1x1x256xf32> to vector<1x256xf32>
    %404 = vector.broadcast %403 : vector<1x256xf32> to vector<4x256xf32>
    %405 = arith.mulf %401, %404 : vector<4x256xf32>
    %406 = vector.extract_strided_slice %10 {offsets = [0, 44], sizes = [4, 1], strides = [1, 1]} : vector<4x49xf32> to vector<4x1xf32>
    %407 = vector.broadcast %406 : vector<4x1xf32> to vector<4x256xf32>
    %408 = arith.mulf %405, %407 : vector<4x256xf32>
    %409 = arith.addf %400, %408 : vector<4x256xf32>
    %c208_i32 = arith.constant 208 : i32
    %410 = tpu.dynamic_rotate %8 by %c208_i32 dim 1 : vector<4x256xf32>, i32 -> vector<4x256xf32>
    %c45 = arith.constant 45 : index
    %c0_99 = arith.constant 0 : index
    %c0_100 = arith.constant 0 : index
    %411 = vector.load %arg3[%c45, %c0_99, %c0_100] : memref<49x1x256xf32, #tpu.memory_space<vmem>>, vector<1x1x256xf32>
    %412 = vector.shape_cast %411 : vector<1x1x256xf32> to vector<1x256xf32>
    %413 = vector.broadcast %412 : vector<1x256xf32> to vector<4x256xf32>
    %414 = arith.mulf %410, %413 : vector<4x256xf32>
    %415 = vector.extract_strided_slice %10 {offsets = [0, 45], sizes = [4, 1], strides = [1, 1]} : vector<4x49xf32> to vector<4x1xf32>
    %416 = vector.broadcast %415 : vector<4x1xf32> to vector<4x256xf32>
    %417 = arith.mulf %414, %416 : vector<4x256xf32>
    %418 = arith.addf %409, %417 : vector<4x256xf32>
    %c207_i32 = arith.constant 207 : i32
    %419 = tpu.dynamic_rotate %8 by %c207_i32 dim 1 : vector<4x256xf32>, i32 -> vector<4x256xf32>
    %c46 = arith.constant 46 : index
    %c0_101 = arith.constant 0 : index
    %c0_102 = arith.constant 0 : index
    %420 = vector.load %arg3[%c46, %c0_101, %c0_102] : memref<49x1x256xf32, #tpu.memory_space<vmem>>, vector<1x1x256xf32>
    %421 = vector.shape_cast %420 : vector<1x1x256xf32> to vector<1x256xf32>
    %422 = vector.broadcast %421 : vector<1x256xf32> to vector<4x256xf32>
    %423 = arith.mulf %419, %422 : vector<4x256xf32>
    %424 = vector.extract_strided_slice %10 {offsets = [0, 46], sizes = [4, 1], strides = [1, 1]} : vector<4x49xf32> to vector<4x1xf32>
    %425 = vector.broadcast %424 : vector<4x1xf32> to vector<4x256xf32>
    %426 = arith.mulf %423, %425 : vector<4x256xf32>
    %427 = arith.addf %418, %426 : vector<4x256xf32>
    %c206_i32 = arith.constant 206 : i32
    %428 = tpu.dynamic_rotate %8 by %c206_i32 dim 1 : vector<4x256xf32>, i32 -> vector<4x256xf32>
    %c47 = arith.constant 47 : index
    %c0_103 = arith.constant 0 : index
    %c0_104 = arith.constant 0 : index
    %429 = vector.load %arg3[%c47, %c0_103, %c0_104] : memref<49x1x256xf32, #tpu.memory_space<vmem>>, vector<1x1x256xf32>
    %430 = vector.shape_cast %429 : vector<1x1x256xf32> to vector<1x256xf32>
    %431 = vector.broadcast %430 : vector<1x256xf32> to vector<4x256xf32>
    %432 = arith.mulf %428, %431 : vector<4x256xf32>
    %433 = vector.extract_strided_slice %10 {offsets = [0, 47], sizes = [4, 1], strides = [1, 1]} : vector<4x49xf32> to vector<4x1xf32>
    %434 = vector.broadcast %433 : vector<4x1xf32> to vector<4x256xf32>
    %435 = arith.mulf %432, %434 : vector<4x256xf32>
    %436 = arith.addf %427, %435 : vector<4x256xf32>
    %c205_i32 = arith.constant 205 : i32
    %437 = tpu.dynamic_rotate %8 by %c205_i32 dim 1 : vector<4x256xf32>, i32 -> vector<4x256xf32>
    %c48 = arith.constant 48 : index
    %c0_105 = arith.constant 0 : index
    %c0_106 = arith.constant 0 : index
    %438 = vector.load %arg3[%c48, %c0_105, %c0_106] : memref<49x1x256xf32, #tpu.memory_space<vmem>>, vector<1x1x256xf32>
    %439 = vector.shape_cast %438 : vector<1x1x256xf32> to vector<1x256xf32>
    %440 = vector.broadcast %439 : vector<1x256xf32> to vector<4x256xf32>
    %441 = arith.mulf %437, %440 : vector<4x256xf32>
    %442 = vector.extract_strided_slice %10 {offsets = [0, 48], sizes = [4, 1], strides = [1, 1]} : vector<4x49xf32> to vector<4x1xf32>
    %443 = vector.broadcast %442 : vector<4x1xf32> to vector<4x256xf32>
    %444 = arith.mulf %441, %443 : vector<4x256xf32>
    %445 = arith.addf %436, %444 : vector<4x256xf32>
    %c0_107 = arith.constant 0 : index
    %c0_108 = arith.constant 0 : index
    %c0_109 = arith.constant 0 : index
    %446 = vector.load %arg5[%c0_107, %c0_108, %c0_109] : memref<1x4x1xf32, #tpu.memory_space<vmem>>, vector<1x4x1xf32>
    %447 = vector.shape_cast %446 : vector<1x4x1xf32> to vector<4x1xf32>
    %448 = vector.broadcast %447 : vector<4x1xf32> to vector<4x256xf32>
    %449 = arith.addf %445, %448 : vector<4x256xf32>
    %cst = arith.constant dense<0.000000e+00> : vector<4xf32>
    %450 = vector.multi_reduction <add>, %449, %cst [1] : vector<4x256xf32> to vector<4xf32>
    %451 = vector.shape_cast %450 : vector<4xf32> to vector<4x1xf32>
    %452 = arith.mulf %449, %449 : vector<4x256xf32>
    %cst_110 = arith.constant dense<0.000000e+00> : vector<4xf32>
    %453 = vector.multi_reduction <add>, %452, %cst_110 [1] : vector<4x256xf32> to vector<4xf32>
    %454 = vector.shape_cast %453 : vector<4xf32> to vector<4x1xf32>
    %cst_111 = arith.constant dense<0.000000e+00> : vector<1xf32>
    %455 = vector.multi_reduction <add>, %451, %cst_111 [0] : vector<4x1xf32> to vector<1xf32>
    %456 = vector.shape_cast %455 : vector<1xf32> to vector<1x1xf32>
    %cst_112 = arith.constant 9.765625E-4 : f32
    %457 = vector.broadcast %cst_112 : f32 to vector<1x1xf32>
    %458 = arith.mulf %456, %457 : vector<1x1xf32>
    %cst_113 = arith.constant dense<0.000000e+00> : vector<1xf32>
    %459 = vector.multi_reduction <add>, %454, %cst_113 [0] : vector<4x1xf32> to vector<1xf32>
    %460 = vector.shape_cast %459 : vector<1xf32> to vector<1x1xf32>
    %cst_114 = arith.constant 9.765625E-4 : f32
    %461 = vector.broadcast %cst_114 : f32 to vector<1x1xf32>
    %462 = arith.mulf %460, %461 : vector<1x1xf32>
    %463 = arith.mulf %458, %458 : vector<1x1xf32>
    %464 = arith.subf %462, %463 : vector<1x1xf32>
    %465 = vector.broadcast %458 : vector<1x1xf32> to vector<4x256xf32>
    %466 = arith.subf %449, %465 : vector<4x256xf32>
    %cst_115 = arith.constant 9.99999974E-6 : f32
    %467 = vector.broadcast %cst_115 : f32 to vector<1x1xf32>
    %468 = arith.addf %464, %467 : vector<1x1xf32>
    %469 = math.rsqrt %468 : vector<1x1xf32>
    %470 = vector.broadcast %469 : vector<1x1xf32> to vector<4x256xf32>
    %471 = arith.mulf %466, %470 : vector<4x256xf32>
    %c0_116 = arith.constant 0 : index
    %c0_117 = arith.constant 0 : index
    %c0_118 = arith.constant 0 : index
    %472 = vector.load %arg6[%c0_116, %c0_117, %c0_118] : memref<1x4x1xf32, #tpu.memory_space<vmem>>, vector<1x4x1xf32>
    %473 = vector.shape_cast %472 : vector<1x4x1xf32> to vector<4x1xf32>
    %474 = vector.broadcast %473 : vector<4x1xf32> to vector<4x256xf32>
    %475 = arith.mulf %471, %474 : vector<4x256xf32>
    %c0_119 = arith.constant 0 : index
    %c0_120 = arith.constant 0 : index
    %c0_121 = arith.constant 0 : index
    %476 = vector.load %arg7[%c0_119, %c0_120, %c0_121] : memref<1x4x1xf32, #tpu.memory_space<vmem>>, vector<1x4x1xf32>
    %477 = vector.shape_cast %476 : vector<1x4x1xf32> to vector<4x1xf32>
    %478 = vector.broadcast %477 : vector<4x1xf32> to vector<4x256xf32>
    %479 = arith.addf %475, %478 : vector<4x256xf32>
    %c0_122 = arith.constant 0 : index
    %c0_123 = arith.constant 0 : index
    %c0_124 = arith.constant 0 : index
    %480 = vector.load %arg8[%c0_122, %c0_123, %c0_124] : memref<1x8x4xf32, #tpu.memory_space<vmem>>, vector<1x8x4xf32>
    %481 = vector.shape_cast %480 : vector<1x8x4xf32> to vector<8x4xf32>
    %cst_125 = arith.constant dense<0.000000e+00> : vector<8x256xf32>
    %482 = tpu.matmul %481, %479, %cst_125 {dimension_numbers = #tpu.dot_dimension_numbers<[1], [0], [0], [1], [0, 0, 1, 1], [], []>, precision = #tpu.contract_precision<fp32>} : vector<8x4xf32>, vector<4x256xf32>, vector<8x256xf32> -> vector<8x256xf32>
    %c0_126 = arith.constant 0 : index
    %c0_127 = arith.constant 0 : index
    %c0_128 = arith.constant 0 : index
    %483 = vector.load %arg9[%c0_126, %c0_127, %c0_128] : memref<1x8x1xf32, #tpu.memory_space<vmem>>, vector<1x8x1xf32>
    %484 = vector.shape_cast %483 : vector<1x8x1xf32> to vector<8x1xf32>
    %485 = vector.broadcast %484 : vector<8x1xf32> to vector<8x256xf32>
    %486 = arith.addf %482, %485 : vector<8x256xf32>
    %487 = arith.mulf %486, %486 : vector<8x256xf32>
    %488 = arith.mulf %486, %487 : vector<8x256xf32>
    %cst_129 = arith.constant 4.471500e-02 : f32
    %489 = vector.broadcast %cst_129 : f32 to vector<8x256xf32>
    %490 = arith.mulf %489, %488 : vector<8x256xf32>
    %491 = arith.addf %486, %490 : vector<8x256xf32>
    %cst_130 = arith.constant 0.797884583 : f32
    %492 = vector.broadcast %cst_130 : f32 to vector<8x256xf32>
    %493 = arith.mulf %492, %491 : vector<8x256xf32>
    %494 = math.tanh %493 : vector<8x256xf32>
    %cst_131 = arith.constant 1.000000e+00 : f32
    %495 = vector.broadcast %cst_131 : f32 to vector<8x256xf32>
    %496 = arith.addf %495, %494 : vector<8x256xf32>
    %cst_132 = arith.constant 5.000000e-01 : f32
    %497 = vector.broadcast %cst_132 : f32 to vector<8x256xf32>
    %498 = arith.mulf %497, %496 : vector<8x256xf32>
    %499 = arith.mulf %486, %498 : vector<8x256xf32>
    %c0_133 = arith.constant 0 : index
    %c0_134 = arith.constant 0 : index
    %c0_135 = arith.constant 0 : index
    %500 = vector.load %arg10[%c0_133, %c0_134, %c0_135] : memref<1x4x8xf32, #tpu.memory_space<vmem>>, vector<1x4x8xf32>
    %501 = vector.shape_cast %500 : vector<1x4x8xf32> to vector<4x8xf32>
    %cst_136 = arith.constant dense<0.000000e+00> : vector<4x256xf32>
    %502 = tpu.matmul %501, %499, %cst_136 {dimension_numbers = #tpu.dot_dimension_numbers<[1], [0], [0], [1], [0, 0, 1, 1], [], []>, precision = #tpu.contract_precision<fp32>} : vector<4x8xf32>, vector<8x256xf32>, vector<4x256xf32> -> vector<4x256xf32>
    %c0_137 = arith.constant 0 : index
    %c0_138 = arith.constant 0 : index
    %c0_139 = arith.constant 0 : index
    %503 = vector.load %arg11[%c0_137, %c0_138, %c0_139] : memref<1x4x1xf32, #tpu.memory_space<vmem>>, vector<1x4x1xf32>
    %504 = vector.shape_cast %503 : vector<1x4x1xf32> to vector<4x1xf32>
    %505 = vector.broadcast %504 : vector<4x1xf32> to vector<4x256xf32>
    %506 = arith.addf %502, %505 : vector<4x256xf32>
    %507 = arith.addf %506, %8 : vector<4x256xf32>
    %c0_140 = arith.constant 0 : index
    %c0_141 = arith.constant 0 : index
    %c0_142 = arith.constant 0 : index
    %508 = vector.load %arg13[%c0_140, %c0_141, %c0_142] : memref<1x4x256xf32, #tpu.memory_space<vmem>>, vector<1x4x256xf32>
    %509 = vector.shape_cast %508 : vector<1x4x256xf32> to vector<4x256xf32>
    %510 = vector.shape_cast %507 : vector<4x256xf32> to vector<1x4x256xf32>
    tpu.vector_store %arg13[%c0_140, %c0_141, %c0_142], %510 {strides = array<i32>} : memref<1x4x256xf32, #tpu.memory_space<vmem>>, vector<1x4x256xf32>,
    return
  }
  func.func @transform_0(%arg0: i32, %arg1: i32) -> (i32, i32, i32) {
    %c0_i32 = arith.constant 0 : i32
    %c0_i32_0 = arith.constant 0 : i32
    %c0_i32_1 = arith.constant 0 : i32
    return %arg0, %c0_i32, %c0_i32_0 : i32, i32, i32
  }
  func.func @transform_1(%arg0: i32, %arg1: i32) -> (i32, i32, i32) {
    %c0_i32 = arith.constant 0 : i32
    %c0_i32_0 = arith.constant 0 : i32
    %c0_i32_1 = arith.constant 0 : i32
    %c0_i32_2 = arith.constant 0 : i32
    return %c0_i32, %c0_i32_0, %c0_i32_1 : i32, i32, i32
  }
  func.func @transform_2(%arg0: i32, %arg1: i32) -> (i32, i32, i32) {
    %c0_i32 = arith.constant 0 : i32
    %c0_i32_0 = arith.constant 0 : i32
    %c0_i32_1 = arith.constant 0 : i32
    return %arg1, %c0_i32, %c0_i32_0 : i32, i32, i32
  }
  func.func @transform_3(%arg0: i32, %arg1: i32) -> (i32, i32, i32) {
    %c0_i32 = arith.constant 0 : i32
    %c0_i32_0 = arith.constant 0 : i32
    %c0_i32_1 = arith.constant 0 : i32
    return %arg1, %c0_i32, %c0_i32_0 : i32, i32, i32
  }
  func.func @transform_4(%arg0: i32, %arg1: i32) -> (i32, i32, i32) {
    %c0_i32 = arith.constant 0 : i32
    %c0_i32_0 = arith.constant 0 : i32
    %c0_i32_1 = arith.constant 0 : i32
    return %arg1, %c0_i32, %c0_i32_0 : i32, i32, i32
  }
  func.func @transform_5(%arg0: i32, %arg1: i32) -> (i32, i32, i32) {
    %c0_i32 = arith.constant 0 : i32
    %c0_i32_0 = arith.constant 0 : i32
    %c0_i32_1 = arith.constant 0 : i32
    return %arg1, %c0_i32, %c0_i32_0 : i32, i32, i32
  }
  func.func @transform_6(%arg0: i32, %arg1: i32) -> (i32, i32, i32) {
    %c0_i32 = arith.constant 0 : i32
    %c0_i32_0 = arith.constant 0 : i32
    %c0_i32_1 = arith.constant 0 : i32
    return %arg1, %c0_i32, %c0_i32_0 : i32, i32, i32
  }
  func.func @transform_7(%arg0: i32, %arg1: i32) -> (i32, i32, i32) {
    %c0_i32 = arith.constant 0 : i32
    %c0_i32_0 = arith.constant 0 : i32
    %c0_i32_1 = arith.constant 0 : i32
    return %arg1, %c0_i32, %c0_i32_0 : i32, i32, i32
  }
  func.func @transform_8(%arg0: i32, %arg1: i32) -> (i32, i32, i32) {
    %c0_i32 = arith.constant 0 : i32
    %c0_i32_0 = arith.constant 0 : i32
    %c0_i32_1 = arith.constant 0 : i32
    return %arg1, %c0_i32, %c0_i32_0 : i32, i32, i32
  }
  func.func @transform_9(%arg0: i32, %arg1: i32) -> (i32, i32, i32) {
    %c0_i32 = arith.constant 0 : i32
    %c0_i32_0 = arith.constant 0 : i32
    %c0_i32_1 = arith.constant 0 : i32
    return %arg1, %c0_i32, %c0_i32_0 : i32, i32, i32
  }
  func.func @transform_10(%arg0: i32, %arg1: i32) -> (i32, i32, i32, i32) {
    %c0_i32 = arith.constant 0 : i32
    %c0_i32_0 = arith.constant 0 : i32
    %c0_i32_1 = arith.constant 0 : i32
    return %arg1, %arg0, %c0_i32, %c0_i32_0 : i32, i32, i32, i32
  }
  func.func @transform_11(%arg0: i32, %arg1: i32) -> (i32, i32, i32) {
    %c0_i32 = arith.constant 0 : i32
    %c0_i32_0 = arith.constant 0 : i32
    %c0_i32_1 = arith.constant 0 : i32
    return %arg0, %c0_i32, %c0_i32_0 : i32, i32, i32
  }
}

</mosaic_0001>

<llo_original>
// kernel: diff_model_forward.1
$region0: #{diff_model_forward.1}
  #allocation0 [shape = 'u32[]', space=smem, size = 0x4, offset = 0x4, fixed_abs, tag = 'smem constant byte address 0x4 - core index']
  #allocation1 [shape = 'u32[72,128]{1,0:T(1,128)}', space=vmem, size = 0x9000, scoped, tag = 'internal scratch']
  %s0 = inlined_call_operand.vmem [shape: f32[2,4,256], index: 0, kind: input, shape index: {}]
  %s1 = inlined_call_operand.vmem [shape: f32[49,1,256], index: 1, kind: input, shape index: {}]
  %s2 = inlined_call_operand.vmem [shape: f32[3,4,49], index: 2, kind: input, shape index: {}]
  %s3 = inlined_call_operand.vmem [shape: f32[3,4,1], index: 3, kind: input, shape index: {}]
  %s4 = inlined_call_operand.vmem [shape: f32[3,4,1], index: 4, kind: input, shape index: {}]
  %s5 = inlined_call_operand.vmem [shape: f32[3,4,1], index: 5, kind: input, shape index: {}]
  %s6 = inlined_call_operand.vmem [shape: f32[3,8,4], index: 6, kind: input, shape index: {}]
  %s7 = inlined_call_operand.vmem [shape: f32[3,8,1], index: 7, kind: input, shape index: {}]
  %s8 = inlined_call_operand.vmem [shape: f32[3,4,8], index: 8, kind: input, shape index: {}]
  %s9 = inlined_call_operand.vmem [shape: f32[3,4,1], index: 9, kind: input, shape index: {}]
  %s10 = inlined_call_operand.vmem [shape: f32[3,2,4,1], index: 10, kind: input, shape index: {}]
  %s11 = inlined_call_operand.vmem [shape: f32[2,4,256], index: 11, kind: output, shape index: {}]
  %s12 = sld [smem:[#allocation0]]
  $region81: #{diff_model_forward.1} parent=0
    _
  %s14 = ssub.s32 1, %s12
  %s15 = scalar_select 0, %s14, %s12
  loop: start=0, step=1, limit=8
  $region2: #{diff_model_forward.1} parent=0 // loop_pre_header
    _
  $region3: #{diff_model_forward.1} parent=0 // loop_header
    %s17 = sphi 0, %s21
    %p18 = scmp.ge.s32.totalorder %s17, 8
    %s24 = sphi 0, %s36
    %s25 = sphi 0, %s32
    %s26 = sphi 0, %s24
    %s27 = sphi 0, %s25
    %s28 = sphi 0, %s26
    %s29 = sphi 0, %s27
    %s39 = sphi 0, %s41
    %s42 = sphi 0, %s39
    %s43 = sphi 0, %s42
    %s59 = sphi 0, %s43
    %s63 = sphi 0, %s63
    %s65 = sphi 0, %s63
    %s66 = sphi 0, %s65
    %s80 = sphi 0, %s66
    %s86 = sphi 0, %s88
    %s89 = sphi 0, %s86
    %s90 = sphi 0, %s89
    %s106 = sphi 0, %s90
    %s112 = sphi 0, %s114
    %s115 = sphi 0, %s112
    %s116 = sphi 0, %s115
    %s132 = sphi 0, %s116
    %s138 = sphi 0, %s140
    %s141 = sphi 0, %s138
    %s142 = sphi 0, %s141
    %s158 = sphi 0, %s142
    %s164 = sphi 0, %s166
    %s167 = sphi 0, %s164
    %s168 = sphi 0, %s167
    %s184 = sphi 0, %s168
    %s190 = sphi 0, %s192
    %s193 = sphi 0, %s190
    %s194 = sphi 0, %s193
    %s210 = sphi 0, %s194
    %s216 = sphi 0, %s218
    %s219 = sphi 0, %s216
    %s220 = sphi 0, %s219
    %s236 = sphi 0, %s220
    %s242 = sphi 0, %s244
    %s245 = sphi 0, %s242
    %s246 = sphi 0, %s245
    %s262 = sphi 0, %s246
    %s268 = sphi 0, %s270
    %s271 = sphi 0, %s268
    %s272 = sphi 0, %s271
    %s288 = sphi 0, %s272
    %s296 = sphi 0, %s298
    %s299 = sphi 0, %s296
    %s300 = sphi 0, %s299
    %s316 = sphi 0, %s300
    %s322 = sphi 0, %s324
    %s325 = sphi 0, %s322
    %s326 = sphi 0, %s325
    %s342 = sphi 0, %s326
  $region4: #{diff_model_forward.1} parent=0 // loop_header_branch
    %20 = sbr.rel (%p18) target = $region8
  $region5: #{diff_model_forward.1} parent=0 // loop_body
    %s22 = ssub.s32 %s17, 1
    %s23 = ssub.s32 %s17, 2
    %s30 = sadd.s32 1, %s25
    %p31 = scmp.ge.s32.totalorder %s30, 3
    %s32 = scalar_select %p31, 0, %s30
    %s33 = sadd.s32 1, %s24
    %s34 = scalar_select %p31, %s33, %s24
    %p35 = scmp.ge.s32.totalorder %s34, 2
    %s36 = scalar_select %p35, 0, %s34
    %s37 = ssub.s32 %s24, %s36
    %p38 = scmp.eq.s32.totalorder %s37, 0
    %s40 = sadd.s32 %s39, 1
    %s41 = scalar_select %p38, %s39, %s40
    %p44 = pneg %p38
    %p45 = scmp.eq.s32.totalorder %s17, 5
    %p46 = por %p44, %p45
    %p47 = scmp.ne.s32.totalorder %s39, %s42
    %p48 = scmp.eq.s32.totalorder %s17, 0
    %p49 = por %p47, %p48
    %p50 = scmp.ne.s32.totalorder %s39, %s42
    %p51 = scmp.eq.s32.totalorder %s22, 5
    %p52 = por %p50, %p51
    %p53 = scmp.ne.s32.totalorder %s42, %s43
    %p54 = scmp.eq.s32.totalorder %s22, 0
    %p55 = por %p53, %p54
    %p56 = scmp.ne.s32.totalorder %s42, %s43
    %p57 = scmp.eq.s32.totalorder %s23, 5
    %p58 = por %p56, %p57
    %p60 = scmp.ne.s32.totalorder %s43, %s59
    %p61 = scmp.eq.s32.totalorder %s23, 0
    %p62 = por %p60, %p61
    %s64 = sadd.s32 %s63, 1
    %p67 = scmp.eq.s32.totalorder %s17, 5
    %p68 = scmp.ne.s32.totalorder %s63, %s65
    %p69 = scmp.eq.s32.totalorder %s17, 0
    %p70 = por %p68, %p69
    %p71 = scmp.ne.s32.totalorder %s63, %s65
    %p72 = scmp.eq.s32.totalorder %s22, 5
    %p73 = por %p71, %p72
    %p74 = scmp.ne.s32.totalorder %s65, %s66
    %p75 = scmp.eq.s32.totalorder %s22, 0
    %p76 = por %p74, %p75
    %p77 = scmp.ne.s32.totalorder %s65, %s66
    %p78 = scmp.eq.s32.totalorder %s23, 5
    %p79 = por %p77, %p78
    %p81 = scmp.ne.s32.totalorder %s66, %s80
    %p82 = scmp.eq.s32.totalorder %s23, 0
    %p83 = por %p81, %p82
    %s84 = ssub.s32 %s25, %s32
    %p85 = scmp.eq.s32.totalorder %s84, 0
    %s87 = sadd.s32 %s86, 1
    %s88 = scalar_select %p85, %s86, %s87
    %p91 = pneg %p85
    %p92 = scmp.eq.s32.totalorder %s17, 5
    %p93 = por %p91, %p92
    %p94 = scmp.ne.s32.totalorder %s86, %s89
    %p95 = scmp.eq.s32.totalorder %s17, 0
    %p96 = por %p94, %p95
    %p97 = scmp.ne.s32.totalorder %s86, %s89
    %p98 = scmp.eq.s32.totalorder %s22, 5
    %p99 = por %p97, %p98
    %p100 = scmp.ne.s32.totalorder %s89, %s90
    %p101 = scmp.eq.s32.totalorder %s22, 0
    %p102 = por %p100, %p101
    %p103 = scmp.ne.s32.totalorder %s89, %s90
    %p104 = scmp.eq.s32.totalorder %s23, 5
    %p105 = por %p103, %p104
    %p107 = scmp.ne.s32.totalorder %s90, %s106
    %p108 = scmp.eq.s32.totalorder %s23, 0
    %p109 = por %p107, %p108
    %s110 = ssub.s32 %s25, %s32
    %p111 = scmp.eq.s32.totalorder %s110, 0
    %s113 = sadd.s32 %s112, 1
    %s114 = scalar_select %p111, %s112, %s113
    %p117 = pneg %p111
    %p118 = scmp.eq.s32.totalorder %s17, 5
    %p119 = por %p117, %p118
    %p120 = scmp.ne.s32.totalorder %s112, %s115
    %p121 = scmp.eq.s32.totalorder %s17, 0
    %p122 = por %p120, %p121
    %p123 = scmp.ne.s32.totalorder %s112, %s115
    %p124 = scmp.eq.s32.totalorder %s22, 5
    %p125 = por %p123, %p124
    %p126 = scmp.ne.s32.totalorder %s115, %s116
    %p127 = scmp.eq.s32.totalorder %s22, 0
    %p128 = por %p126, %p127
    %p129 = scmp.ne.s32.totalorder %s115, %s116
    %p130 = scmp.eq.s32.totalorder %s23, 5
    %p131 = por %p129, %p130
    %p133 = scmp.ne.s32.totalorder %s116, %s132
    %p134 = scmp.eq.s32.totalorder %s23, 0
    %p135 = por %p133, %p134
    %s136 = ssub.s32 %s25, %s32
    %p137 = scmp.eq.s32.totalorder %s136, 0
    %s139 = sadd.s32 %s138, 1
    %s140 = scalar_select %p137, %s138, %s139
    %p143 = pneg %p137
    %p144 = scmp.eq.s32.totalorder %s17, 5
    %p145 = por %p143, %p144
    %p146 = scmp.ne.s32.totalorder %s138, %s141
    %p147 = scmp.eq.s32.totalorder %s17, 0
    %p148 = por %p146, %p147
    %p149 = scmp.ne.s32.totalorder %s138, %s141
    %p150 = scmp.eq.s32.totalorder %s22, 5
    %p151 = por %p149, %p150
    %p152 = scmp.ne.s32.totalorder %s141, %s142
    %p153 = scmp.eq.s32.totalorder %s22, 0
    %p154 = por %p152, %p153
    %p155 = scmp.ne.s32.totalorder %s141, %s142
    %p156 = scmp.eq.s32.totalorder %s23, 5
    %p157 = por %p155, %p156
    %p159 = scmp.ne.s32.totalorder %s142, %s158
    %p160 = scmp.eq.s32.totalorder %s23, 0
    %p161 = por %p159, %p160
    %s162 = ssub.s32 %s25, %s32
    %p163 = scmp.eq.s32.totalorder %s162, 0
    %s165 = sadd.s32 %s164, 1
    %s166 = scalar_select %p163, %s164, %s165
    %p169 = pneg %p163
    %p170 = scmp.eq.s32.totalorder %s17, 5
    %p171 = por %p169, %p170
    %p172 = scmp.ne.s32.totalorder %s164, %s167
    %p173 = scmp.eq.s32.totalorder %s17, 0
    %p174 = por %p172, %p173
    %p175 = scmp.ne.s32.totalorder %s164, %s167
    %p176 = scmp.eq.s32.totalorder %s22, 5
    %p177 = por %p175, %p176
    %p178 = scmp.ne.s32.totalorder %s167, %s168
    %p179 = scmp.eq.s32.totalorder %s22, 0
    %p180 = por %p178, %p179
    %p181 = scmp.ne.s32.totalorder %s167, %s168
    %p182 = scmp.eq.s32.totalorder %s23, 5
    %p183 = por %p181, %p182
    %p185 = scmp.ne.s32.totalorder %s168, %s184
    %p186 = scmp.eq.s32.totalorder %s23, 0
    %p187 = por %p185, %p186
    %s188 = ssub.s32 %s25, %s32
    %p189 = scmp.eq.s32.totalorder %s188, 0
    %s191 = sadd.s32 %s190, 1
    %s192 = scalar_select %p189, %s190, %s191
    %p195 = pneg %p189
    %p196 = scmp.eq.s32.totalorder %s17, 5
    %p197 = por %p195, %p196
    %p198 = scmp.ne.s32.totalorder %s190, %s193
    %p199 = scmp.eq.s32.totalorder %s17, 0
    %p200 = por %p198, %p199
    %p201 = scmp.ne.s32.totalorder %s190, %s193
    %p202 = scmp.eq.s32.totalorder %s22, 5
    %p203 = por %p201, %p202
    %p204 = scmp.ne.s32.totalorder %s193, %s194
    %p205 = scmp.eq.s32.totalorder %s22, 0
    %p206 = por %p204, %p205
    %p207 = scmp.ne.s32.totalorder %s193, %s194
    %p208 = scmp.eq.s32.totalorder %s23, 5
    %p209 = por %p207, %p208
    %p211 = scmp.ne.s32.totalorder %s194, %s210
    %p212 = scmp.eq.s32.totalorder %s23, 0
    %p213 = por %p211, %p212
    %s214 = ssub.s32 %s25, %s32
    %p215 = scmp.eq.s32.totalorder %s214, 0
    %s217 = sadd.s32 %s216, 1
    %s218 = scalar_select %p215, %s216, %s217
    %p221 = pneg %p215
    %p222 = scmp.eq.s32.totalorder %s17, 5
    %p223 = por %p221, %p222
    %p224 = scmp.ne.s32.totalorder %s216, %s219
    %p225 = scmp.eq.s32.totalorder %s17, 0
    %p226 = por %p224, %p225
    %p227 = scmp.ne.s32.totalorder %s216, %s219
    %p228 = scmp.eq.s32.totalorder %s22, 5
    %p229 = por %p227, %p228
    %p230 = scmp.ne.s32.totalorder %s219, %s220
    %p231 = scmp.eq.s32.totalorder %s22, 0
    %p232 = por %p230, %p231
    %p233 = scmp.ne.s32.totalorder %s219, %s220
    %p234 = scmp.eq.s32.totalorder %s23, 5
    %p235 = por %p233, %p234
    %p237 = scmp.ne.s32.totalorder %s220, %s236
    %p238 = scmp.eq.s32.totalorder %s23, 0
    %p239 = por %p237, %p238
    %s240 = ssub.s32 %s25, %s32
    %p241 = scmp.eq.s32.totalorder %s240, 0
    %s243 = sadd.s32 %s242, 1
    %s244 = scalar_select %p241, %s242, %s243
    %p247 = pneg %p241
    %p248 = scmp.eq.s32.totalorder %s17, 5
    %p249 = por %p247, %p248
    %p250 = scmp.ne.s32.totalorder %s242, %s245
    %p251 = scmp.eq.s32.totalorder %s17, 0
    %p252 = por %p250, %p251
    %p253 = scmp.ne.s32.totalorder %s242, %s245
    %p254 = scmp.eq.s32.totalorder %s22, 5
    %p255 = por %p253, %p254
    %p256 = scmp.ne.s32.totalorder %s245, %s246
    %p257 = scmp.eq.s32.totalorder %s22, 0
    %p258 = por %p256, %p257
    %p259 = scmp.ne.s32.totalorder %s245, %s246
    %p260 = scmp.eq.s32.totalorder %s23, 5
    %p261 = por %p259, %p260
    %p263 = scmp.ne.s32.totalorder %s246, %s262
    %p264 = scmp.eq.s32.totalorder %s23, 0
    %p265 = por %p263, %p264
    %s266 = ssub.s32 %s25, %s32
    %p267 = scmp.eq.s32.totalorder %s266, 0
    %s269 = sadd.s32 %s268, 1
    %s270 = scalar_select %p267, %s268, %s269
    %p273 = pneg %p267
    %p274 = scmp.eq.s32.totalorder %s17, 5
    %p275 = por %p273, %p274
    %p276 = scmp.ne.s32.totalorder %s268, %s271
    %p277 = scmp.eq.s32.totalorder %s17, 0
    %p278 = por %p276, %p277
    %p279 = scmp.ne.s32.totalorder %s268, %s271
    %p280 = scmp.eq.s32.totalorder %s22, 5
    %p281 = por %p279, %p280
    %p282 = scmp.ne.s32.totalorder %s271, %s272
    %p283 = scmp.eq.s32.totalorder %s22, 0
    %p284 = por %p282, %p283
    %p285 = scmp.ne.s32.totalorder %s271, %s272
    %p286 = scmp.eq.s32.totalorder %s23, 5
    %p287 = por %p285, %p286
    %p289 = scmp.ne.s32.totalorder %s272, %s288
    %p290 = scmp.eq.s32.totalorder %s23, 0
    %p291 = por %p289, %p290
    %s292 = ssub.s32 %s25, %s32
    %s293 = ssub.s32 %s24, %s36
    %s294 = sor.u32 %s292, %s293
    %p295 = scmp.eq.s32.totalorder %s294, 0
    %s297 = sadd.s32 %s296, 1
    %s298 = scalar_select %p295, %s296, %s297
    %p301 = pneg %p295
    %p302 = scmp.eq.s32.totalorder %s17, 5
    %p303 = por %p301, %p302
    %p304 = scmp.ne.s32.totalorder %s296, %s299
    %p305 = scmp.eq.s32.totalorder %s17, 0
    %p306 = por %p304, %p305
    %p307 = scmp.ne.s32.totalorder %s296, %s299
    %p308 = scmp.eq.s32.totalorder %s22, 5
    %p309 = por %p307, %p308
    %p310 = scmp.ne.s32.totalorder %s299, %s300
    %p311 = scmp.eq.s32.totalorder %s22, 0
    %p312 = por %p310, %p311
    %p313 = scmp.ne.s32.totalorder %s299, %s300
    %p314 = scmp.eq.s32.totalorder %s23, 5
    %p315 = por %p313, %p314
    %p317 = scmp.ne.s32.totalorder %s300, %s316
    %p318 = scmp.eq.s32.totalorder %s23, 0
    %p319 = por %p317, %p318
    %s320 = ssub.s32 %s24, %s36
    %p321 = scmp.eq.s32.totalorder %s320, 0
    %s323 = sadd.s32 %s322, 1
    %s324 = scalar_select %p321, %s322, %s323
    %p327 = pneg %p321
    %p328 = scmp.eq.s32.totalorder %s17, 5
    %p329 = por %p327, %p328
    %p330 = scmp.ne.s32.totalorder %s322, %s325
    %p331 = scmp.eq.s32.totalorder %s17, 0
    %p332 = por %p330, %p331
    %p333 = scmp.ne.s32.totalorder %s322, %s325
    %p334 = scmp.eq.s32.totalorder %s22, 5
    %p335 = por %p333, %p334
    %p336 = scmp.ne.s32.totalorder %s325, %s326
    %p337 = scmp.eq.s32.totalorder %s22, 0
    %p338 = por %p336, %p337
    %p339 = scmp.ne.s32.totalorder %s325, %s326
    %p340 = scmp.eq.s32.totalorder %s23, 5
    %p341 = por %p339, %p340
    %p343 = scmp.ne.s32.totalorder %s326, %s342
    %p344 = scmp.eq.s32.totalorder %s23, 0
    %p345 = por %p343, %p344
    %p346 = scmp.le.s32.totalorder 1, %s17
    %p347 = scmp.lt.s32.totalorder %s17, 7
    %p348 = pnand %p346, %p347
    %p349 = pneg %p348
    // Predicated region
    $region9: #{diff_model_forward.1} parent=5 // pred_check
      _
    $region10: #{diff_model_forward.1} parent=5 // pred_check_branch
      %351 = sbr.rel (%p348) target = $region12
    $region11: #{diff_model_forward.1} parent=5 // pred_region
      %s352 = ssub.s32 %s17, 1
      // Predicated region
      $region13: #{diff_model_forward.1} parent=11 // pred_check
        %p353 = pneg %p76
      $region14: #{diff_model_forward.1} parent=11 // pred_check_branch
        %355 = sbr.rel (%p353) target = $region16
      $region15: #{diff_model_forward.1} parent=11 // pred_region
        _
      $region16: #{diff_model_forward.1} parent=11 // pred_fallthru
        _
    $region12: #{diff_model_forward.1} parent=5 // pred_fallthru
      _
    %p356 = scmp.lt.s32.totalorder %s17, 6
    // Predicated region
    $region17: #{diff_model_forward.1} parent=5 // pred_check
      %p357 = pneg %p356
    $region18: #{diff_model_forward.1} parent=5 // pred_check_branch
      %359 = sbr.rel (%p357) target = $region20
    $region19: #{diff_model_forward.1} parent=5 // pred_region
      // Predicated region
      $region21: #{diff_model_forward.1} parent=19 // pred_check
        %p360 = pneg %p49
      $region22: #{diff_model_forward.1} parent=19 // pred_check_branch
        %362 = sbr.rel (%p360) target = $region24
      $region23: #{diff_model_forward.1} parent=19 // pred_region
        %p363 = scmp.lt.s32.totalorder %s24, 1
        %s364 = scalar_select %p363, %s24, 1
        %s365 = smul.addr %s364, 2
        %s366 = smul.addr %s365, 4
        %s367 = scalar_lea.vmem %s0, %s366
      $region24: #{diff_model_forward.1} parent=19 // pred_fallthru
        _
      // Predicated region
      $region25: #{diff_model_forward.1} parent=19 // pred_check
        %p368 = pneg %p96
      $region26: #{diff_model_forward.1} parent=19 // pred_check_branch
        %370 = sbr.rel (%p368) target = $region28
      $region27: #{diff_model_forward.1} parent=19 // pred_region
        %p371 = scmp.lt.s32.totalorder %s25, 2
        %s372 = scalar_select %p371, %s25, 2
        %s373 = smul.addr %s372, 4
        %s374 = scalar_lea.vmem %s2, %s373
      $region28: #{diff_model_forward.1} parent=19 // pred_fallthru
        _
      // Predicated region
      $region29: #{diff_model_forward.1} parent=19 // pred_check
        %p375 = pneg %p122
      $region30: #{diff_model_forward.1} parent=19 // pred_check_branch
        %377 = sbr.rel (%p375) target = $region32
      $region31: #{diff_model_forward.1} parent=19 // pred_region
        %p378 = scmp.lt.s32.totalorder %s25, 2
        %s379 = scalar_select %p378, %s25, 2
        %s380 = smul.addr %s379, 4
        %s381 = scalar_lea.vmem %s3, %s380
      $region32: #{diff_model_forward.1} parent=19 // pred_fallthru
        _
      // Predicated region
      $region33: #{diff_model_forward.1} parent=19 // pred_check
        %p382 = pneg %p148
      $region34: #{diff_model_forward.1} parent=19 // pred_check_branch
        %384 = sbr.rel (%p382) target = $region36
      $region35: #{diff_model_forward.1} parent=19 // pred_region
        %p385 = scmp.lt.s32.totalorder %s25, 2
        %s386 = scalar_select %p385, %s25, 2
        %s387 = smul.addr %s386, 4
        %s388 = scalar_lea.vmem %s4, %s387
      $region36: #{diff_model_forward.1} parent=19 // pred_fallthru
        _
      // Predicated region
      $region37: #{diff_model_forward.1} parent=19 // pred_check
        %p389 = pneg %p174
      $region38: #{diff_model_forward.1} parent=19 // pred_check_branch
        %391 = sbr.rel (%p389) target = $region40
      $region39: #{diff_model_forward.1} parent=19 // pred_region
        %p392 = scmp.lt.s32.totalorder %s25, 2
        %s393 = scalar_select %p392, %s25, 2
        %s394 = smul.addr %s393, 4
        %s395 = scalar_lea.vmem %s5, %s394
      $region40: #{diff_model_forward.1} parent=19 // pred_fallthru
        _
      // Predicated region
      $region41: #{diff_model_forward.1} parent=19 // pred_check
        %p396 = pneg %p200
      $region42: #{diff_model_forward.1} parent=19 // pred_check_branch
        %398 = sbr.rel (%p396) target = $region44
      $region43: #{diff_model_forward.1} parent=19 // pred_region
        %p399 = scmp.lt.s32.totalorder %s25, 2
        %s400 = scalar_select %p399, %s25, 2
        %s401 = smul.addr %s400, 8
        %s402 = scalar_lea.vmem %s6, %s401
      $region44: #{diff_model_forward.1} parent=19 // pred_fallthru
        _
      // Predicated region
      $region45: #{diff_model_forward.1} parent=19 // pred_check
        %p403 = pneg %p226
      $region46: #{diff_model_forward.1} parent=19 // pred_check_branch
        %405 = sbr.rel (%p403) target = $region48
      $region47: #{diff_model_forward.1} parent=19 // pred_region
        %p406 = scmp.lt.s32.totalorder %s25, 2
        %s407 = scalar_select %p406, %s25, 2
        %s408 = smul.addr %s407, 8
        %s409 = scalar_lea.vmem %s7, %s408
      $region48: #{diff_model_forward.1} parent=19 // pred_fallthru
        _
      // Predicated region
      $region49: #{diff_model_forward.1} parent=19 // pred_check
        %p410 = pneg %p252
      $region50: #{diff_model_forward.1} parent=19 // pred_check_branch
        %412 = sbr.rel (%p410) target = $region52
      $region51: #{diff_model_forward.1} parent=19 // pred_region
        %p413 = scmp.lt.s32.totalorder %s25, 2
        %s414 = scalar_select %p413, %s25, 2
        %s415 = smul.addr %s414, 4
        %s416 = scalar_lea.vmem %s8, %s415
      $region52: #{diff_model_forward.1} parent=19 // pred_fallthru
        _
      // Predicated region
      $region53: #{diff_model_forward.1} parent=19 // pred_check
        %p417 = pneg %p278
      $region54: #{diff_model_forward.1} parent=19 // pred_check_branch
        %419 = sbr.rel (%p417) target = $region56
      $region55: #{diff_model_forward.1} parent=19 // pred_region
        %p420 = scmp.lt.s32.totalorder %s25, 2
        %s421 = scalar_select %p420, %s25, 2
        %s422 = smul.addr %s421, 4
        %s423 = scalar_lea.vmem %s9, %s422
      $region56: #{diff_model_forward.1} parent=19 // pred_fallthru
        _
      // Predicated region
      $region57: #{diff_model_forward.1} parent=19 // pred_check
        %p424 = pneg %p306
      $region58: #{diff_model_forward.1} parent=19 // pred_check_branch
        %426 = sbr.rel (%p424) target = $region60
      $region59: #{diff_model_forward.1} parent=19 // pred_region
        %p427 = scmp.lt.s32.totalorder %s25, 2
        %s428 = scalar_select %p427, %s25, 2
        %p429 = scmp.lt.s32.totalorder %s24, 1
        %s430 = scalar_select %p429, %s24, 1
        %s431 = smul.addr %s428, 2
        %s432 = sadd.s32 %s430, %s431
        %s433 = smul.addr %s432, 4
        %s434 = scalar_lea.vmem %s10, %s433
      $region60: #{diff_model_forward.1} parent=19 // pred_fallthru
        _
    $region20: #{diff_model_forward.1} parent=5 // pred_fallthru
      _
    %p435 = scmp.le.s32.totalorder 1, %s17
    %p436 = scmp.lt.s32.totalorder %s17, 7
    %p437 = pnand %p435, %p436
    %p438 = pneg %p437
    // Predicated region
    $region61: #{diff_model_forward.1} parent=5 // pred_check
      _
    $region62: #{diff_model_forward.1} parent=5 // pred_check_branch
      %440 = sbr.rel (%p437) target = $region64
    $region63: #{diff_model_forward.1} parent=5 // pred_region
      %s441 = ssub.s32 %s17, 1
      %p442 = scmp.lt.s32.totalorder %s26, 1
      %s443 = scalar_select %p442, %s26, 1
      %s444 = smul.addr %s443, 2
      %s445 = smul.addr %s444, 4
      %s446 = scalar_lea.vmem %s0, %s445
      %p447 = pneg %p55
      %p448 = pneg %p52
      %p449 = pneg %p76
      %p450 = pneg %p73
      %p451 = scmp.lt.s32.totalorder %s27, 2
      %s452 = scalar_select %p451, %s27, 2
      %s453 = smul.addr %s452, 4
      %s454 = scalar_lea.vmem %s2, %s453
      %p455 = pneg %p102
      %p456 = pneg %p99
      %p457 = scmp.lt.s32.totalorder %s27, 2
      %s458 = scalar_select %p457, %s27, 2
      %s459 = smul.addr %s458, 4
      %s460 = scalar_lea.vmem %s3, %s459
      %p461 = pneg %p128
      %p462 = pneg %p125
      %p463 = scmp.lt.s32.totalorder %s27, 2
      %s464 = scalar_select %p463, %s27, 2
      %s465 = smul.addr %s464, 4
      %s466 = scalar_lea.vmem %s4, %s465
      %p467 = pneg %p154
      %p468 = pneg %p151
      %p469 = scmp.lt.s32.totalorder %s27, 2
      %s470 = scalar_select %p469, %s27, 2
      %s471 = smul.addr %s470, 4
      %s472 = scalar_lea.vmem %s5, %s471
      %p473 = pneg %p180
      %p474 = pneg %p177
      %p475 = scmp.lt.s32.totalorder %s27, 2
      %s476 = scalar_select %p475, %s27, 2
      %s477 = smul.addr %s476, 8
      %s478 = scalar_lea.vmem %s6, %s477
      %p479 = pneg %p206
      %p480 = pneg %p203
      %p481 = scmp.lt.s32.totalorder %s27, 2
      %s482 = scalar_select %p481, %s27, 2
      %s483 = smul.addr %s482, 8
      %s484 = scalar_lea.vmem %s7, %s483
      %p485 = pneg %p232
      %p486 = pneg %p229
      %p487 = scmp.lt.s32.totalorder %s27, 2
      %s488 = scalar_select %p487, %s27, 2
      %s489 = smul.addr %s488, 4
      %s490 = scalar_lea.vmem %s8, %s489
      %p491 = pneg %p258
      %p492 = pneg %p255
      %p493 = scmp.lt.s32.totalorder %s27, 2
      %s494 = scalar_select %p493, %s27, 2
      %s495 = smul.addr %s494, 4
      %s496 = scalar_lea.vmem %s9, %s495
      %p497 = pneg %p284
      %p498 = pneg %p281
      %p499 = scmp.lt.s32.totalorder %s27, 2
      %s500 = scalar_select %p499, %s27, 2
      %p501 = scmp.lt.s32.totalorder %s26, 1
      %s502 = scalar_select %p501, %s26, 1
      %s503 = smul.addr %s500, 2
      %s504 = sadd.s32 %s502, %s503
      %s505 = smul.addr %s504, 4
      %s506 = scalar_lea.vmem %s10, %s505
      %p507 = pneg %p312
      %p508 = pneg %p309
      %p509 = pneg %p338
      %p510 = pneg %p335
      %p511 = scmp.lt.s32.totalorder %s26, 1
      %s512 = scalar_select %p511, %s26, 1
      %s513 = smul.addr %s512, 2
      %s514 = smul.addr %s513, 4
      %s515 = scalar_lea.vmem %s11, %s514
      %p516 = scmp.lt.s32.totalorder %s26, 1
      %s517 = scalar_select %p516, %s26, 1
      %s518 = smul.addr %s517, 2
      %s519 = smul.addr %s518, 4
      %s520 = scalar_lea.vmem %s0, %s519
      %p521 = scmp.lt.s32.totalorder %s27, 2
      %s522 = scalar_select %p521, %s27, 2
      %s523 = smul.addr %s522, 4
      %s524 = scalar_lea.vmem %s2, %s523
      %p525 = scmp.lt.s32.totalorder %s27, 2
      %s526 = scalar_select %p525, %s27, 2
      %s527 = smul.addr %s526, 4
      %s528 = scalar_lea.vmem %s3, %s527
      %p529 = scmp.lt.s32.totalorder %s27, 2
      %s530 = scalar_select %p529, %s27, 2
      %s531 = smul.addr %s530, 4
      %s532 = scalar_lea.vmem %s4, %s531
      %p533 = scmp.lt.s32.totalorder %s27, 2
      %s534 = scalar_select %p533, %s27, 2
      %s535 = smul.addr %s534, 4
      %s536 = scalar_lea.vmem %s5, %s535
      %p537 = scmp.lt.s32.totalorder %s27, 2
      %s538 = scalar_select %p537, %s27, 2
      %s539 = smul.addr %s538, 8
      %s540 = scalar_lea.vmem %s6, %s539
      %p541 = scmp.lt.s32.totalorder %s27, 2
      %s542 = scalar_select %p541, %s27, 2
      %s543 = smul.addr %s542, 8
      %s544 = scalar_lea.vmem %s7, %s543
      %p545 = scmp.lt.s32.totalorder %s27, 2
      %s546 = scalar_select %p545, %s27, 2
      %s547 = smul.addr %s546, 4
      %s548 = scalar_lea.vmem %s8, %s547
      %p549 = scmp.lt.s32.totalorder %s27, 2
      %s550 = scalar_select %p549, %s27, 2
      %s551 = smul.addr %s550, 4
      %s552 = scalar_lea.vmem %s9, %s551
      %p553 = scmp.lt.s32.totalorder %s27, 2
      %s554 = scalar_select %p553, %s27, 2
      %p555 = scmp.lt.s32.totalorder %s26, 1
      %s556 = scalar_select %p555, %s26, 1
      %s557 = smul.addr %s554, 2
      %s558 = sadd.s32 %s556, %s557
      %s559 = smul.addr %s558, 4
      %s560 = scalar_lea.vmem %s10, %s559
      %p561 = scmp.lt.s32.totalorder %s26, 1
      %s562 = scalar_select %p561, %s26, 1
      %s563 = smul.addr %s562, 2
      %s564 = smul.addr %s563, 4
      %s565 = scalar_lea.vmem %s11, %s564
      %p566 = scmp.eq.s32.totalorder %s27, 0
      // Predicated region
      $region65: #{diff_model_forward.1} parent=63 // pred_check
        %p567 = pneg %p566
      $region66: #{diff_model_forward.1} parent=63 // pred_check_branch
        %569 = sbr.rel (%p567) target = $region68
      $region67: #{diff_model_forward.1} parent=63 // pred_region
        %v570 = vld [vmem:[%s520] sm:$0xff]
        %571 = vst [vmem:[%s565] sm:$0xff] %v570
      $region68: #{diff_model_forward.1} parent=63 // pred_fallthru
        _
      %v572 = vld [vmem:[%s565] sm:$0xff]
      %v573 = vld [vmem:[%s560] sm:$0xf]
      %575 = vset.pattern.permute.xlu0 0
      %576 = vperm.xlu0 %575, %v573
      %v577 = vpop.permute.xlu0 %576
      %v579 = vunpack.c.l.s4 839922192
      %v580 = vunpack.c.0.s8 %v579
      %v581 = vperm.slane %v577, %v580
      %v583 = vadd.f32 %v572, %v581
      %v584 = vld [vmem:[%s524] sm:$0xf]
      %586 = vset.pattern.permute.xlu0 24
      %587 = vperm.xlu0 %586, %v584
      %v588 = vpop.permute.xlu0 %587
      %v590 = vunpack.c.l.s4 839922192
      %v591 = vunpack.c.0.s8 %v590
      %v592 = vperm.slane %v588, %v591
      %v594 = vmul.f32 %v583, %v592
      %596 = vst [vmem:[#allocation1] ss:$2 sm:$0xff] %v583
      %v597 = vld.sshfl [vmem:[#allocation1] sm:$0xff pattern:$0x75316420]
      %v598 = vld.sshfl [vmem:[#allocation1 + $0x8] sm:$0xff pattern:$0x75316420]
      %601 = vrot.lane.b32.xlu0 %v597, 51
      %v602 = vpop.permute.xlu0 %601
      %603 = vrot.lane.b32.xlu0 %v598, 51
      %v604 = vpop.permute.xlu0 %603
      %v605 = vlaneseq
      %v606 = vand.u32 %v605, 127
      %vm607 = vcmp.lt.s32.totalorder %v606, 51
      %v608 = vsel %vm607, %v602, %v604
      %v609 = vsel %vm607, %v604, %v602
      %v610 = vld [vmem:[%s1] sm:$0x3]
      %v612 = vperm.slane %v610, 0
      %v613 = vperm.slane %v610, 1
      %v616 = vmul.f32 %v609, %v612
      %v617 = vmul.f32 %v608, %v613
      %618 = vset.pattern.permute.xlu0 0
      %619 = vperm.xlu0 %618, %v584
      %v620 = vpop.permute.xlu0 %619
      %v622 = vmul.f32 %v616, %v620
      %v623 = vmul.f32 %v617, %v620
      %v626 = vrot.slane %v623, 4
      %vm627 = vcmask 1043456
      %v628 = vsel %vm627, %v622, %v626
      %v630 = vadd.f32 %v594, %v628
      %631 = vst [vmem:[#allocation1] ss:$2 sm:$0xff] %v583
      %v632 = vld.sshfl [vmem:[#allocation1] sm:$0xff pattern:$0x75316420]
      %v633 = vld.sshfl [vmem:[#allocation1 + $0x8] sm:$0xff pattern:$0x75316420]
      %636 = vrot.lane.b32.xlu0 %v632, 50
      %v637 = vpop.permute.xlu0 %636
      %638 = vrot.lane.b32.xlu0 %v633, 50
      %v639 = vpop.permute.xlu0 %638
      %vm640 = vcmp.lt.s32.totalorder %v606, 50
      %v641 = vsel %vm640, %v637, %v639
      %v642 = vsel %vm640, %v639, %v637
      %s643 = scalar_lea.vmem %s1, 2
      %v644 = vld [vmem:[%s643] sm:$0x3]
      %v646 = vperm.slane %v644, 0
      %v647 = vperm.slane %v644, 1
      %v650 = vmul.f32 %v642, %v646
      %v651 = vmul.f32 %v641, %v647
      %652 = vset.pattern.permute.xlu0 1
      %653 = vperm.xlu0 %652, %v584
      %v654 = vpop.permute.xlu0 %653
      %v656 = vmul.f32 %v650, %v654
      %v657 = vmul.f32 %v651, %v654
      %v660 = vrot.slane %v657, 4
      %v661 = vsel %vm627, %v656, %v660
      %v663 = vadd.f32 %v630, %v661
      %664 = vst [vmem:[#allocation1] ss:$2 sm:$0xff] %v583
      %v665 = vld.sshfl [vmem:[#allocation1] sm:$0xff pattern:$0x75316420]
      %v666 = vld.sshfl [vmem:[#allocation1 + $0x8] sm:$0xff pattern:$0x75316420]
      %669 = vrot.lane.b32.xlu0 %v665, 49
      %v670 = vpop.permute.xlu0 %669
      %671 = vrot.lane.b32.xlu0 %v666, 49
      %v672 = vpop.permute.xlu0 %671
      %vm673 = vcmp.lt.s32.totalorder %v606, 49
      %v674 = vsel %vm673, %v670, %v672
      %v675 = vsel %vm673, %v672, %v670
      %s676 = scalar_lea.vmem %s1, 4
      %v677 = vld [vmem:[%s676] sm:$0x3]
      %v679 = vperm.slane %v677, 0
      %v680 = vperm.slane %v677, 1
      %v683 = vmul.f32 %v675, %v679
      %v684 = vmul.f32 %v674, %v680
      %685 = vset.pattern.permute.xlu0 2
      %686 = vperm.xlu0 %685, %v584
      %v687 = vpop.permute.xlu0 %686
      %v689 = vmul.f32 %v683, %v687
      %v690 = vmul.f32 %v684, %v687
      %v693 = vrot.slane %v690, 4
      %v694 = vsel %vm627, %v689, %v693
      %v696 = vadd.f32 %v663, %v694
      %697 = vst [vmem:[#allocation1] ss:$2 sm:$0xff] %v583
      %v698 = vld.sshfl [vmem:[#allocation1] sm:$0xff pattern:$0x75316420]
      %v699 = vld.sshfl [vmem:[#allocation1 + $0x8] sm:$0xff pattern:$0x75316420]
      %702 = vrot.lane.b32.xlu0 %v698, 48
      %v703 = vpop.permute.xlu0 %702
      %704 = vrot.lane.b32.xlu0 %v699, 48
      %v705 = vpop.permute.xlu0 %704
      %vm706 = vcmp.lt.s32.totalorder %v606, 48
      %v707 = vsel %vm706, %v703, %v705
      %v708 = vsel %vm706, %v705, %v703
      %s709 = scalar_lea.vmem %s1, 6
      %v710 = vld [vmem:[%s709] sm:$0x3]
      %v712 = vperm.slane %v710, 0
      %v713 = vperm.slane %v710, 1
      %v716 = vmul.f32 %v708, %v712
      %v717 = vmul.f32 %v707, %v713
      %718 = vset.pattern.permute.xlu0 3
      %719 = vperm.xlu0 %718, %v584
      %v720 = vpop.permute.xlu0 %719
      %v722 = vmul.f32 %v716, %v720
      %v723 = vmul.f32 %v717, %v720
      %v726 = vrot.slane %v723, 4
      %v727 = vsel %vm627, %v722, %v726
      %v729 = vadd.f32 %v696, %v727
      %730 = vst [vmem:[#allocation1] ss:$2 sm:$0xff] %v583
      %v731 = vld.sshfl [vmem:[#allocation1] sm:$0xff pattern:$0x75316420]
      %v732 = vld.sshfl [vmem:[#allocation1 + $0x8] sm:$0xff pattern:$0x75316420]
      %735 = vrot.lane.b32.xlu0 %v731, 47
      %v736 = vpop.permute.xlu0 %735
      %737 = vrot.lane.b32.xlu0 %v732, 47
      %v738 = vpop.permute.xlu0 %737
      %vm739 = vcmp.lt.s32.totalorder %v606, 47
      %v740 = vsel %vm739, %v736, %v738
      %v741 = vsel %vm739, %v738, %v736
      %s742 = scalar_lea.vmem %s1, 8
      %v743 = vld [vmem:[%s742] sm:$0x3]
      %v745 = vperm.slane %v743, 0
      %v746 = vperm.slane %v743, 1
      %v749 = vmul.f32 %v741, %v745
      %v750 = vmul.f32 %v740, %v746
      %751 = vset.pattern.permute.xlu0 4
      %752 = vperm.xlu0 %751, %v584
      %v753 = vpop.permute.xlu0 %752
      %v755 = vmul.f32 %v749, %v753
      %v756 = vmul.f32 %v750, %v753
      %v759 = vrot.slane %v756, 4
      %v760 = vsel %vm627, %v755, %v759
      %v762 = vadd.f32 %v729, %v760
      %763 = vst [vmem:[#allocation1] ss:$2 sm:$0xff] %v583
      %v764 = vld.sshfl [vmem:[#allocation1] sm:$0xff pattern:$0x75316420]
      %v765 = vld.sshfl [vmem:[#allocation1 + $0x8] sm:$0xff pattern:$0x75316420]
      %768 = vrot.lane.b32.xlu0 %v764, 46
      %v769 = vpop.permute.xlu0 %768
      %770 = vrot.lane.b32.xlu0 %v765, 46
      %v771 = vpop.permute.xlu0 %770
      %vm772 = vcmp.lt.s32.totalorder %v606, 46
      %v773 = vsel %vm772, %v769, %v771
      %v774 = vsel %vm772, %v771, %v769
      %s775 = scalar_lea.vmem %s1, 10
      %v776 = vld [vmem:[%s775] sm:$0x3]
      %v778 = vperm.slane %v776, 0
      %v779 = vperm.slane %v776, 1
      %v782 = vmul.f32 %v774, %v778
      %v783 = vmul.f32 %v773, %v779
      %784 = vset.pattern.permute.xlu0 5
      %785 = vperm.xlu0 %784, %v584
      %v786 = vpop.permute.xlu0 %785
      %v788 = vmul.f32 %v782, %v786
      %v789 = vmul.f32 %v783, %v786
      %v792 = vrot.slane %v789, 4
      %v793 = vsel %vm627, %v788, %v792
      %v795 = vadd.f32 %v762, %v793
      %796 = vst [vmem:[#allocation1] ss:$2 sm:$0xff] %v583
      %v797 = vld.sshfl [vmem:[#allocation1] sm:$0xff pattern:$0x75316420]
      %v798 = vld.sshfl [vmem:[#allocation1 + $0x8] sm:$0xff pattern:$0x75316420]
      %801 = vrot.lane.b32.xlu0 %v797, 45
      %v802 = vpop.permute.xlu0 %801
      %803 = vrot.lane.b32.xlu0 %v798, 45
      %v804 = vpop.permute.xlu0 %803
      %vm805 = vcmp.lt.s32.totalorder %v606, 45
      %v806 = vsel %vm805, %v802, %v804
      %v807 = vsel %vm805, %v804, %v802
      %s808 = scalar_lea.vmem %s1, 12
      %v809 = vld [vmem:[%s808] sm:$0x3]
      %v811 = vperm.slane %v809, 0
      %v812 = vperm.slane %v809, 1
      %v815 = vmul.f32 %v807, %v811
      %v816 = vmul.f32 %v806, %v812
      %817 = vset.pattern.permute.xlu0 6
      %818 = vperm.xlu0 %817, %v584
      %v819 = vpop.permute.xlu0 %818
      %v821 = vmul.f32 %v815, %v819
      %v822 = vmul.f32 %v816, %v819
      %v825 = vrot.slane %v822, 4
      %v826 = vsel %vm627, %v821, %v825
      %v828 = vadd.f32 %v795, %v826
      %829 = vst [vmem:[#allocation1] ss:$2 sm:$0xff] %v583
      %v830 = vld.sshfl [vmem:[#allocation1] sm:$0xff pattern:$0x75316420]
      %v831 = vld.sshfl [vmem:[#allocation1 + $0x8] sm:$0xff pattern:$0x75316420]
      %834 = vrot.lane.b32.xlu0 %v830, 35
      %v835 = vpop.permute.xlu0 %834
      %836 = vrot.lane.b32.xlu0 %v831, 35
      %v837 = vpop.permute.xlu0 %836
      %vm838 = vcmp.lt.s32.totalorder %v606, 35
      %v839 = vsel %vm838, %v835, %v837
      %v840 = vsel %vm838, %v837, %v835
      %s841 = scalar_lea.vmem %s1, 14
      %v842 = vld [vmem:[%s841] sm:$0x3]
      %v844 = vperm.slane %v842, 0
      %v845 = vperm.slane %v842, 1
      %v848 = vmul.f32 %v840, %v844
      %v849 = vmul.f32 %v839, %v845
      %850 = vset.pattern.permute.xlu0 7
      %851 = vperm.xlu0 %850, %v584
      %v852 = vpop.permute.xlu0 %851
      %v854 = vmul.f32 %v848, %v852
      %v855 = vmul.f32 %v849, %v852
      %v858 = vrot.slane %v855, 4
      %v859 = vsel %vm627, %v854, %v858
      %v861 = vadd.f32 %v828, %v859
      %862 = vst [vmem:[#allocation1] ss:$2 sm:$0xff] %v583
      %v863 = vld.sshfl [vmem:[#allocation1] sm:$0xff pattern:$0x75316420]
      %v864 = vld.sshfl [vmem:[#allocation1 + $0x8] sm:$0xff pattern:$0x75316420]
      %867 = vrot.lane.b32.xlu0 %v863, 34
      %v868 = vpop.permute.xlu0 %867
      %869 = vrot.lane.b32.xlu0 %v864, 34
      %v870 = vpop.permute.xlu0 %869
      %vm871 = vcmp.lt.s32.totalorder %v606, 34
      %v872 = vsel %vm871, %v868, %v870
      %v873 = vsel %vm871, %v870, %v868
      %s874 = scalar_lea.vmem %s1, 16
      %v875 = vld [vmem:[%s874] sm:$0x3]
      %v877 = vperm.slane %v875, 0
      %v878 = vperm.slane %v875, 1
      %v881 = vmul.f32 %v873, %v877
      %v882 = vmul.f32 %v872, %v878
      %883 = vset.pattern.permute.xlu0 8
      %884 = vperm.xlu0 %883, %v584
      %v885 = vpop.permute.xlu0 %884
      %v887 = vmul.f32 %v881, %v885
      %v888 = vmul.f32 %v882, %v885
      %v891 = vrot.slane %v888, 4
      %v892 = vsel %vm627, %v887, %v891
      %v894 = vadd.f32 %v861, %v892
      %895 = vst [vmem:[#allocation1] ss:$2 sm:$0xff] %v583
      %v896 = vld.sshfl [vmem:[#allocation1] sm:$0xff pattern:$0x75316420]
      %v897 = vld.sshfl [vmem:[#allocation1 + $0x8] sm:$0xff pattern:$0x75316420]
      %900 = vrot.lane.b32.xlu0 %v896, 33
      %v901 = vpop.permute.xlu0 %900
      %902 = vrot.lane.b32.xlu0 %v897, 33
      %v903 = vpop.permute.xlu0 %902
      %vm904 = vcmp.lt.s32.totalorder %v606, 33
      %v905 = vsel %vm904, %v901, %v903
      %v906 = vsel %vm904, %v903, %v901
      %s907 = scalar_lea.vmem %s1, 18
      %v908 = vld [vmem:[%s907] sm:$0x3]
      %v910 = vperm.slane %v908, 0
      %v911 = vperm.slane %v908, 1
      %v914 = vmul.f32 %v906, %v910
      %v915 = vmul.f32 %v905, %v911
      %916 = vset.pattern.permute.xlu0 9
      %917 = vperm.xlu0 %916, %v584
      %v918 = vpop.permute.xlu0 %917
      %v920 = vmul.f32 %v914, %v918
      %v921 = vmul.f32 %v915, %v918
      %v924 = vrot.slane %v921, 4
      %v925 = vsel %vm627, %v920, %v924
      %v927 = vadd.f32 %v894, %v925
      %928 = vst [vmem:[#allocation1] ss:$2 sm:$0xff] %v583
      %v929 = vld.sshfl [vmem:[#allocation1] sm:$0xff pattern:$0x75316420]
      %v930 = vld.sshfl [vmem:[#allocation1 + $0x8] sm:$0xff pattern:$0x75316420]
      %933 = vrot.lane.b32.xlu0 %v929, 32
      %v934 = vpop.permute.xlu0 %933
      %935 = vrot.lane.b32.xlu0 %v930, 32
      %v936 = vpop.permute.xlu0 %935
      %vm937 = vcmp.lt.s32.totalorder %v606, 32
      %v938 = vsel %vm937, %v934, %v936
      %v939 = vsel %vm937, %v936, %v934
      %s940 = scalar_lea.vmem %s1, 20
      %v941 = vld [vmem:[%s940] sm:$0x3]
      %v943 = vperm.slane %v941, 0
      %v944 = vperm.slane %v941, 1
      %v947 = vmul.f32 %v939, %v943
      %v948 = vmul.f32 %v938, %v944
      %949 = vset.pattern.permute.xlu0 10
      %950 = vperm.xlu0 %949, %v584
      %v951 = vpop.permute.xlu0 %950
      %v953 = vmul.f32 %v947, %v951
      %v954 = vmul.f32 %v948, %v951
      %v957 = vrot.slane %v954, 4
      %v958 = vsel %vm627, %v953, %v957
      %v960 = vadd.f32 %v927, %v958
      %961 = vst [vmem:[#allocation1] ss:$2 sm:$0xff] %v583
      %v962 = vld.sshfl [vmem:[#allocation1] sm:$0xff pattern:$0x75316420]
      %v963 = vld.sshfl [vmem:[#allocation1 + $0x8] sm:$0xff pattern:$0x75316420]
      %966 = vrot.lane.b32.xlu0 %v962, 31
      %v967 = vpop.permute.xlu0 %966
      %968 = vrot.lane.b32.xlu0 %v963, 31
      %v969 = vpop.permute.xlu0 %968
      %vm970 = vcmp.lt.s32.totalorder %v606, 31
      %v971 = vsel %vm970, %v967, %v969
      %v972 = vsel %vm970, %v969, %v967
      %s973 = scalar_lea.vmem %s1, 22
      %v974 = vld [vmem:[%s973] sm:$0x3]
      %v976 = vperm.slane %v974, 0
      %v977 = vperm.slane %v974, 1
      %v980 = vmul.f32 %v972, %v976
      %v981 = vmul.f32 %v971, %v977
      %982 = vset.pattern.permute.xlu0 11
      %983 = vperm.xlu0 %982, %v584
      %v984 = vpop.permute.xlu0 %983
      %v986 = vmul.f32 %v980, %v984
      %v987 = vmul.f32 %v981, %v984
      %v990 = vrot.slane %v987, 4
      %v991 = vsel %vm627, %v986, %v990
      %v993 = vadd.f32 %v960, %v991
      %994 = vst [vmem:[#allocation1] ss:$2 sm:$0xff] %v583
      %v995 = vld.sshfl [vmem:[#allocation1] sm:$0xff pattern:$0x75316420]
      %v996 = vld.sshfl [vmem:[#allocation1 + $0x8] sm:$0xff pattern:$0x75316420]
      %999 = vrot.lane.b32.xlu0 %v995, 30
      %v1000 = vpop.permute.xlu0 %999
      %1001 = vrot.lane.b32.xlu0 %v996, 30
      %v1002 = vpop.permute.xlu0 %1001
      %vm1003 = vcmp.lt.s32.totalorder %v606, 30
      %v1004 = vsel %vm1003, %v1000, %v1002
      %v1005 = vsel %vm1003, %v1002, %v1000
      %s1006 = scalar_lea.vmem %s1, 24
      %v1007 = vld [vmem:[%s1006] sm:$0x3]
      %v1009 = vperm.slane %v1007, 0
      %v1010 = vperm.slane %v1007, 1
      %v1013 = vmul.f32 %v1005, %v1009
      %v1014 = vmul.f32 %v1004, %v1010
      %1015 = vset.pattern.permute.xlu0 12
      %1016 = vperm.xlu0 %1015, %v584
      %v1017 = vpop.permute.xlu0 %1016
      %v1019 = vmul.f32 %v1013, %v1017
      %v1020 = vmul.f32 %v1014, %v1017
      %v1023 = vrot.slane %v1020, 4
      %v1024 = vsel %vm627, %v1019, %v1023
      %v1026 = vadd.f32 %v993, %v1024
      %1027 = vst [vmem:[#allocation1] ss:$2 sm:$0xff] %v583
      %v1028 = vld.sshfl [vmem:[#allocation1] sm:$0xff pattern:$0x75316420]
      %v1029 = vld.sshfl [vmem:[#allocation1 + $0x8] sm:$0xff pattern:$0x75316420]
      %1032 = vrot.lane.b32.xlu0 %v1028, 29
      %v1033 = vpop.permute.xlu0 %1032
      %1034 = vrot.lane.b32.xlu0 %v1029, 29
      %v1035 = vpop.permute.xlu0 %1034
      %vm1036 = vcmp.lt.s32.totalorder %v606, 29
      %v1037 = vsel %vm1036, %v1033, %v1035
      %v1038 = vsel %vm1036, %v1035, %v1033
      %s1039 = scalar_lea.vmem %s1, 26
      %v1040 = vld [vmem:[%s1039] sm:$0x3]
      %v1042 = vperm.slane %v1040, 0
      %v1043 = vperm.slane %v1040, 1
      %v1046 = vmul.f32 %v1038, %v1042
      %v1047 = vmul.f32 %v1037, %v1043
      %1048 = vset.pattern.permute.xlu0 13
      %1049 = vperm.xlu0 %1048, %v584
      %v1050 = vpop.permute.xlu0 %1049
      %v1052 = vmul.f32 %v1046, %v1050
      %v1053 = vmul.f32 %v1047, %v1050
      %v1056 = vrot.slane %v1053, 4
      %v1057 = vsel %vm627, %v1052, %v1056
      %v1059 = vadd.f32 %v1026, %v1057
      %1060 = vst [vmem:[#allocation1] ss:$2 sm:$0xff] %v583
      %v1061 = vld.sshfl [vmem:[#allocation1] sm:$0xff pattern:$0x75316420]
      %v1062 = vld.sshfl [vmem:[#allocation1 + $0x8] sm:$0xff pattern:$0x75316420]
      %1065 = vrot.lane.b32.xlu0 %v1061, 19
      %v1066 = vpop.permute.xlu0 %1065
      %1067 = vrot.lane.b32.xlu0 %v1062, 19
      %v1068 = vpop.permute.xlu0 %1067
      %vm1069 = vcmp.lt.s32.totalorder %v606, 19
      %v1070 = vsel %vm1069, %v1066, %v1068
      %v1071 = vsel %vm1069, %v1068, %v1066
      %s1072 = scalar_lea.vmem %s1, 28
      %v1073 = vld [vmem:[%s1072] sm:$0x3]
      %v1075 = vperm.slane %v1073, 0
      %v1076 = vperm.slane %v1073, 1
      %v1079 = vmul.f32 %v1071, %v1075
      %v1080 = vmul.f32 %v1070, %v1076
      %1081 = vset.pattern.permute.xlu0 14
      %1082 = vperm.xlu0 %1081, %v584
      %v1083 = vpop.permute.xlu0 %1082
      %v1085 = vmul.f32 %v1079, %v1083
      %v1086 = vmul.f32 %v1080, %v1083
      %v1089 = vrot.slane %v1086, 4
      %v1090 = vsel %vm627, %v1085, %v1089
      %v1092 = vadd.f32 %v1059, %v1090
      %1093 = vst [vmem:[#allocation1] ss:$2 sm:$0xff] %v583
      %v1094 = vld.sshfl [vmem:[#allocation1] sm:$0xff pattern:$0x75316420]
      %v1095 = vld.sshfl [vmem:[#allocation1 + $0x8] sm:$0xff pattern:$0x75316420]
      %1098 = vrot.lane.b32.xlu0 %v1094, 18
      %v1099 = vpop.permute.xlu0 %1098
      %1100 = vrot.lane.b32.xlu0 %v1095, 18
      %v1101 = vpop.permute.xlu0 %1100
      %vm1102 = vcmp.lt.s32.totalorder %v606, 18
      %v1103 = vsel %vm1102, %v1099, %v1101
      %v1104 = vsel %vm1102, %v1101, %v1099
      %s1105 = scalar_lea.vmem %s1, 30
      %v1106 = vld [vmem:[%s1105] sm:$0x3]
      %v1108 = vperm.slane %v1106, 0
      %v1109 = vperm.slane %v1106, 1
      %v1112 = vmul.f32 %v1104, %v1108
      %v1113 = vmul.f32 %v1103, %v1109
      %1114 = vset.pattern.permute.xlu0 15
      %1115 = vperm.xlu0 %1114, %v584
      %v1116 = vpop.permute.xlu0 %1115
      %v1118 = vmul.f32 %v1112, %v1116
      %v1119 = vmul.f32 %v1113, %v1116
      %v1122 = vrot.slane %v1119, 4
      %v1123 = vsel %vm627, %v1118, %v1122
      %v1125 = vadd.f32 %v1092, %v1123
      %1126 = vst [vmem:[#allocation1] ss:$2 sm:$0xff] %v583
      %v1127 = vld.sshfl [vmem:[#allocation1] sm:$0xff pattern:$0x75316420]
      %v1128 = vld.sshfl [vmem:[#allocation1 + $0x8] sm:$0xff pattern:$0x75316420]
      %1131 = vrot.lane.b32.xlu0 %v1127, 17
      %v1132 = vpop.permute.xlu0 %1131
      %1133 = vrot.lane.b32.xlu0 %v1128, 17
      %v1134 = vpop.permute.xlu0 %1133
      %vm1135 = vcmp.lt.s32.totalorder %v606, 17
      %v1136 = vsel %vm1135, %v1132, %v1134
      %v1137 = vsel %vm1135, %v1134, %v1132
      %s1138 = scalar_lea.vmem %s1, 32
      %v1139 = vld [vmem:[%s1138] sm:$0x3]
      %v1141 = vperm.slane %v1139, 0
      %v1142 = vperm.slane %v1139, 1
      %v1145 = vmul.f32 %v1137, %v1141
      %v1146 = vmul.f32 %v1136, %v1142
      %1147 = vset.pattern.permute.xlu0 16
      %1148 = vperm.xlu0 %1147, %v584
      %v1149 = vpop.permute.xlu0 %1148
      %v1151 = vmul.f32 %v1145, %v1149
      %v1152 = vmul.f32 %v1146, %v1149
      %v1155 = vrot.slane %v1152, 4
      %v1156 = vsel %vm627, %v1151, %v1155
      %v1158 = vadd.f32 %v1125, %v1156
      %1159 = vst [vmem:[#allocation1] ss:$2 sm:$0xff] %v583
      %v1160 = vld.sshfl [vmem:[#allocation1] sm:$0xff pattern:$0x75316420]
      %v1161 = vld.sshfl [vmem:[#allocation1 + $0x8] sm:$0xff pattern:$0x75316420]
      %1164 = vrot.lane.b32.xlu0 %v1160, 16
      %v1165 = vpop.permute.xlu0 %1164
      %1166 = vrot.lane.b32.xlu0 %v1161, 16
      %v1167 = vpop.permute.xlu0 %1166
      %vm1168 = vcmp.lt.s32.totalorder %v606, 16
      %v1169 = vsel %vm1168, %v1165, %v1167
      %v1170 = vsel %vm1168, %v1167, %v1165
      %s1171 = scalar_lea.vmem %s1, 34
      %v1172 = vld [vmem:[%s1171] sm:$0x3]
      %v1174 = vperm.slane %v1172, 0
      %v1175 = vperm.slane %v1172, 1
      %v1178 = vmul.f32 %v1170, %v1174
      %v1179 = vmul.f32 %v1169, %v1175
      %1180 = vset.pattern.permute.xlu0 17
      %1181 = vperm.xlu0 %1180, %v584
      %v1182 = vpop.permute.xlu0 %1181
      %v1184 = vmul.f32 %v1178, %v1182
      %v1185 = vmul.f32 %v1179, %v1182
      %v1188 = vrot.slane %v1185, 4
      %v1189 = vsel %vm627, %v1184, %v1188
      %v1191 = vadd.f32 %v1158, %v1189
      %1192 = vst [vmem:[#allocation1] ss:$2 sm:$0xff] %v583
      %v1193 = vld.sshfl [vmem:[#allocation1] sm:$0xff pattern:$0x75316420]
      %v1194 = vld.sshfl [vmem:[#allocation1 + $0x8] sm:$0xff pattern:$0x75316420]
      %1197 = vrot.lane.b32.xlu0 %v1193, 15
      %v1198 = vpop.permute.xlu0 %1197
      %1199 = vrot.lane.b32.xlu0 %v1194, 15
      %v1200 = vpop.permute.xlu0 %1199
      %vm1201 = vcmp.lt.s32.totalorder %v606, 15
      %v1202 = vsel %vm1201, %v1198, %v1200
      %v1203 = vsel %vm1201, %v1200, %v1198
      %s1204 = scalar_lea.vmem %s1, 36
      %v1205 = vld [vmem:[%s1204] sm:$0x3]
      %v1207 = vperm.slane %v1205, 0
      %v1208 = vperm.slane %v1205, 1
      %v1211 = vmul.f32 %v1203, %v1207
      %v1212 = vmul.f32 %v1202, %v1208
      %1213 = vset.pattern.permute.xlu0 18
      %1214 = vperm.xlu0 %1213, %v584
      %v1215 = vpop.permute.xlu0 %1214
      %v1217 = vmul.f32 %v1211, %v1215
      %v1218 = vmul.f32 %v1212, %v1215
      %v1221 = vrot.slane %v1218, 4
      %v1222 = vsel %vm627, %v1217, %v1221
      %v1224 = vadd.f32 %v1191, %v1222
      %1225 = vst [vmem:[#allocation1] ss:$2 sm:$0xff] %v583
      %v1226 = vld.sshfl [vmem:[#allocation1] sm:$0xff pattern:$0x75316420]
      %v1227 = vld.sshfl [vmem:[#allocation1 + $0x8] sm:$0xff pattern:$0x75316420]
      %1230 = vrot.lane.b32.xlu0 %v1226, 14
      %v1231 = vpop.permute.xlu0 %1230
      %1232 = vrot.lane.b32.xlu0 %v1227, 14
      %v1233 = vpop.permute.xlu0 %1232
      %vm1234 = vcmp.lt.s32.totalorder %v606, 14
      %v1235 = vsel %vm1234, %v1231, %v1233
      %v1236 = vsel %vm1234, %v1233, %v1231
      %s1237 = scalar_lea.vmem %s1, 38
      %v1238 = vld [vmem:[%s1237] sm:$0x3]
      %v1240 = vperm.slane %v1238, 0
      %v1241 = vperm.slane %v1238, 1
      %v1244 = vmul.f32 %v1236, %v1240
      %v1245 = vmul.f32 %v1235, %v1241
      %1246 = vset.pattern.permute.xlu0 19
      %1247 = vperm.xlu0 %1246, %v584
      %v1248 = vpop.permute.xlu0 %1247
      %v1250 = vmul.f32 %v1244, %v1248
      %v1251 = vmul.f32 %v1245, %v1248
      %v1254 = vrot.slane %v1251, 4
      %v1255 = vsel %vm627, %v1250, %v1254
      %v1257 = vadd.f32 %v1224, %v1255
      %1258 = vst [vmem:[#allocation1] ss:$2 sm:$0xff] %v583
      %v1259 = vld.sshfl [vmem:[#allocation1] sm:$0xff pattern:$0x75316420]
      %v1260 = vld.sshfl [vmem:[#allocation1 + $0x8] sm:$0xff pattern:$0x75316420]
      %1263 = vrot.lane.b32.xlu0 %v1259, 13
      %v1264 = vpop.permute.xlu0 %1263
      %1265 = vrot.lane.b32.xlu0 %v1260, 13
      %v1266 = vpop.permute.xlu0 %1265
      %vm1267 = vcmp.lt.s32.totalorder %v606, 13
      %v1268 = vsel %vm1267, %v1264, %v1266
      %v1269 = vsel %vm1267, %v1266, %v1264
      %s1270 = scalar_lea.vmem %s1, 40
      %v1271 = vld [vmem:[%s1270] sm:$0x3]
      %v1273 = vperm.slane %v1271, 0
      %v1274 = vperm.slane %v1271, 1
      %v1277 = vmul.f32 %v1269, %v1273
      %v1278 = vmul.f32 %v1268, %v1274
      %1279 = vset.pattern.permute.xlu0 20
      %1280 = vperm.xlu0 %1279, %v584
      %v1281 = vpop.permute.xlu0 %1280
      %v1283 = vmul.f32 %v1277, %v1281
      %v1284 = vmul.f32 %v1278, %v1281
      %v1287 = vrot.slane %v1284, 4
      %v1288 = vsel %vm627, %v1283, %v1287
      %v1290 = vadd.f32 %v1257, %v1288
      %1291 = vst [vmem:[#allocation1] ss:$2 sm:$0xff] %v583
      %v1292 = vld.sshfl [vmem:[#allocation1] sm:$0xff pattern:$0x75316420]
      %v1293 = vld.sshfl [vmem:[#allocation1 + $0x8] sm:$0xff pattern:$0x75316420]
      %1296 = vrot.lane.b32.xlu0 %v1292, 3
      %v1297 = vpop.permute.xlu0 %1296
      %1298 = vrot.lane.b32.xlu0 %v1293, 3
      %v1299 = vpop.permute.xlu0 %1298
      %vm1300 = vcmp.lt.s32.totalorder %v606, 3
      %v1301 = vsel %vm1300, %v1297, %v1299
      %v1302 = vsel %vm1300, %v1299, %v1297
      %s1303 = scalar_lea.vmem %s1, 42
      %v1304 = vld [vmem:[%s1303] sm:$0x3]
      %v1306 = vperm.slane %v1304, 0
      %v1307 = vperm.slane %v1304, 1
      %v1310 = vmul.f32 %v1302, %v1306
      %v1311 = vmul.f32 %v1301, %v1307
      %1312 = vset.pattern.permute.xlu0 21
      %1313 = vperm.xlu0 %1312, %v584
      %v1314 = vpop.permute.xlu0 %1313
      %v1316 = vmul.f32 %v1310, %v1314
      %v1317 = vmul.f32 %v1311, %v1314
      %v1320 = vrot.slane %v1317, 4
      %v1321 = vsel %vm627, %v1316, %v1320
      %v1323 = vadd.f32 %v1290, %v1321
      %1324 = vst [vmem:[#allocation1] ss:$2 sm:$0xff] %v583
      %v1325 = vld.sshfl [vmem:[#allocation1] sm:$0xff pattern:$0x75316420]
      %v1326 = vld.sshfl [vmem:[#allocation1 + $0x8] sm:$0xff pattern:$0x75316420]
      %1329 = vrot.lane.b32.xlu0 %v1325, 2
      %v1330 = vpop.permute.xlu0 %1329
      %1331 = vrot.lane.b32.xlu0 %v1326, 2
      %v1332 = vpop.permute.xlu0 %1331
      %vm1333 = vcmp.lt.s32.totalorder %v606, 2
      %v1334 = vsel %vm1333, %v1330, %v1332
      %v1335 = vsel %vm1333, %v1332, %v1330
      %s1336 = scalar_lea.vmem %s1, 44
      %v1337 = vld [vmem:[%s1336] sm:$0x3]
      %v1339 = vperm.slane %v1337, 0
      %v1340 = vperm.slane %v1337, 1
      %v1343 = vmul.f32 %v1335, %v1339
      %v1344 = vmul.f32 %v1334, %v1340
      %1345 = vset.pattern.permute.xlu0 22
      %1346 = vperm.xlu0 %1345, %v584
      %v1347 = vpop.permute.xlu0 %1346
      %v1349 = vmul.f32 %v1343, %v1347
      %v1350 = vmul.f32 %v1344, %v1347
      %v1353 = vrot.slane %v1350, 4
      %v1354 = vsel %vm627, %v1349, %v1353
      %v1356 = vadd.f32 %v1323, %v1354
      %1357 = vst [vmem:[#allocation1] ss:$2 sm:$0xff] %v583
      %v1358 = vld.sshfl [vmem:[#allocation1] sm:$0xff pattern:$0x75316420]
      %v1359 = vld.sshfl [vmem:[#allocation1 + $0x8] sm:$0xff pattern:$0x75316420]
      %1362 = vrot.lane.b32.xlu0 %v1358, 1
      %v1363 = vpop.permute.xlu0 %1362
      %1364 = vrot.lane.b32.xlu0 %v1359, 1
      %v1365 = vpop.permute.xlu0 %1364
      %vm1366 = vcmp.lt.s32.totalorder %v606, 1
      %v1367 = vsel %vm1366, %v1363, %v1365
      %v1368 = vsel %vm1366, %v1365, %v1363
      %s1369 = scalar_lea.vmem %s1, 46
      %v1370 = vld [vmem:[%s1369] sm:$0x3]
      %v1372 = vperm.slane %v1370, 0
      %v1373 = vperm.slane %v1370, 1
      %v1376 = vmul.f32 %v1368, %v1372
      %v1377 = vmul.f32 %v1367, %v1373
      %1378 = vset.pattern.permute.xlu0 23
      %1379 = vperm.xlu0 %1378, %v584
      %v1380 = vpop.permute.xlu0 %1379
      %v1382 = vmul.f32 %v1376, %v1380
      %v1383 = vmul.f32 %v1377, %v1380
      %v1386 = vrot.slane %v1383, 4
      %v1387 = vsel %vm627, %v1382, %v1386
      %v1389 = vadd.f32 %v1356, %v1387
      %1390 = vst [vmem:[#allocation1] ss:$2 sm:$0xff] %v583
      %v1391 = vld.sshfl [vmem:[#allocation1] sm:$0xff pattern:$0x75316420]
      %v1392 = vld.sshfl [vmem:[#allocation1 + $0x8] sm:$0xff pattern:$0x75316420]
      %1395 = vrot.lane.b32.xlu0 %v1391, 127
      %v1396 = vpop.permute.xlu0 %1395
      %1397 = vrot.lane.b32.xlu0 %v1392, 127
      %v1398 = vpop.permute.xlu0 %1397
      %vm1399 = vcmp.lt.s32.totalorder %v606, 127
      %v1400 = vsel %vm1399, %v1396, %v1398
      %v1401 = vsel %vm1399, %v1398, %v1396
      %s1402 = scalar_lea.vmem %s1, 50
      %v1403 = vld [vmem:[%s1402] sm:$0x3]
      %v1405 = vperm.slane %v1403, 0
      %v1406 = vperm.slane %v1403, 1
      %v1409 = vmul.f32 %v1400, %v1405
      %v1410 = vmul.f32 %v1401, %v1406
      %1411 = vset.pattern.permute.xlu0 25
      %1412 = vperm.xlu0 %1411, %v584
      %v1413 = vpop.permute.xlu0 %1412
      %v1415 = vmul.f32 %v1409, %v1413
      %v1416 = vmul.f32 %v1410, %v1413
      %v1419 = vrot.slane %v1416, 4
      %v1420 = vsel %vm627, %v1415, %v1419
      %v1422 = vadd.f32 %v1389, %v1420
      %1423 = vst [vmem:[#allocation1] ss:$2 sm:$0xff] %v583
      %v1424 = vld.sshfl [vmem:[#allocation1] sm:$0xff pattern:$0x75316420]
      %v1425 = vld.sshfl [vmem:[#allocation1 + $0x8] sm:$0xff pattern:$0x75316420]
      %1428 = vrot.lane.b32.xlu0 %v1424, 126
      %v1429 = vpop.permute.xlu0 %1428
      %1430 = vrot.lane.b32.xlu0 %v1425, 126
      %v1431 = vpop.permute.xlu0 %1430
      %vm1432 = vcmp.lt.s32.totalorder %v606, 126
      %v1433 = vsel %vm1432, %v1429, %v1431
      %v1434 = vsel %vm1432, %v1431, %v1429
      %s1435 = scalar_lea.vmem %s1, 52
      %v1436 = vld [vmem:[%s1435] sm:$0x3]
      %v1438 = vperm.slane %v1436, 0
      %v1439 = vperm.slane %v1436, 1
      %v1442 = vmul.f32 %v1433, %v1438
      %v1443 = vmul.f32 %v1434, %v1439
      %1444 = vset.pattern.permute.xlu0 26
      %1445 = vperm.xlu0 %1444, %v584
      %v1446 = vpop.permute.xlu0 %1445
      %v1448 = vmul.f32 %v1442, %v1446
      %v1449 = vmul.f32 %v1443, %v1446
      %v1452 = vrot.slane %v1449, 4
      %v1453 = vsel %vm627, %v1448, %v1452
      %v1455 = vadd.f32 %v1422, %v1453
      %1456 = vst [vmem:[#allocation1] ss:$2 sm:$0xff] %v583
      %v1457 = vld.sshfl [vmem:[#allocation1] sm:$0xff pattern:$0x75316420]
      %v1458 = vld.sshfl [vmem:[#allocation1 + $0x8] sm:$0xff pattern:$0x75316420]
      %1461 = vrot.lane.b32.xlu0 %v1457, 125
      %v1462 = vpop.permute.xlu0 %1461
      %1463 = vrot.lane.b32.xlu0 %v1458, 125
      %v1464 = vpop.permute.xlu0 %1463
      %vm1465 = vcmp.lt.s32.totalorder %v606, 125
      %v1466 = vsel %vm1465, %v1462, %v1464
      %v1467 = vsel %vm1465, %v1464, %v1462
      %s1468 = scalar_lea.vmem %s1, 54
      %v1469 = vld [vmem:[%s1468] sm:$0x3]
      %v1471 = vperm.slane %v1469, 0
      %v1472 = vperm.slane %v1469, 1
      %v1475 = vmul.f32 %v1466, %v1471
      %v1476 = vmul.f32 %v1467, %v1472
      %1477 = vset.pattern.permute.xlu0 27
      %1478 = vperm.xlu0 %1477, %v584
      %v1479 = vpop.permute.xlu0 %1478
      %v1481 = vmul.f32 %v1475, %v1479
      %v1482 = vmul.f32 %v1476, %v1479
      %v1485 = vrot.slane %v1482, 4
      %v1486 = vsel %vm627, %v1481, %v1485
      %v1488 = vadd.f32 %v1455, %v1486
      %1489 = vst [vmem:[#allocation1] ss:$2 sm:$0xff] %v583
      %v1490 = vld.sshfl [vmem:[#allocation1] sm:$0xff pattern:$0x75316420]
      %v1491 = vld.sshfl [vmem:[#allocation1 + $0x8] sm:$0xff pattern:$0x75316420]
      %1494 = vrot.lane.b32.xlu0 %v1490, 115
      %v1495 = vpop.permute.xlu0 %1494
      %1496 = vrot.lane.b32.xlu0 %v1491, 115
      %v1497 = vpop.permute.xlu0 %1496
      %vm1498 = vcmp.lt.s32.totalorder %v606, 115
      %v1499 = vsel %vm1498, %v1495, %v1497
      %v1500 = vsel %vm1498, %v1497, %v1495
      %s1501 = scalar_lea.vmem %s1, 56
      %v1502 = vld [vmem:[%s1501] sm:$0x3]
      %v1504 = vperm.slane %v1502, 0
      %v1505 = vperm.slane %v1502, 1
      %v1508 = vmul.f32 %v1499, %v1504
      %v1509 = vmul.f32 %v1500, %v1505
      %1510 = vset.pattern.permute.xlu0 28
      %1511 = vperm.xlu0 %1510, %v584
      %v1512 = vpop.permute.xlu0 %1511
      %v1514 = vmul.f32 %v1508, %v1512
      %v1515 = vmul.f32 %v1509, %v1512
      %v1518 = vrot.slane %v1515, 4
      %v1519 = vsel %vm627, %v1514, %v1518
      %v1521 = vadd.f32 %v1488, %v1519
      %1522 = vst [vmem:[#allocation1] ss:$2 sm:$0xff] %v583
      %v1523 = vld.sshfl [vmem:[#allocation1] sm:$0xff pattern:$0x75316420]
      %v1524 = vld.sshfl [vmem:[#allocation1 + $0x8] sm:$0xff pattern:$0x75316420]
      %1527 = vrot.lane.b32.xlu0 %v1523, 114
      %v1528 = vpop.permute.xlu0 %1527
      %1529 = vrot.lane.b32.xlu0 %v1524, 114
      %v1530 = vpop.permute.xlu0 %1529
      %vm1531 = vcmp.lt.s32.totalorder %v606, 114
      %v1532 = vsel %vm1531, %v1528, %v1530
      %v1533 = vsel %vm1531, %v1530, %v1528
      %s1534 = scalar_lea.vmem %s1, 58
      %v1535 = vld [vmem:[%s1534] sm:$0x3]
      %v1537 = vperm.slane %v1535, 0
      %v1538 = vperm.slane %v1535, 1
      %v1541 = vmul.f32 %v1532, %v1537
      %v1542 = vmul.f32 %v1533, %v1538
      %1543 = vset.pattern.permute.xlu0 29
      %1544 = vperm.xlu0 %1543, %v584
      %v1545 = vpop.permute.xlu0 %1544
      %v1547 = vmul.f32 %v1541, %v1545
      %v1548 = vmul.f32 %v1542, %v1545
      %v1551 = vrot.slane %v1548, 4
      %v1552 = vsel %vm627, %v1547, %v1551
      %v1554 = vadd.f32 %v1521, %v1552
      %1555 = vst [vmem:[#allocation1] ss:$2 sm:$0xff] %v583
      %v1556 = vld.sshfl [vmem:[#allocation1] sm:$0xff pattern:$0x75316420]
      %v1557 = vld.sshfl [vmem:[#allocation1 + $0x8] sm:$0xff pattern:$0x75316420]
      %1560 = vrot.lane.b32.xlu0 %v1556, 113
      %v1561 = vpop.permute.xlu0 %1560
      %1562 = vrot.lane.b32.xlu0 %v1557, 113
      %v1563 = vpop.permute.xlu0 %1562
      %vm1564 = vcmp.lt.s32.totalorder %v606, 113
      %v1565 = vsel %vm1564, %v1561, %v1563
      %v1566 = vsel %vm1564, %v1563, %v1561
      %s1567 = scalar_lea.vmem %s1, 60
      %v1568 = vld [vmem:[%s1567] sm:$0x3]
      %v1570 = vperm.slane %v1568, 0
      %v1571 = vperm.slane %v1568, 1
      %v1574 = vmul.f32 %v1565, %v1570
      %v1575 = vmul.f32 %v1566, %v1571
      %1576 = vset.pattern.permute.xlu0 30
      %1577 = vperm.xlu0 %1576, %v584
      %v1578 = vpop.permute.xlu0 %1577
      %v1580 = vmul.f32 %v1574, %v1578
      %v1581 = vmul.f32 %v1575, %v1578
      %v1584 = vrot.slane %v1581, 4
      %v1585 = vsel %vm627, %v1580, %v1584
      %v1587 = vadd.f32 %v1554, %v1585
      %1588 = vst [vmem:[#allocation1] ss:$2 sm:$0xff] %v583
      %v1589 = vld.sshfl [vmem:[#allocation1] sm:$0xff pattern:$0x75316420]
      %v1590 = vld.sshfl [vmem:[#allocation1 + $0x8] sm:$0xff pattern:$0x75316420]
      %1593 = vrot.lane.b32.xlu0 %v1589, 112
      %v1594 = vpop.permute.xlu0 %1593
      %1595 = vrot.lane.b32.xlu0 %v1590, 112
      %v1596 = vpop.permute.xlu0 %1595
      %vm1597 = vcmp.lt.s32.totalorder %v606, 112
      %v1598 = vsel %vm1597, %v1594, %v1596
      %v1599 = vsel %vm1597, %v1596, %v1594
      %s1600 = scalar_lea.vmem %s1, 62
      %v1601 = vld [vmem:[%s1600] sm:$0x3]
      %v1603 = vperm.slane %v1601, 0
      %v1604 = vperm.slane %v1601, 1
      %v1607 = vmul.f32 %v1598, %v1603
      %v1608 = vmul.f32 %v1599, %v1604
      %1609 = vset.pattern.permute.xlu0 31
      %1610 = vperm.xlu0 %1609, %v584
      %v1611 = vpop.permute.xlu0 %1610
      %v1613 = vmul.f32 %v1607, %v1611
      %v1614 = vmul.f32 %v1608, %v1611
      %v1617 = vrot.slane %v1614, 4
      %v1618 = vsel %vm627, %v1613, %v1617
      %v1620 = vadd.f32 %v1587, %v1618
      %1621 = vst [vmem:[#allocation1] ss:$2 sm:$0xff] %v583
      %v1622 = vld.sshfl [vmem:[#allocation1] sm:$0xff pattern:$0x75316420]
      %v1623 = vld.sshfl [vmem:[#allocation1 + $0x8] sm:$0xff pattern:$0x75316420]
      %1626 = vrot.lane.b32.xlu0 %v1622, 111
      %v1627 = vpop.permute.xlu0 %1626
      %1628 = vrot.lane.b32.xlu0 %v1623, 111
      %v1629 = vpop.permute.xlu0 %1628
      %vm1630 = vcmp.lt.s32.totalorder %v606, 111
      %v1631 = vsel %vm1630, %v1627, %v1629
      %v1632 = vsel %vm1630, %v1629, %v1627
      %s1633 = scalar_lea.vmem %s1, 64
      %v1634 = vld [vmem:[%s1633] sm:$0x3]
      %v1636 = vperm.slane %v1634, 0
      %v1637 = vperm.slane %v1634, 1
      %v1640 = vmul.f32 %v1631, %v1636
      %v1641 = vmul.f32 %v1632, %v1637
      %1642 = vset.pattern.permute.xlu0 32
      %1643 = vperm.xlu0 %1642, %v584
      %v1644 = vpop.permute.xlu0 %1643
      %v1646 = vmul.f32 %v1640, %v1644
      %v1647 = vmul.f32 %v1641, %v1644
      %v1650 = vrot.slane %v1647, 4
      %v1651 = vsel %vm627, %v1646, %v1650
      %v1653 = vadd.f32 %v1620, %v1651
      %1654 = vst [vmem:[#allocation1] ss:$2 sm:$0xff] %v583
      %v1655 = vld.sshfl [vmem:[#allocation1] sm:$0xff pattern:$0x75316420]
      %v1656 = vld.sshfl [vmem:[#allocation1 + $0x8] sm:$0xff pattern:$0x75316420]
      %1659 = vrot.lane.b32.xlu0 %v1655, 110
      %v1660 = vpop.permute.xlu0 %1659
      %1661 = vrot.lane.b32.xlu0 %v1656, 110
      %v1662 = vpop.permute.xlu0 %1661
      %vm1663 = vcmp.lt.s32.totalorder %v606, 110
      %v1664 = vsel %vm1663, %v1660, %v1662
      %v1665 = vsel %vm1663, %v1662, %v1660
      %s1666 = scalar_lea.vmem %s1, 66
      %v1667 = vld [vmem:[%s1666] sm:$0x3]
      %v1669 = vperm.slane %v1667, 0
      %v1670 = vperm.slane %v1667, 1
      %v1673 = vmul.f32 %v1664, %v1669
      %v1674 = vmul.f32 %v1665, %v1670
      %1675 = vset.pattern.permute.xlu0 33
      %1676 = vperm.xlu0 %1675, %v584
      %v1677 = vpop.permute.xlu0 %1676
      %v1679 = vmul.f32 %v1673, %v1677
      %v1680 = vmul.f32 %v1674, %v1677
      %v1683 = vrot.slane %v1680, 4
      %v1684 = vsel %vm627, %v1679, %v1683
      %v1686 = vadd.f32 %v1653, %v1684
      %1687 = vst [vmem:[#allocation1] ss:$2 sm:$0xff] %v583
      %v1688 = vld.sshfl [vmem:[#allocation1] sm:$0xff pattern:$0x75316420]
      %v1689 = vld.sshfl [vmem:[#allocation1 + $0x8] sm:$0xff pattern:$0x75316420]
      %1692 = vrot.lane.b32.xlu0 %v1688, 109
      %v1693 = vpop.permute.xlu0 %1692
      %1694 = vrot.lane.b32.xlu0 %v1689, 109
      %v1695 = vpop.permute.xlu0 %1694
      %vm1696 = vcmp.lt.s32.totalorder %v606, 109
      %v1697 = vsel %vm1696, %v1693, %v1695
      %v1698 = vsel %vm1696, %v1695, %v1693
      %s1699 = scalar_lea.vmem %s1, 68
      %v1700 = vld [vmem:[%s1699] sm:$0x3]
      %v1702 = vperm.slane %v1700, 0
      %v1703 = vperm.slane %v1700, 1
      %v1706 = vmul.f32 %v1697, %v1702
      %v1707 = vmul.f32 %v1698, %v1703
      %1708 = vset.pattern.permute.xlu0 34
      %1709 = vperm.xlu0 %1708, %v584
      %v1710 = vpop.permute.xlu0 %1709
      %v1712 = vmul.f32 %v1706, %v1710
      %v1713 = vmul.f32 %v1707, %v1710
      %v1716 = vrot.slane %v1713, 4
      %v1717 = vsel %vm627, %v1712, %v1716
      %v1719 = vadd.f32 %v1686, %v1717
      %1720 = vst [vmem:[#allocation1] ss:$2 sm:$0xff] %v583
      %v1721 = vld.sshfl [vmem:[#allocation1] sm:$0xff pattern:$0x75316420]
      %v1722 = vld.sshfl [vmem:[#allocation1 + $0x8] sm:$0xff pattern:$0x75316420]
      %1725 = vrot.lane.b32.xlu0 %v1721, 99
      %v1726 = vpop.permute.xlu0 %1725
      %1727 = vrot.lane.b32.xlu0 %v1722, 99
      %v1728 = vpop.permute.xlu0 %1727
      %vm1729 = vcmp.lt.s32.totalorder %v606, 99
      %v1730 = vsel %vm1729, %v1726, %v1728
      %v1731 = vsel %vm1729, %v1728, %v1726
      %s1732 = scalar_lea.vmem %s1, 70
      %v1733 = vld [vmem:[%s1732] sm:$0x3]
      %v1735 = vperm.slane %v1733, 0
      %v1736 = vperm.slane %v1733, 1
      %v1739 = vmul.f32 %v1730, %v1735
      %v1740 = vmul.f32 %v1731, %v1736
      %1741 = vset.pattern.permute.xlu0 35
      %1742 = vperm.xlu0 %1741, %v584
      %v1743 = vpop.permute.xlu0 %1742
      %v1745 = vmul.f32 %v1739, %v1743
      %v1746 = vmul.f32 %v1740, %v1743
      %v1749 = vrot.slane %v1746, 4
      %v1750 = vsel %vm627, %v1745, %v1749
      %v1752 = vadd.f32 %v1719, %v1750
      %1753 = vst [vmem:[#allocation1] ss:$2 sm:$0xff] %v583
      %v1754 = vld.sshfl [vmem:[#allocation1] sm:$0xff pattern:$0x75316420]
      %v1755 = vld.sshfl [vmem:[#allocation1 + $0x8] sm:$0xff pattern:$0x75316420]
      %1758 = vrot.lane.b32.xlu0 %v1754, 98
      %v1759 = vpop.permute.xlu0 %1758
      %1760 = vrot.lane.b32.xlu0 %v1755, 98
      %v1761 = vpop.permute.xlu0 %1760
      %vm1762 = vcmp.lt.s32.totalorder %v606, 98
      %v1763 = vsel %vm1762, %v1759, %v1761
      %v1764 = vsel %vm1762, %v1761, %v1759
      %s1765 = scalar_lea.vmem %s1, 72
      %v1766 = vld [vmem:[%s1765] sm:$0x3]
      %v1768 = vperm.slane %v1766, 0
      %v1769 = vperm.slane %v1766, 1
      %v1772 = vmul.f32 %v1763, %v1768
      %v1773 = vmul.f32 %v1764, %v1769
      %1774 = vset.pattern.permute.xlu0 36
      %1775 = vperm.xlu0 %1774, %v584
      %v1776 = vpop.permute.xlu0 %1775
      %v1778 = vmul.f32 %v1772, %v1776
      %v1779 = vmul.f32 %v1773, %v1776
      %v1782 = vrot.slane %v1779, 4
      %v1783 = vsel %vm627, %v1778, %v1782
      %v1785 = vadd.f32 %v1752, %v1783
      %1786 = vst [vmem:[#allocation1] ss:$2 sm:$0xff] %v583
      %v1787 = vld.sshfl [vmem:[#allocation1] sm:$0xff pattern:$0x75316420]
      %v1788 = vld.sshfl [vmem:[#allocation1 + $0x8] sm:$0xff pattern:$0x75316420]
      %1791 = vrot.lane.b32.xlu0 %v1787, 97
      %v1792 = vpop.permute.xlu0 %1791
      %1793 = vrot.lane.b32.xlu0 %v1788, 97
      %v1794 = vpop.permute.xlu0 %1793
      %vm1795 = vcmp.lt.s32.totalorder %v606, 97
      %v1796 = vsel %vm1795, %v1792, %v1794
      %v1797 = vsel %vm1795, %v1794, %v1792
      %s1798 = scalar_lea.vmem %s1, 74
      %v1799 = vld [vmem:[%s1798] sm:$0x3]
      %v1801 = vperm.slane %v1799, 0
      %v1802 = vperm.slane %v1799, 1
      %v1805 = vmul.f32 %v1796, %v1801
      %v1806 = vmul.f32 %v1797, %v1802
      %1807 = vset.pattern.permute.xlu0 37
      %1808 = vperm.xlu0 %1807, %v584
      %v1809 = vpop.permute.xlu0 %1808
      %v1811 = vmul.f32 %v1805, %v1809
      %v1812 = vmul.f32 %v1806, %v1809
      %v1815 = vrot.slane %v1812, 4
      %v1816 = vsel %vm627, %v1811, %v1815
      %v1818 = vadd.f32 %v1785, %v1816
      %1819 = vst [vmem:[#allocation1] ss:$2 sm:$0xff] %v583
      %v1820 = vld.sshfl [vmem:[#allocation1] sm:$0xff pattern:$0x75316420]
      %v1821 = vld.sshfl [vmem:[#allocation1 + $0x8] sm:$0xff pattern:$0x75316420]
      %1824 = vrot.lane.b32.xlu0 %v1820, 96
      %v1825 = vpop.permute.xlu0 %1824
      %1826 = vrot.lane.b32.xlu0 %v1821, 96
      %v1827 = vpop.permute.xlu0 %1826
      %vm1828 = vcmp.lt.s32.totalorder %v606, 96
      %v1829 = vsel %vm1828, %v1825, %v1827
      %v1830 = vsel %vm1828, %v1827, %v1825
      %s1831 = scalar_lea.vmem %s1, 76
      %v1832 = vld [vmem:[%s1831] sm:$0x3]
      %v1834 = vperm.slane %v1832, 0
      %v1835 = vperm.slane %v1832, 1
      %v1838 = vmul.f32 %v1829, %v1834
      %v1839 = vmul.f32 %v1830, %v1835
      %1840 = vset.pattern.permute.xlu0 38
      %1841 = vperm.xlu0 %1840, %v584
      %v1842 = vpop.permute.xlu0 %1841
      %v1844 = vmul.f32 %v1838, %v1842
      %v1845 = vmul.f32 %v1839, %v1842
      %v1848 = vrot.slane %v1845, 4
      %v1849 = vsel %vm627, %v1844, %v1848
      %v1851 = vadd.f32 %v1818, %v1849
      %1852 = vst [vmem:[#allocation1] ss:$2 sm:$0xff] %v583
      %v1853 = vld.sshfl [vmem:[#allocation1] sm:$0xff pattern:$0x75316420]
      %v1854 = vld.sshfl [vmem:[#allocation1 + $0x8] sm:$0xff pattern:$0x75316420]
      %1857 = vrot.lane.b32.xlu0 %v1853, 95
      %v1858 = vpop.permute.xlu0 %1857
      %1859 = vrot.lane.b32.xlu0 %v1854, 95
      %v1860 = vpop.permute.xlu0 %1859
      %vm1861 = vcmp.lt.s32.totalorder %v606, 95
      %v1862 = vsel %vm1861, %v1858, %v1860
      %v1863 = vsel %vm1861, %v1860, %v1858
      %s1864 = scalar_lea.vmem %s1, 78
      %v1865 = vld [vmem:[%s1864] sm:$0x3]
      %v1867 = vperm.slane %v1865, 0
      %v1868 = vperm.slane %v1865, 1
      %v1871 = vmul.f32 %v1862, %v1867
      %v1872 = vmul.f32 %v1863, %v1868
      %1873 = vset.pattern.permute.xlu0 39
      %1874 = vperm.xlu0 %1873, %v584
      %v1875 = vpop.permute.xlu0 %1874
      %v1877 = vmul.f32 %v1871, %v1875
      %v1878 = vmul.f32 %v1872, %v1875
      %v1881 = vrot.slane %v1878, 4
      %v1882 = vsel %vm627, %v1877, %v1881
      %v1884 = vadd.f32 %v1851, %v1882
      %1885 = vst [vmem:[#allocation1] ss:$2 sm:$0xff] %v583
      %v1886 = vld.sshfl [vmem:[#allocation1] sm:$0xff pattern:$0x75316420]
      %v1887 = vld.sshfl [vmem:[#allocation1 + $0x8] sm:$0xff pattern:$0x75316420]
      %1890 = vrot.lane.b32.xlu0 %v1886, 94
      %v1891 = vpop.permute.xlu0 %1890
      %1892 = vrot.lane.b32.xlu0 %v1887, 94
      %v1893 = vpop.permute.xlu0 %1892
      %vm1894 = vcmp.lt.s32.totalorder %v606, 94
      %v1895 = vsel %vm1894, %v1891, %v1893
      %v1896 = vsel %vm1894, %v1893, %v1891
      %s1897 = scalar_lea.vmem %s1, 80
      %v1898 = vld [vmem:[%s1897] sm:$0x3]
      %v1900 = vperm.slane %v1898, 0
      %v1901 = vperm.slane %v1898, 1
      %v1904 = vmul.f32 %v1895, %v1900
      %v1905 = vmul.f32 %v1896, %v1901
      %1906 = vset.pattern.permute.xlu0 40
      %1907 = vperm.xlu0 %1906, %v584
      %v1908 = vpop.permute.xlu0 %1907
      %v1910 = vmul.f32 %v1904, %v1908
      %v1911 = vmul.f32 %v1905, %v1908
      %v1914 = vrot.slane %v1911, 4
      %v1915 = vsel %vm627, %v1910, %v1914
      %v1917 = vadd.f32 %v1884, %v1915
      %1918 = vst [vmem:[#allocation1] ss:$2 sm:$0xff] %v583
      %v1919 = vld.sshfl [vmem:[#allocation1] sm:$0xff pattern:$0x75316420]
      %v1920 = vld.sshfl [vmem:[#allocation1 + $0x8] sm:$0xff pattern:$0x75316420]
      %1923 = vrot.lane.b32.xlu0 %v1919, 93
      %v1924 = vpop.permute.xlu0 %1923
      %1925 = vrot.lane.b32.xlu0 %v1920, 93
      %v1926 = vpop.permute.xlu0 %1925
      %vm1927 = vcmp.lt.s32.totalorder %v606, 93
      %v1928 = vsel %vm1927, %v1924, %v1926
      %v1929 = vsel %vm1927, %v1926, %v1924
      %s1930 = scalar_lea.vmem %s1, 82
      %v1931 = vld [vmem:[%s1930] sm:$0x3]
      %v1933 = vperm.slane %v1931, 0
      %v1934 = vperm.slane %v1931, 1
      %v1937 = vmul.f32 %v1928, %v1933
      %v1938 = vmul.f32 %v1929, %v1934
      %1939 = vset.pattern.permute.xlu0 41
      %1940 = vperm.xlu0 %1939, %v584
      %v1941 = vpop.permute.xlu0 %1940
      %v1943 = vmul.f32 %v1937, %v1941
      %v1944 = vmul.f32 %v1938, %v1941
      %v1947 = vrot.slane %v1944, 4
      %v1948 = vsel %vm627, %v1943, %v1947
      %v1950 = vadd.f32 %v1917, %v1948
      %1951 = vst [vmem:[#allocation1] ss:$2 sm:$0xff] %v583
      %v1952 = vld.sshfl [vmem:[#allocation1] sm:$0xff pattern:$0x75316420]
      %v1953 = vld.sshfl [vmem:[#allocation1 + $0x8] sm:$0xff pattern:$0x75316420]
      %1956 = vrot.lane.b32.xlu0 %v1952, 83
      %v1957 = vpop.permute.xlu0 %1956
      %1958 = vrot.lane.b32.xlu0 %v1953, 83
      %v1959 = vpop.permute.xlu0 %1958
      %vm1960 = vcmp.lt.s32.totalorder %v606, 83
      %v1961 = vsel %vm1960, %v1957, %v1959
      %v1962 = vsel %vm1960, %v1959, %v1957
      %s1963 = scalar_lea.vmem %s1, 84
      %v1964 = vld [vmem:[%s1963] sm:$0x3]
      %v1966 = vperm.slane %v1964, 0
      %v1967 = vperm.slane %v1964, 1
      %v1970 = vmul.f32 %v1961, %v1966
      %v1971 = vmul.f32 %v1962, %v1967
      %1972 = vset.pattern.permute.xlu0 42
      %1973 = vperm.xlu0 %1972, %v584
      %v1974 = vpop.permute.xlu0 %1973
      %v1976 = vmul.f32 %v1970, %v1974
      %v1977 = vmul.f32 %v1971, %v1974
      %v1980 = vrot.slane %v1977, 4
      %v1981 = vsel %vm627, %v1976, %v1980
      %v1983 = vadd.f32 %v1950, %v1981
      %1984 = vst [vmem:[#allocation1] ss:$2 sm:$0xff] %v583
      %v1985 = vld.sshfl [vmem:[#allocation1] sm:$0xff pattern:$0x75316420]
      %v1986 = vld.sshfl [vmem:[#allocation1 + $0x8] sm:$0xff pattern:$0x75316420]
      %1989 = vrot.lane.b32.xlu0 %v1985, 82
      %v1990 = vpop.permute.xlu0 %1989
      %1991 = vrot.lane.b32.xlu0 %v1986, 82
      %v1992 = vpop.permute.xlu0 %1991
      %vm1993 = vcmp.lt.s32.totalorder %v606, 82
      %v1994 = vsel %vm1993, %v1990, %v1992
      %v1995 = vsel %vm1993, %v1992, %v1990
      %s1996 = scalar_lea.vmem %s1, 86
      %v1997 = vld [vmem:[%s1996] sm:$0x3]
      %v1999 = vperm.slane %v1997, 0
      %v2000 = vperm.slane %v1997, 1
      %v2003 = vmul.f32 %v1994, %v1999
      %v2004 = vmul.f32 %v1995, %v2000
      %2005 = vset.pattern.permute.xlu0 43
      %2006 = vperm.xlu0 %2005, %v584
      %v2007 = vpop.permute.xlu0 %2006
      %v2009 = vmul.f32 %v2003, %v2007
      %v2010 = vmul.f32 %v2004, %v2007
      %v2013 = vrot.slane %v2010, 4
      %v2014 = vsel %vm627, %v2009, %v2013
      %v2016 = vadd.f32 %v1983, %v2014
      %2017 = vst [vmem:[#allocation1] ss:$2 sm:$0xff] %v583
      %v2018 = vld.sshfl [vmem:[#allocation1] sm:$0xff pattern:$0x75316420]
      %v2019 = vld.sshfl [vmem:[#allocation1 + $0x8] sm:$0xff pattern:$0x75316420]
      %2022 = vrot.lane.b32.xlu0 %v2018, 81
      %v2023 = vpop.permute.xlu0 %2022
      %2024 = vrot.lane.b32.xlu0 %v2019, 81
      %v2025 = vpop.permute.xlu0 %2024
      %vm2026 = vcmp.lt.s32.totalorder %v606, 81
      %v2027 = vsel %vm2026, %v2023, %v2025
      %v2028 = vsel %vm2026, %v2025, %v2023
      %s2029 = scalar_lea.vmem %s1, 88
      %v2030 = vld [vmem:[%s2029] sm:$0x3]
      %v2032 = vperm.slane %v2030, 0
      %v2033 = vperm.slane %v2030, 1
      %v2036 = vmul.f32 %v2027, %v2032
      %v2037 = vmul.f32 %v2028, %v2033
      %2038 = vset.pattern.permute.xlu0 44
      %2039 = vperm.xlu0 %2038, %v584
      %v2040 = vpop.permute.xlu0 %2039
      %v2042 = vmul.f32 %v2036, %v2040
      %v2043 = vmul.f32 %v2037, %v2040
      %v2046 = vrot.slane %v2043, 4
      %v2047 = vsel %vm627, %v2042, %v2046
      %v2049 = vadd.f32 %v2016, %v2047
      %2050 = vst [vmem:[#allocation1] ss:$2 sm:$0xff] %v583
      %v2051 = vld.sshfl [vmem:[#allocation1] sm:$0xff pattern:$0x75316420]
      %v2052 = vld.sshfl [vmem:[#allocation1 + $0x8] sm:$0xff pattern:$0x75316420]
      %2055 = vrot.lane.b32.xlu0 %v2051, 80
      %v2056 = vpop.permute.xlu0 %2055
      %2057 = vrot.lane.b32.xlu0 %v2052, 80
      %v2058 = vpop.permute.xlu0 %2057
      %vm2059 = vcmp.lt.s32.totalorder %v606, 80
      %v2060 = vsel %vm2059, %v2056, %v2058
      %v2061 = vsel %vm2059, %v2058, %v2056
      %s2062 = scalar_lea.vmem %s1, 90
      %v2063 = vld [vmem:[%s2062] sm:$0x3]
      %v2065 = vperm.slane %v2063, 0
      %v2066 = vperm.slane %v2063, 1
      %v2069 = vmul.f32 %v2060, %v2065
      %v2070 = vmul.f32 %v2061, %v2066
      %2071 = vset.pattern.permute.xlu0 45
      %2072 = vperm.xlu0 %2071, %v584
      %v2073 = vpop.permute.xlu0 %2072
      %v2075 = vmul.f32 %v2069, %v2073
      %v2076 = vmul.f32 %v2070, %v2073
      %v2079 = vrot.slane %v2076, 4
      %v2080 = vsel %vm627, %v2075, %v2079
      %v2082 = vadd.f32 %v2049, %v2080
      %2083 = vst [vmem:[#allocation1] ss:$2 sm:$0xff] %v583
      %v2084 = vld.sshfl [vmem:[#allocation1] sm:$0xff pattern:$0x75316420]
      %v2085 = vld.sshfl [vmem:[#allocation1 + $0x8] sm:$0xff pattern:$0x75316420]
      %2088 = vrot.lane.b32.xlu0 %v2084, 79
      %v2089 = vpop.permute.xlu0 %2088
      %2090 = vrot.lane.b32.xlu0 %v2085, 79
      %v2091 = vpop.permute.xlu0 %2090
      %vm2092 = vcmp.lt.s32.totalorder %v606, 79
      %v2093 = vsel %vm2092, %v2089, %v2091
      %v2094 = vsel %vm2092, %v2091, %v2089
      %s2095 = scalar_lea.vmem %s1, 92
      %v2096 = vld [vmem:[%s2095] sm:$0x3]
      %v2098 = vperm.slane %v2096, 0
      %v2099 = vperm.slane %v2096, 1
      %v2102 = vmul.f32 %v2093, %v2098
      %v2103 = vmul.f32 %v2094, %v2099
      %2104 = vset.pattern.permute.xlu0 46
      %2105 = vperm.xlu0 %2104, %v584
      %v2106 = vpop.permute.xlu0 %2105
      %v2108 = vmul.f32 %v2102, %v2106
      %v2109 = vmul.f32 %v2103, %v2106
      %v2112 = vrot.slane %v2109, 4
      %v2113 = vsel %vm627, %v2108, %v2112
      %v2115 = vadd.f32 %v2082, %v2113
      %2116 = vst [vmem:[#allocation1] ss:$2 sm:$0xff] %v583
      %v2117 = vld.sshfl [vmem:[#allocation1] sm:$0xff pattern:$0x75316420]
      %v2118 = vld.sshfl [vmem:[#allocation1 + $0x8] sm:$0xff pattern:$0x75316420]
      %2121 = vrot.lane.b32.xlu0 %v2117, 78
      %v2122 = vpop.permute.xlu0 %2121
      %2123 = vrot.lane.b32.xlu0 %v2118, 78
      %v2124 = vpop.permute.xlu0 %2123
      %vm2125 = vcmp.lt.s32.totalorder %v606, 78
      %v2126 = vsel %vm2125, %v2122, %v2124
      %v2127 = vsel %vm2125, %v2124, %v2122
      %s2128 = scalar_lea.vmem %s1, 94
      %v2129 = vld [vmem:[%s2128] sm:$0x3]
      %v2131 = vperm.slane %v2129, 0
      %v2132 = vperm.slane %v2129, 1
      %v2135 = vmul.f32 %v2126, %v2131
      %v2136 = vmul.f32 %v2127, %v2132
      %2137 = vset.pattern.permute.xlu0 47
      %2138 = vperm.xlu0 %2137, %v584
      %v2139 = vpop.permute.xlu0 %2138
      %v2141 = vmul.f32 %v2135, %v2139
      %v2142 = vmul.f32 %v2136, %v2139
      %v2145 = vrot.slane %v2142, 4
      %v2146 = vsel %vm627, %v2141, %v2145
      %v2148 = vadd.f32 %v2115, %v2146
      %2149 = vst [vmem:[#allocation1] ss:$2 sm:$0xff] %v583
      %v2150 = vld.sshfl [vmem:[#allocation1] sm:$0xff pattern:$0x75316420]
      %v2151 = vld.sshfl [vmem:[#allocation1 + $0x8] sm:$0xff pattern:$0x75316420]
      %2154 = vrot.lane.b32.xlu0 %v2150, 77
      %v2155 = vpop.permute.xlu0 %2154
      %2156 = vrot.lane.b32.xlu0 %v2151, 77
      %v2157 = vpop.permute.xlu0 %2156
      %vm2158 = vcmp.lt.s32.totalorder %v606, 77
      %v2159 = vsel %vm2158, %v2155, %v2157
      %v2160 = vsel %vm2158, %v2157, %v2155
      %s2161 = scalar_lea.vmem %s1, 96
      %v2162 = vld [vmem:[%s2161] sm:$0x3]
      %v2164 = vperm.slane %v2162, 0
      %v2165 = vperm.slane %v2162, 1
      %v2168 = vmul.f32 %v2159, %v2164
      %v2169 = vmul.f32 %v2160, %v2165
      %2170 = vset.pattern.permute.xlu0 48
      %2171 = vperm.xlu0 %2170, %v584
      %v2172 = vpop.permute.xlu0 %2171
      %v2174 = vmul.f32 %v2168, %v2172
      %v2175 = vmul.f32 %v2169, %v2172
      %v2178 = vrot.slane %v2175, 4
      %v2179 = vsel %vm627, %v2174, %v2178
      %v2181 = vadd.f32 %v2148, %v2179
      %v2182 = vld [vmem:[%s528] sm:$0xf]
      %2184 = vset.pattern.permute.xlu0 0
      %2185 = vperm.xlu0 %2184, %v2182
      %v2186 = vpop.permute.xlu0 %2185
      %v2188 = vunpack.c.l.s4 839922192
      %v2189 = vunpack.c.0.s8 %v2188
      %v2190 = vperm.slane %v2186, %v2189
      %v2192 = vadd.f32 %v2181, %v2190
      %2194 = vst [vmem:[#allocation1] ss:$2 sm:$0xff] %v2192
      %v2195 = vld.sshfl [vmem:[#allocation1] sm:$0xff pattern:$0x75316420]
      %v2196 = vld.sshfl [vmem:[#allocation1 + $0x8] sm:$0xff pattern:$0x75316420]
      %v2199 = vsel %vm627, %v2195, 0.0
      %v2200 = vsel %vm627, %v2196, 0.0
      %v2201 = vadd.f32 %v2199, %v2200
      %2202 = vadd.xlane.f32.xlu0 %v2201
      %v2203 = vpop.xlane.xlu0 %2202
      %v2204 = vmul.f32 %v2192, %v2192
      %2206 = vst [vmem:[#allocation1] ss:$2 sm:$0xff] %v2204
      %v2207 = vld.sshfl [vmem:[#allocation1] sm:$0xff pattern:$0x75316420]
      %v2208 = vld.sshfl [vmem:[#allocation1 + $0x8] sm:$0xff pattern:$0x75316420]
      %v2211 = vsel %vm627, %v2207, 0.0
      %v2212 = vsel %vm627, %v2208, 0.0
      %v2213 = vadd.f32 %v2211, %v2212
      %2214 = vadd.xlane.f32.xlu0 %v2213
      %v2215 = vpop.xlane.xlu0 %2214
      %v2216 = vsel %vm627, %v2203, 0.0
      %v2217 = vrot.slane %v2216, 4
      %v2218 = vadd.f32 %v2216, %v2217
      %v2219 = vrot.slane %v2218, 2
      %v2220 = vadd.f32 %v2218, %v2219
      %v2221 = vrot.slane %v2220, 1
      %v2222 = vadd.f32 %v2220, %v2221
      %v2223 = vmul.f32 %v2222, 0.0009765625
      %v2224 = vsel %vm627, %v2215, 0.0
      %v2225 = vrot.slane %v2224, 4
      %v2226 = vadd.f32 %v2224, %v2225
      %v2227 = vrot.slane %v2226, 2
      %v2228 = vadd.f32 %v2226, %v2227
      %v2229 = vrot.slane %v2228, 1
      %v2230 = vadd.f32 %v2228, %v2229
      %v2231 = vmul.f32 %v2230, 0.0009765625
      %v2232 = vmul.f32 %v2223, %v2223
      %v2233 = vsub.f32 %v2231, %v2232
      %v2234 = vsub.f32 %v2192, %v2223
      %v2235 = vadd.f32 %v2233, 1e-05
      %v2236 = vrsqrt.pop %v2235
      %v2237 = vmul.f32 %v2236, %v2235
      %v2238 = vmul.f32 %v2237, %v2236
      %v2239 = vmul.f32 0.5, %v2238
      %v2240 = vsub.f32 1.5, %v2239
      %v2241 = vmul.f32 %v2236, %v2240
      %vm2242 = vweird.f32 %v2235
      %vm2243 = vweird.f32 %v2236
      %vm2244 = vmor %vm2242, %vm2243
      %v2245 = vsel %vm2244, %v2236, %v2241
      %v2246 = vmul.f32 %v2234, %v2245
      %v2247 = vld [vmem:[%s532] sm:$0xf]
      %2249 = vset.pattern.permute.xlu0 0
      %2250 = vperm.xlu0 %2249, %v2247
      %v2251 = vpop.permute.xlu0 %2250
      %v2253 = vunpack.c.l.s4 839922192
      %v2254 = vunpack.c.0.s8 %v2253
      %v2255 = vperm.slane %v2251, %v2254
      %v2257 = vmul.f32 %v2246, %v2255
      %v2258 = vld [vmem:[%s536] sm:$0xf]
      %2260 = vset.pattern.permute.xlu0 0
      %2261 = vperm.xlu0 %2260, %v2258
      %v2262 = vpop.permute.xlu0 %2261
      %v2264 = vunpack.c.l.s4 839922192
      %v2265 = vunpack.c.0.s8 %v2264
      %v2266 = vperm.slane %v2262, %v2265
      %v2268 = vadd.f32 %v2257, %v2266
      %v2269 = vld [vmem:[%s540] sm:$0xff]
      %v2270 = vld [vmem:[%s544] sm:$0xff]
      %2272 = vset.pattern.permute.xlu0 0
      %2273 = vperm.xlu0 %2272, %v2270
      %v2274 = vpop.permute.xlu0 %2273
      %2277 = vst [vmem:[#allocation1] ss:$2 sm:$0xff] %v2268
      %v2278 = vld.sshfl [vmem:[#allocation1] sm:$0xff pattern:$0x75316420]
      %v2279 = vld.sshfl [vmem:[#allocation1 + $0x8] sm:$0xff pattern:$0x75316420]
      %vm2280 = vcmask 31744
      %v2282 = vsel %vm2280, %v2269, 0
      %v2284 = vsel %vm627, %v2278, 0
      %v2286 = vsel %vm627, %v2279, 0
      %2288 = vmatpush.msra.mxu0 0.0
      %2289 = vmatpush.msra.mxu0 0.0
      %2290 = vmatpush.msra.mxu0 0.0
      %2291 = vmatpush.msra.mxu0 0.0
      %2292 = vmatpush.msra.mxu0 0.0
      %2293 = vmatpush.msra.mxu0 0.0
      %2294 = vmatpush.msra.mxu0 0.0
      %2295 = vmatpush.msra.mxu0 0.0
      %2296 = vmatpush.msra.mxu0 0.0
      %2297 = vmatpush.msra.mxu0 0.0
      %2298 = vmatpush.msra.mxu0 0.0
      %2299 = vmatpush.msra.mxu0 0.0
      %2300 = vmatpush.msra.mxu0 0.0
      %2301 = vmatpush.msra.mxu0 0.0
      %2302 = vmatpush.msra.mxu0 0.0
      %v2303 = vand.u32 %v2284, 4294901760
      %2304 = vmatpush.msra.mxu0 %v2303
      %v2305 = vand.u32 %v2282, 4294901760
      %v2306 = vsub.f32 %v2282, %v2305
      %v2307 = vand.u32 %v2306, 4294901760
      %v2308 = vsub.f32 %v2306, %v2307
      %v2309 = vand.u32 %v2308, 4294901760
      %2310 = vmatmul.f32.gmra.mxu0 %v2309
      %v2311 = vpop.f32.mrf.mxu0
      %v2312 = vadd.f32 %v2274, %v2311
      %2313 = vdwg.mxu0
      %2314 = vmatpush.msra.mxu0 0.0
      %2315 = vmatpush.msra.mxu0 0.0
      %2316 = vmatpush.msra.mxu0 0.0
      %2317 = vmatpush.msra.mxu0 0.0
      %2318 = vmatpush.msra.mxu0 0.0
      %2319 = vmatpush.msra.mxu0 0.0
      %2320 = vmatpush.msra.mxu0 0.0
      %2321 = vmatpush.msra.mxu0 0.0
      %2322 = vmatpush.msra.mxu0 0.0
      %2323 = vmatpush.msra.mxu0 0.0
      %2324 = vmatpush.msra.mxu0 0.0
      %2325 = vmatpush.msra.mxu0 0.0
      %2326 = vmatpush.msra.mxu0 0.0
      %2327 = vmatpush.msra.mxu0 0.0
      %2328 = vmatpush.msra.mxu0 0.0
      %v2329 = vand.u32 %v2284, 4294901760
      %v2330 = vsub.f32 %v2284, %v2329
      %v2331 = vand.u32 %v2330, 4294901760
      %v2332 = vsub.f32 %v2330, %v2331
      %v2333 = vand.u32 %v2332, 4294901760
      %2334 = vmatpush.msra.mxu0 %v2333
      %v2335 = vand.u32 %v2282, 4294901760
      %2336 = vmatmul.f32.gmra.mxu0 %v2335
      %v2337 = vpop.f32.mrf.mxu0
      %v2338 = vadd.f32 %v2312, %v2337
      %2339 = vdwg.mxu0
      %2340 = vmatpush.msra.mxu0 0.0
      %2341 = vmatpush.msra.mxu0 0.0
      %2342 = vmatpush.msra.mxu0 0.0
      %2343 = vmatpush.msra.mxu0 0.0
      %2344 = vmatpush.msra.mxu0 0.0
      %2345 = vmatpush.msra.mxu0 0.0
      %2346 = vmatpush.msra.mxu0 0.0
      %2347 = vmatpush.msra.mxu0 0.0
      %2348 = vmatpush.msra.mxu0 0.0
      %2349 = vmatpush.msra.mxu0 0.0
      %2350 = vmatpush.msra.mxu0 0.0
      %2351 = vmatpush.msra.mxu0 0.0
      %2352 = vmatpush.msra.mxu0 0.0
      %2353 = vmatpush.msra.mxu0 0.0
      %2354 = vmatpush.msra.mxu0 0.0
      %v2355 = vand.u32 %v2284, 4294901760
      %v2356 = vsub.f32 %v2284, %v2355
      %2357 = vmatpush.msra.mxu0 %v2356
      %v2358 = vand.u32 %v2282, 4294901760
      %v2359 = vsub.f32 %v2282, %v2358
      %2360 = vmatmul.f32.gmra.mxu0 %v2359
      %v2361 = vpop.f32.mrf.mxu0
      %v2362 = vadd.f32 %v2338, %v2361
      %2363 = vdwg.mxu0
      %2364 = vmatpush.msra.mxu0 0.0
      %2365 = vmatpush.msra.mxu0 0.0
      %2366 = vmatpush.msra.mxu0 0.0
      %2367 = vmatpush.msra.mxu0 0.0
      %2368 = vmatpush.msra.mxu0 0.0
      %2369 = vmatpush.msra.mxu0 0.0
      %2370 = vmatpush.msra.mxu0 0.0
      %2371 = vmatpush.msra.mxu0 0.0
      %2372 = vmatpush.msra.mxu0 0.0
      %2373 = vmatpush.msra.mxu0 0.0
      %2374 = vmatpush.msra.mxu0 0.0
      %2375 = vmatpush.msra.mxu0 0.0
      %2376 = vmatpush.msra.mxu0 0.0
      %2377 = vmatpush.msra.mxu0 0.0
      %2378 = vmatpush.msra.mxu0 0.0
      %v2379 = vand.u32 %v2284, 4294901760
      %2380 = vmatpush.msra.mxu0 %v2379
      %v2381 = vand.u32 %v2282, 4294901760
      %v2382 = vsub.f32 %v2282, %v2381
      %v2383 = vand.u32 %v2382, 4294901760
      %2384 = vmatmul.f32.gmra.mxu0 %v2383
      %v2385 = vpop.f32.mrf.mxu0
      %v2386 = vadd.f32 %v2362, %v2385
      %2387 = vdwg.mxu0
      %2388 = vmatpush.msra.mxu0 0.0
      %2389 = vmatpush.msra.mxu0 0.0
      %2390 = vmatpush.msra.mxu0 0.0
      %2391 = vmatpush.msra.mxu0 0.0
      %2392 = vmatpush.msra.mxu0 0.0
      %2393 = vmatpush.msra.mxu0 0.0
      %2394 = vmatpush.msra.mxu0 0.0
      %2395 = vmatpush.msra.mxu0 0.0
      %2396 = vmatpush.msra.mxu0 0.0
      %2397 = vmatpush.msra.mxu0 0.0
      %2398 = vmatpush.msra.mxu0 0.0
      %2399 = vmatpush.msra.mxu0 0.0
      %2400 = vmatpush.msra.mxu0 0.0
      %2401 = vmatpush.msra.mxu0 0.0
      %2402 = vmatpush.msra.mxu0 0.0
      %v2403 = vand.u32 %v2284, 4294901760
      %v2404 = vsub.f32 %v2284, %v2403
      %v2405 = vand.u32 %v2404, 4294901760
      %2406 = vmatpush.msra.mxu0 %v2405
      %v2407 = vand.u32 %v2282, 4294901760
      %2408 = vmatmul.f32.gmra.mxu0 %v2407
      %v2409 = vpop.f32.mrf.mxu0
      %v2410 = vadd.f32 %v2386, %v2409
      %2411 = vdwg.mxu0
      %2412 = vmatpush.msra.mxu0 0.0
      %2413 = vmatpush.msra.mxu0 0.0
      %2414 = vmatpush.msra.mxu0 0.0
      %2415 = vmatpush.msra.mxu0 0.0
      %2416 = vmatpush.msra.mxu0 0.0
      %2417 = vmatpush.msra.mxu0 0.0
      %2418 = vmatpush.msra.mxu0 0.0
      %2419 = vmatpush.msra.mxu0 0.0
      %2420 = vmatpush.msra.mxu0 0.0
      %2421 = vmatpush.msra.mxu0 0.0
      %2422 = vmatpush.msra.mxu0 0.0
      %2423 = vmatpush.msra.mxu0 0.0
      %2424 = vmatpush.msra.mxu0 0.0
      %2425 = vmatpush.msra.mxu0 0.0
      %2426 = vmatpush.msra.mxu0 0.0
      %v2427 = vand.u32 %v2284, 4294901760
      %2428 = vmatpush.msra.mxu0 %v2427
      %v2429 = vand.u32 %v2282, 4294901760
      %2430 = vmatmul.f32.gmra.mxu0 %v2429
      %v2431 = vpop.f32.mrf.mxu0
      %v2432 = vadd.f32 %v2410, %v2431
      %2433 = vdwg.mxu0
      %2434 = vmatpush.msra.mxu0 0.0
      %2435 = vmatpush.msra.mxu0 0.0
      %2436 = vmatpush.msra.mxu0 0.0
      %2437 = vmatpush.msra.mxu0 0.0
      %2438 = vmatpush.msra.mxu0 0.0
      %2439 = vmatpush.msra.mxu0 0.0
      %2440 = vmatpush.msra.mxu0 0.0
      %2441 = vmatpush.msra.mxu0 0.0
      %2442 = vmatpush.msra.mxu0 0.0
      %2443 = vmatpush.msra.mxu0 0.0
      %2444 = vmatpush.msra.mxu0 0.0
      %2445 = vmatpush.msra.mxu0 0.0
      %2446 = vmatpush.msra.mxu0 0.0
      %2447 = vmatpush.msra.mxu0 0.0
      %2448 = vmatpush.msra.mxu0 0.0
      %v2449 = vand.u32 %v2286, 4294901760
      %2450 = vmatpush.msra.mxu0 %v2449
      %v2451 = vand.u32 %v2282, 4294901760
      %v2452 = vsub.f32 %v2282, %v2451
      %v2453 = vand.u32 %v2452, 4294901760
      %v2454 = vsub.f32 %v2452, %v2453
      %v2455 = vand.u32 %v2454, 4294901760
      %2456 = vmatmul.f32.gmra.mxu0 %v2455
      %v2457 = vpop.f32.mrf.mxu0
      %v2458 = vadd.f32 %v2274, %v2457
      %2459 = vdwg.mxu0
      %2460 = vmatpush.msra.mxu0 0.0
      %2461 = vmatpush.msra.mxu0 0.0
      %2462 = vmatpush.msra.mxu0 0.0
      %2463 = vmatpush.msra.mxu0 0.0
      %2464 = vmatpush.msra.mxu0 0.0
      %2465 = vmatpush.msra.mxu0 0.0
      %2466 = vmatpush.msra.mxu0 0.0
      %2467 = vmatpush.msra.mxu0 0.0
      %2468 = vmatpush.msra.mxu0 0.0
      %2469 = vmatpush.msra.mxu0 0.0
      %2470 = vmatpush.msra.mxu0 0.0
      %2471 = vmatpush.msra.mxu0 0.0
      %2472 = vmatpush.msra.mxu0 0.0
      %2473 = vmatpush.msra.mxu0 0.0
      %2474 = vmatpush.msra.mxu0 0.0
      %v2475 = vand.u32 %v2286, 4294901760
      %v2476 = vsub.f32 %v2286, %v2475
      %v2477 = vand.u32 %v2476, 4294901760
      %v2478 = vsub.f32 %v2476, %v2477
      %v2479 = vand.u32 %v2478, 4294901760
      %2480 = vmatpush.msra.mxu0 %v2479
      %v2481 = vand.u32 %v2282, 4294901760
      %2482 = vmatmul.f32.gmra.mxu0 %v2481
      %v2483 = vpop.f32.mrf.mxu0
      %v2484 = vadd.f32 %v2458, %v2483
      %2485 = vdwg.mxu0
      %2486 = vmatpush.msra.mxu0 0.0
      %2487 = vmatpush.msra.mxu0 0.0
      %2488 = vmatpush.msra.mxu0 0.0
      %2489 = vmatpush.msra.mxu0 0.0
      %2490 = vmatpush.msra.mxu0 0.0
      %2491 = vmatpush.msra.mxu0 0.0
      %2492 = vmatpush.msra.mxu0 0.0
      %2493 = vmatpush.msra.mxu0 0.0
      %2494 = vmatpush.msra.mxu0 0.0
      %2495 = vmatpush.msra.mxu0 0.0
      %2496 = vmatpush.msra.mxu0 0.0
      %2497 = vmatpush.msra.mxu0 0.0
      %2498 = vmatpush.msra.mxu0 0.0
      %2499 = vmatpush.msra.mxu0 0.0
      %2500 = vmatpush.msra.mxu0 0.0
      %v2501 = vand.u32 %v2286, 4294901760
      %v2502 = vsub.f32 %v2286, %v2501
      %2503 = vmatpush.msra.mxu0 %v2502
      %v2504 = vand.u32 %v2282, 4294901760
      %v2505 = vsub.f32 %v2282, %v2504
      %2506 = vmatmul.f32.gmra.mxu0 %v2505
      %v2507 = vpop.f32.mrf.mxu0
      %v2508 = vadd.f32 %v2484, %v2507
      %2509 = vdwg.mxu0
      %2510 = vmatpush.msra.mxu0 0.0
      %2511 = vmatpush.msra.mxu0 0.0
      %2512 = vmatpush.msra.mxu0 0.0
      %2513 = vmatpush.msra.mxu0 0.0
      %2514 = vmatpush.msra.mxu0 0.0
      %2515 = vmatpush.msra.mxu0 0.0
      %2516 = vmatpush.msra.mxu0 0.0
      %2517 = vmatpush.msra.mxu0 0.0
      %2518 = vmatpush.msra.mxu0 0.0
      %2519 = vmatpush.msra.mxu0 0.0
      %2520 = vmatpush.msra.mxu0 0.0
      %2521 = vmatpush.msra.mxu0 0.0
      %2522 = vmatpush.msra.mxu0 0.0
      %2523 = vmatpush.msra.mxu0 0.0
      %2524 = vmatpush.msra.mxu0 0.0
      %v2525 = vand.u32 %v2286, 4294901760
      %2526 = vmatpush.msra.mxu0 %v2525
      %v2527 = vand.u32 %v2282, 4294901760
      %v2528 = vsub.f32 %v2282, %v2527
      %v2529 = vand.u32 %v2528, 4294901760
      %2530 = vmatmul.f32.gmra.mxu0 %v2529
      %v2531 = vpop.f32.mrf.mxu0
      %v2532 = vadd.f32 %v2508, %v2531
      %2533 = vdwg.mxu0
      %2534 = vmatpush.msra.mxu0 0.0
      %2535 = vmatpush.msra.mxu0 0.0
      %2536 = vmatpush.msra.mxu0 0.0
      %2537 = vmatpush.msra.mxu0 0.0
      %2538 = vmatpush.msra.mxu0 0.0
      %2539 = vmatpush.msra.mxu0 0.0
      %2540 = vmatpush.msra.mxu0 0.0
      %2541 = vmatpush.msra.mxu0 0.0
      %2542 = vmatpush.msra.mxu0 0.0
      %2543 = vmatpush.msra.mxu0 0.0
      %2544 = vmatpush.msra.mxu0 0.0
      %2545 = vmatpush.msra.mxu0 0.0
      %2546 = vmatpush.msra.mxu0 0.0
      %2547 = vmatpush.msra.mxu0 0.0
      %2548 = vmatpush.msra.mxu0 0.0
      %v2549 = vand.u32 %v2286, 4294901760
      %v2550 = vsub.f32 %v2286, %v2549
      %v2551 = vand.u32 %v2550, 4294901760
      %2552 = vmatpush.msra.mxu0 %v2551
      %v2553 = vand.u32 %v2282, 4294901760
      %2554 = vmatmul.f32.gmra.mxu0 %v2553
      %v2555 = vpop.f32.mrf.mxu0
      %v2556 = vadd.f32 %v2532, %v2555
      %2557 = vdwg.mxu0
      %2558 = vmatpush.msra.mxu0 0.0
      %2559 = vmatpush.msra.mxu0 0.0
      %2560 = vmatpush.msra.mxu0 0.0
      %2561 = vmatpush.msra.mxu0 0.0
      %2562 = vmatpush.msra.mxu0 0.0
      %2563 = vmatpush.msra.mxu0 0.0
      %2564 = vmatpush.msra.mxu0 0.0
      %2565 = vmatpush.msra.mxu0 0.0
      %2566 = vmatpush.msra.mxu0 0.0
      %2567 = vmatpush.msra.mxu0 0.0
      %2568 = vmatpush.msra.mxu0 0.0
      %2569 = vmatpush.msra.mxu0 0.0
      %2570 = vmatpush.msra.mxu0 0.0
      %2571 = vmatpush.msra.mxu0 0.0
      %2572 = vmatpush.msra.mxu0 0.0
      %v2573 = vand.u32 %v2286, 4294901760
      %2574 = vmatpush.msra.mxu0 %v2573
      %v2575 = vand.u32 %v2282, 4294901760
      %2576 = vmatmul.f32.gmra.mxu0 %v2575
      %v2577 = vpop.f32.mrf.mxu0
      %v2578 = vadd.f32 %v2556, %v2577
      %2579 = vdwg.mxu0
      %v2580 = vmul.f32 %v2432, %v2432
      %v2581 = vmul.f32 %v2578, %v2578
      %v2582 = vmul.f32 %v2432, %v2580
      %v2583 = vmul.f32 %v2578, %v2581
      %v2584 = vmul.f32 %v2582, 0.044715
      %v2585 = vmul.f32 %v2583, 0.044715
      %v2586 = vadd.f32 %v2432, %v2584
      %v2587 = vadd.f32 %v2578, %v2585
      %v2588 = vmul.f32 %v2586, 0.7978846
      %v2589 = vmul.f32 %v2587, 0.7978846
      %v2590 = vtanh.pop %v2588
      %v2591 = vtanh.pop %v2589
      %v2592 = vadd.f32 %v2590, 1.0
      %v2593 = vadd.f32 %v2591, 1.0
      %v2594 = vmul.f32 %v2592, 0.5
      %v2595 = vmul.f32 %v2593, 0.5
      %v2596 = vmul.f32 %v2432, %v2594
      %v2597 = vmul.f32 %v2578, %v2595
      %v2598 = vld [vmem:[%s548] sm:$0xf]
      %v2599 = vld [vmem:[%s552] sm:$0xf]
      %2601 = vset.pattern.permute.xlu0 0
      %2602 = vperm.xlu0 %2601, %v2599
      %v2603 = vpop.permute.xlu0 %2602
      %vm2605 = vcmask 64512
      %v2607 = vsel %vm2605, %v2598, 0
      %2609 = vmatpush.msra.mxu0 0.0
      %2610 = vmatpush.msra.mxu0 0.0
      %2611 = vmatpush.msra.mxu0 0.0
      %2612 = vmatpush.msra.mxu0 0.0
      %2613 = vmatpush.msra.mxu0 0.0
      %2614 = vmatpush.msra.mxu0 0.0
      %2615 = vmatpush.msra.mxu0 0.0
      %2616 = vmatpush.msra.mxu0 0.0
      %2617 = vmatpush.msra.mxu0 0.0
      %2618 = vmatpush.msra.mxu0 0.0
      %2619 = vmatpush.msra.mxu0 0.0
      %2620 = vmatpush.msra.mxu0 0.0
      %2621 = vmatpush.msra.mxu0 0.0
      %2622 = vmatpush.msra.mxu0 0.0
      %2623 = vmatpush.msra.mxu0 0.0
      %v2624 = vand.u32 %v2596, 4294901760
      %2625 = vmatpush.msra.mxu0 %v2624
      %v2626 = vand.u32 %v2607, 4294901760
      %v2627 = vsub.f32 %v2607, %v2626
      %v2628 = vand.u32 %v2627, 4294901760
      %v2629 = vsub.f32 %v2627, %v2628
      %v2630 = vand.u32 %v2629, 4294901760
      %2631 = vmatmul.f32.gmra.mxu0 %v2630
      %v2632 = vpop.f32.mrf.mxu0
      %v2633 = vadd.f32 %v2603, %v2632
      %2634 = vdwg.mxu0
      %2635 = vmatpush.msra.mxu0 0.0
      %2636 = vmatpush.msra.mxu0 0.0
      %2637 = vmatpush.msra.mxu0 0.0
      %2638 = vmatpush.msra.mxu0 0.0
      %2639 = vmatpush.msra.mxu0 0.0
      %2640 = vmatpush.msra.mxu0 0.0
      %2641 = vmatpush.msra.mxu0 0.0
      %2642 = vmatpush.msra.mxu0 0.0
      %2643 = vmatpush.msra.mxu0 0.0
      %2644 = vmatpush.msra.mxu0 0.0
      %2645 = vmatpush.msra.mxu0 0.0
      %2646 = vmatpush.msra.mxu0 0.0
      %2647 = vmatpush.msra.mxu0 0.0
      %2648 = vmatpush.msra.mxu0 0.0
      %2649 = vmatpush.msra.mxu0 0.0
      %v2650 = vand.u32 %v2596, 4294901760
      %v2651 = vsub.f32 %v2596, %v2650
      %v2652 = vand.u32 %v2651, 4294901760
      %v2653 = vsub.f32 %v2651, %v2652
      %v2654 = vand.u32 %v2653, 4294901760
      %2655 = vmatpush.msra.mxu0 %v2654
      %v2656 = vand.u32 %v2607, 4294901760
      %2657 = vmatmul.f32.gmra.mxu0 %v2656
      %v2658 = vpop.f32.mrf.mxu0
      %v2659 = vadd.f32 %v2633, %v2658
      %2660 = vdwg.mxu0
      %2661 = vmatpush.msra.mxu0 0.0
      %2662 = vmatpush.msra.mxu0 0.0
      %2663 = vmatpush.msra.mxu0 0.0
      %2664 = vmatpush.msra.mxu0 0.0
      %2665 = vmatpush.msra.mxu0 0.0
      %2666 = vmatpush.msra.mxu0 0.0
      %2667 = vmatpush.msra.mxu0 0.0
      %2668 = vmatpush.msra.mxu0 0.0
      %2669 = vmatpush.msra.mxu0 0.0
      %2670 = vmatpush.msra.mxu0 0.0
      %2671 = vmatpush.msra.mxu0 0.0
      %2672 = vmatpush.msra.mxu0 0.0
      %2673 = vmatpush.msra.mxu0 0.0
      %2674 = vmatpush.msra.mxu0 0.0
      %2675 = vmatpush.msra.mxu0 0.0
      %v2676 = vand.u32 %v2596, 4294901760
      %v2677 = vsub.f32 %v2596, %v2676
      %2678 = vmatpush.msra.mxu0 %v2677
      %v2679 = vand.u32 %v2607, 4294901760
      %v2680 = vsub.f32 %v2607, %v2679
      %2681 = vmatmul.f32.gmra.mxu0 %v2680
      %v2682 = vpop.f32.mrf.mxu0
      %v2683 = vadd.f32 %v2659, %v2682
      %2684 = vdwg.mxu0
      %2685 = vmatpush.msra.mxu0 0.0
      %2686 = vmatpush.msra.mxu0 0.0
      %2687 = vmatpush.msra.mxu0 0.0
      %2688 = vmatpush.msra.mxu0 0.0
      %2689 = vmatpush.msra.mxu0 0.0
      %2690 = vmatpush.msra.mxu0 0.0
      %2691 = vmatpush.msra.mxu0 0.0
      %2692 = vmatpush.msra.mxu0 0.0
      %2693 = vmatpush.msra.mxu0 0.0
      %2694 = vmatpush.msra.mxu0 0.0
      %2695 = vmatpush.msra.mxu0 0.0
      %2696 = vmatpush.msra.mxu0 0.0
      %2697 = vmatpush.msra.mxu0 0.0
      %2698 = vmatpush.msra.mxu0 0.0
      %2699 = vmatpush.msra.mxu0 0.0
      %v2700 = vand.u32 %v2596, 4294901760
      %2701 = vmatpush.msra.mxu0 %v2700
      %v2702 = vand.u32 %v2607, 4294901760
      %v2703 = vsub.f32 %v2607, %v2702
      %v2704 = vand.u32 %v2703, 4294901760
      %2705 = vmatmul.f32.gmra.mxu0 %v2704
      %v2706 = vpop.f32.mrf.mxu0
      %v2707 = vadd.f32 %v2683, %v2706
      %2708 = vdwg.mxu0
      %2709 = vmatpush.msra.mxu0 0.0
      %2710 = vmatpush.msra.mxu0 0.0
      %2711 = vmatpush.msra.mxu0 0.0
      %2712 = vmatpush.msra.mxu0 0.0
      %2713 = vmatpush.msra.mxu0 0.0
      %2714 = vmatpush.msra.mxu0 0.0
      %2715 = vmatpush.msra.mxu0 0.0
      %2716 = vmatpush.msra.mxu0 0.0
      %2717 = vmatpush.msra.mxu0 0.0
      %2718 = vmatpush.msra.mxu0 0.0
      %2719 = vmatpush.msra.mxu0 0.0
      %2720 = vmatpush.msra.mxu0 0.0
      %2721 = vmatpush.msra.mxu0 0.0
      %2722 = vmatpush.msra.mxu0 0.0
      %2723 = vmatpush.msra.mxu0 0.0
      %v2724 = vand.u32 %v2596, 4294901760
      %v2725 = vsub.f32 %v2596, %v2724
      %v2726 = vand.u32 %v2725, 4294901760
      %2727 = vmatpush.msra.mxu0 %v2726
      %v2728 = vand.u32 %v2607, 4294901760
      %2729 = vmatmul.f32.gmra.mxu0 %v2728
      %v2730 = vpop.f32.mrf.mxu0
      %v2731 = vadd.f32 %v2707, %v2730
      %2732 = vdwg.mxu0
      %2733 = vmatpush.msra.mxu0 0.0
      %2734 = vmatpush.msra.mxu0 0.0
      %2735 = vmatpush.msra.mxu0 0.0
      %2736 = vmatpush.msra.mxu0 0.0
      %2737 = vmatpush.msra.mxu0 0.0
      %2738 = vmatpush.msra.mxu0 0.0
      %2739 = vmatpush.msra.mxu0 0.0
      %2740 = vmatpush.msra.mxu0 0.0
      %2741 = vmatpush.msra.mxu0 0.0
      %2742 = vmatpush.msra.mxu0 0.0
      %2743 = vmatpush.msra.mxu0 0.0
      %2744 = vmatpush.msra.mxu0 0.0
      %2745 = vmatpush.msra.mxu0 0.0
      %2746 = vmatpush.msra.mxu0 0.0
      %2747 = vmatpush.msra.mxu0 0.0
      %v2748 = vand.u32 %v2596, 4294901760
      %2749 = vmatpush.msra.mxu0 %v2748
      %v2750 = vand.u32 %v2607, 4294901760
      %2751 = vmatmul.f32.gmra.mxu0 %v2750
      %v2752 = vpop.f32.mrf.mxu0
      %v2753 = vadd.f32 %v2731, %v2752
      %2754 = vdwg.mxu0
      %2755 = vmatpush.msra.mxu0 0.0
      %2756 = vmatpush.msra.mxu0 0.0
      %2757 = vmatpush.msra.mxu0 0.0
      %2758 = vmatpush.msra.mxu0 0.0
      %2759 = vmatpush.msra.mxu0 0.0
      %2760 = vmatpush.msra.mxu0 0.0
      %2761 = vmatpush.msra.mxu0 0.0
      %2762 = vmatpush.msra.mxu0 0.0
      %2763 = vmatpush.msra.mxu0 0.0
      %2764 = vmatpush.msra.mxu0 0.0
      %2765 = vmatpush.msra.mxu0 0.0
      %2766 = vmatpush.msra.mxu0 0.0
      %2767 = vmatpush.msra.mxu0 0.0
      %2768 = vmatpush.msra.mxu0 0.0
      %2769 = vmatpush.msra.mxu0 0.0
      %v2770 = vand.u32 %v2597, 4294901760
      %2771 = vmatpush.msra.mxu0 %v2770
      %v2772 = vand.u32 %v2607, 4294901760
      %v2773 = vsub.f32 %v2607, %v2772
      %v2774 = vand.u32 %v2773, 4294901760
      %v2775 = vsub.f32 %v2773, %v2774
      %v2776 = vand.u32 %v2775, 4294901760
      %2777 = vmatmul.f32.gmra.mxu0 %v2776
      %v2778 = vpop.f32.mrf.mxu0
      %v2779 = vadd.f32 %v2603, %v2778
      %2780 = vdwg.mxu0
      %2781 = vmatpush.msra.mxu0 0.0
      %2782 = vmatpush.msra.mxu0 0.0
      %2783 = vmatpush.msra.mxu0 0.0
      %2784 = vmatpush.msra.mxu0 0.0
      %2785 = vmatpush.msra.mxu0 0.0
      %2786 = vmatpush.msra.mxu0 0.0
      %2787 = vmatpush.msra.mxu0 0.0
      %2788 = vmatpush.msra.mxu0 0.0
      %2789 = vmatpush.msra.mxu0 0.0
      %2790 = vmatpush.msra.mxu0 0.0
      %2791 = vmatpush.msra.mxu0 0.0
      %2792 = vmatpush.msra.mxu0 0.0
      %2793 = vmatpush.msra.mxu0 0.0
      %2794 = vmatpush.msra.mxu0 0.0
      %2795 = vmatpush.msra.mxu0 0.0
      %v2796 = vand.u32 %v2597, 4294901760
      %v2797 = vsub.f32 %v2597, %v2796
      %v2798 = vand.u32 %v2797, 4294901760
      %v2799 = vsub.f32 %v2797, %v2798
      %v2800 = vand.u32 %v2799, 4294901760
      %2801 = vmatpush.msra.mxu0 %v2800
      %v2802 = vand.u32 %v2607, 4294901760
      %2803 = vmatmul.f32.gmra.mxu0 %v2802
      %v2804 = vpop.f32.mrf.mxu0
      %v2805 = vadd.f32 %v2779, %v2804
      %2806 = vdwg.mxu0
      %2807 = vmatpush.msra.mxu0 0.0
      %2808 = vmatpush.msra.mxu0 0.0
      %2809 = vmatpush.msra.mxu0 0.0
      %2810 = vmatpush.msra.mxu0 0.0
      %2811 = vmatpush.msra.mxu0 0.0
      %2812 = vmatpush.msra.mxu0 0.0
      %2813 = vmatpush.msra.mxu0 0.0
      %2814 = vmatpush.msra.mxu0 0.0
      %2815 = vmatpush.msra.mxu0 0.0
      %2816 = vmatpush.msra.mxu0 0.0
      %2817 = vmatpush.msra.mxu0 0.0
      %2818 = vmatpush.msra.mxu0 0.0
      %2819 = vmatpush.msra.mxu0 0.0
      %2820 = vmatpush.msra.mxu0 0.0
      %2821 = vmatpush.msra.mxu0 0.0
      %v2822 = vand.u32 %v2597, 4294901760
      %v2823 = vsub.f32 %v2597, %v2822
      %2824 = vmatpush.msra.mxu0 %v2823
      %v2825 = vand.u32 %v2607, 4294901760
      %v2826 = vsub.f32 %v2607, %v2825
      %2827 = vmatmul.f32.gmra.mxu0 %v2826
      %v2828 = vpop.f32.mrf.mxu0
      %v2829 = vadd.f32 %v2805, %v2828
      %2830 = vdwg.mxu0
      %2831 = vmatpush.msra.mxu0 0.0
      %2832 = vmatpush.msra.mxu0 0.0
      %2833 = vmatpush.msra.mxu0 0.0
      %2834 = vmatpush.msra.mxu0 0.0
      %2835 = vmatpush.msra.mxu0 0.0
      %2836 = vmatpush.msra.mxu0 0.0
      %2837 = vmatpush.msra.mxu0 0.0
      %2838 = vmatpush.msra.mxu0 0.0
      %2839 = vmatpush.msra.mxu0 0.0
      %2840 = vmatpush.msra.mxu0 0.0
      %2841 = vmatpush.msra.mxu0 0.0
      %2842 = vmatpush.msra.mxu0 0.0
      %2843 = vmatpush.msra.mxu0 0.0
      %2844 = vmatpush.msra.mxu0 0.0
      %2845 = vmatpush.msra.mxu0 0.0
      %v2846 = vand.u32 %v2597, 4294901760
      %2847 = vmatpush.msra.mxu0 %v2846
      %v2848 = vand.u32 %v2607, 4294901760
      %v2849 = vsub.f32 %v2607, %v2848
      %v2850 = vand.u32 %v2849, 4294901760
      %2851 = vmatmul.f32.gmra.mxu0 %v2850
      %v2852 = vpop.f32.mrf.mxu0
      %v2853 = vadd.f32 %v2829, %v2852
      %2854 = vdwg.mxu0
      %2855 = vmatpush.msra.mxu0 0.0
      %2856 = vmatpush.msra.mxu0 0.0
      %2857 = vmatpush.msra.mxu0 0.0
      %2858 = vmatpush.msra.mxu0 0.0
      %2859 = vmatpush.msra.mxu0 0.0
      %2860 = vmatpush.msra.mxu0 0.0
      %2861 = vmatpush.msra.mxu0 0.0
      %2862 = vmatpush.msra.mxu0 0.0
      %2863 = vmatpush.msra.mxu0 0.0
      %2864 = vmatpush.msra.mxu0 0.0
      %2865 = vmatpush.msra.mxu0 0.0
      %2866 = vmatpush.msra.mxu0 0.0
      %2867 = vmatpush.msra.mxu0 0.0
      %2868 = vmatpush.msra.mxu0 0.0
      %2869 = vmatpush.msra.mxu0 0.0
      %v2870 = vand.u32 %v2597, 4294901760
      %v2871 = vsub.f32 %v2597, %v2870
      %v2872 = vand.u32 %v2871, 4294901760
      %2873 = vmatpush.msra.mxu0 %v2872
      %v2874 = vand.u32 %v2607, 4294901760
      %2875 = vmatmul.f32.gmra.mxu0 %v2874
      %v2876 = vpop.f32.mrf.mxu0
      %v2877 = vadd.f32 %v2853, %v2876
      %2878 = vdwg.mxu0
      %2879 = vmatpush.msra.mxu0 0.0
      %2880 = vmatpush.msra.mxu0 0.0
      %2881 = vmatpush.msra.mxu0 0.0
      %2882 = vmatpush.msra.mxu0 0.0
      %2883 = vmatpush.msra.mxu0 0.0
      %2884 = vmatpush.msra.mxu0 0.0
      %2885 = vmatpush.msra.mxu0 0.0
      %2886 = vmatpush.msra.mxu0 0.0
      %2887 = vmatpush.msra.mxu0 0.0
      %2888 = vmatpush.msra.mxu0 0.0
      %2889 = vmatpush.msra.mxu0 0.0
      %2890 = vmatpush.msra.mxu0 0.0
      %2891 = vmatpush.msra.mxu0 0.0
      %2892 = vmatpush.msra.mxu0 0.0
      %2893 = vmatpush.msra.mxu0 0.0
      %v2894 = vand.u32 %v2597, 4294901760
      %2895 = vmatpush.msra.mxu0 %v2894
      %v2896 = vand.u32 %v2607, 4294901760
      %2897 = vmatmul.f32.gmra.mxu0 %v2896
      %v2898 = vpop.f32.mrf.mxu0
      %v2899 = vadd.f32 %v2877, %v2898
      %2900 = vdwg.mxu0
      %2901 = vst [vmem:[#allocation1] ss:$2 sm:$0xff] %v583
      %v2902 = vld.sshfl [vmem:[#allocation1] sm:$0xff pattern:$0x75316420]
      %v2903 = vld.sshfl [vmem:[#allocation1 + $0x8] sm:$0xff pattern:$0x75316420]
      %v2906 = vadd.f32 %v2753, %v2902
      %v2907 = vadd.f32 %v2899, %v2903
      %v2910 = vrot.slane %v2907, 4
      %v2911 = vsel %vm627, %v2906, %v2910
      %2913 = vst [vmem:[%s565] sm:$0xff] %v2911
      %p2914 = scmp.lt.s32.totalorder %s26, 1
      %s2915 = scalar_select %p2914, %s26, 1
      %s2916 = smul.addr %s2915, 2
      %s2917 = smul.addr %s2916, 4
      %s2918 = scalar_lea.vmem %s11, %s2917
      // Predicated region
      $region69: #{diff_model_forward.1} parent=63 // pred_check
        %p2919 = pneg %p335
      $region70: #{diff_model_forward.1} parent=63 // pred_check_branch
        %2921 = sbr.rel (%p2919) target = $region72
      $region71: #{diff_model_forward.1} parent=63 // pred_region
        _
      $region72: #{diff_model_forward.1} parent=63 // pred_fallthru
        _
    $region64: #{diff_model_forward.1} parent=5 // pred_fallthru
      _
    %p2922 = scmp.le.s32.totalorder 2, %s17
    // Predicated region
    $region73: #{diff_model_forward.1} parent=5 // pred_check
      %p2923 = pneg %p2922
    $region74: #{diff_model_forward.1} parent=5 // pred_check_branch
      %2925 = sbr.rel (%p2923) target = $region76
    $region75: #{diff_model_forward.1} parent=5 // pred_region
      %s2926 = ssub.s32 %s17, 2
      // Predicated region
      $region77: #{diff_model_forward.1} parent=75 // pred_check
        %p2927 = pneg %p341
      $region78: #{diff_model_forward.1} parent=75 // pred_check_branch
        %2929 = sbr.rel (%p2927) target = $region80
      $region79: #{diff_model_forward.1} parent=75 // pred_region
        %p2930 = scmp.lt.s32.totalorder %s28, 1
        %s2931 = scalar_select %p2930, %s28, 1
        %s2932 = smul.addr %s2931, 2
        %s2933 = smul.addr %s2932, 4
        %s2934 = scalar_lea.vmem %s11, %s2933
      $region80: #{diff_model_forward.1} parent=75 // pred_fallthru
        _
    $region76: #{diff_model_forward.1} parent=5 // pred_fallthru
      _
  $region6: #{diff_model_forward.1} parent=0 // loop_footer
    %s21 = sadd.s32 1, %s17
  $region7: #{diff_model_forward.1} parent=0 // loop_footer_branch
    %16 = sbr.rel target = $region3
  $region8: #{diff_model_forward.1} parent=0 // loop_exit
    _

</llo_original>
